<compile_context>
chip_gen: v7x
topology: tpu7x:2x2x1
jax: 0.10.0
libtpu: 0.0.40
codegen_flags: <defaults>
</compile_context>

<pallas_src>
import functools

import jax
import jax.numpy as jnp
import numpy as np
from jax import lax
from jax.experimental import pallas as pl
from jax.experimental.pallas import tpu as pltpu


# ---------------------------------------------------------------------------
# Host-side weight preparation: banded per-row-tap matmul slabs (done once)
# ---------------------------------------------------------------------------
def _banded_conv_weight(w_torch, W):
    """(Co, Ci, KH, KW) 'same' conv weight -> (KH, W*Ci, W*Co) banded slabs.

    Slab dy is used as  y += rows_shifted_by_dy @ slab[dy]  where activations
    are lane-dense (rows, W*Ci).  W-direction taps and W-boundary zero padding
    are encoded inside each slab; H padding is done in-kernel.
    """
    w = np.asarray(w_torch, np.float32)
    Co, Ci, KH, KW = w.shape
    assert KH == KW and KH % 2 == 1, "only odd square kernels supported"
    p = (KW - 1) // 2
    big = np.zeros((KH, W, Ci, W, Co), np.float32)
    for dy in range(KH):
        for dx in range(KW):
            for wo in range(W):
                wi = wo + dx - p
                if 0 <= wi < W:
                    big[dy, wi, :, wo, :] = w[:, :, dy, dx].T
    return big.reshape(KH, W * Ci, W * Co)


def _banded_conv2_fused(w_1x1, w_3x3, w_5x5, W):
    """Fuse conv2_{1,2,3} (1x1/3x3/5x5) into one (5, W*Ci, W*3Cb) band whose
    output channels are already in torch.cat((x1, x2, x3), 1) order."""
    ws = [np.asarray(w, np.float32) for w in (w_1x1, w_3x3, w_5x5)]
    Cb, Ci = ws[0].shape[0], ws[0].shape[1]
    KH_f = max(w.shape[2] for w in ws)
    p_f = (KH_f - 1) // 2
    Co = len(ws) * Cb
    big = np.zeros((KH_f, W, Ci, W, Co), np.float32)
    for bi, w in enumerate(ws):
        _, _, KH, KW = w.shape
        assert KH == KW and KH % 2 == 1
        p = (KW - 1) // 2
        off = p_f - p
        for dy in range(KH):
            for dx in range(KW):
                for wo in range(W):
                    wi = wo + dx - p
                    if 0 <= wi < W:
                        big[off + dy, wi, :, wo, bi * Cb:(bi + 1) * Cb] = \
                            w[:, :, dy, dx].T
    return big.reshape(KH_f, W * Ci, W * Co)


def _tiled_bias(b, W):
    """Per-channel bias -> (1, W*C) lane vector matching the (rows, W*C) layout."""
    return np.tile(np.asarray(b, np.float32), W).reshape(1, -1)


def prepare_params(params, H, W, bias=True, mxu_dtype=jnp.bfloat16):
    """Torch-format CNet params -> banded / lane-dense slabs for the kernel.

    Conv weight slabs are stored in `mxu_dtype` (bf16 by default) so the MXU
    runs native bf16; biases and the (tiny) head stay f32.
    """
    prep = {}
    prep["w0"] = jnp.asarray(_banded_conv_weight(params["conv0_w"], W)).astype(mxu_dtype)
    prep["b0"] = jnp.asarray(_tiled_bias(params["conv0_b"], W))
    prep["w1"] = jnp.asarray(_banded_conv_weight(params["conv1_w"], W)).astype(mxu_dtype)
    prep["b1"] = jnp.asarray(_tiled_bias(params["conv1_b"], W))
    prep["w2"] = jnp.asarray(_banded_conv2_fused(
        params["conv2_1_w"], params["conv2_2_w"], params["conv2_3_w"], W)).astype(mxu_dtype)
    prep["b2"] = jnp.asarray(_tiled_bias(
        np.concatenate([np.asarray(params["conv2_1_b"], np.float32),
                        np.asarray(params["conv2_2_b"], np.float32),
                        np.asarray(params["conv2_3_b"], np.float32)]), W))
    prep["w3"] = jnp.asarray(_banded_conv_weight(params["conv3_w"], W)).astype(mxu_dtype)
    prep["b3"] = jnp.asarray(_tiled_bias(params["conv3_b"], W))
    # Head: spatial mean folded into the Linear weight (1/(H*W) baked in); f32.
    Lw = np.asarray(params["L_w"], np.float32)                       # (Out, C3)
    prep["wh"] = jnp.asarray(np.tile(Lw.T, (W, 1)) / float(H * W))   # (W*C3, Out)
    if bias and params.get("L_b") is not None:
        prep["bl"] = jnp.asarray(np.asarray(params["L_b"], np.float32).reshape(1, -1))
    else:
        prep["bl"] = jnp.zeros((1, Lw.shape[0]), jnp.float32)
    return prep


# ---------------------------------------------------------------------------
# Fully fused CNet forward kernel (B_TILE images per grid step)
# ---------------------------------------------------------------------------
def _make_cnet_kernel(B, H, k1, k2, k3, mxu_dtype):
    def conv(a2d, w_ref, b_ref, kh):
        """a2d: (B*H, W*Ci) f32 -> (B*H, W*Co) f32 (banded conv + bias + tanh)."""
        WCi = w_ref.shape[1]
        if kh == 1:
            acc = jnp.dot(a2d.astype(mxu_dtype), w_ref[0],
                          preferred_element_type=jnp.float32)
        else:
            p = (kh - 1) // 2
            a3 = a2d.reshape(B, H, WCi)
            z = jnp.zeros((B, p, WCi), a3.dtype)
            ap = jnp.concatenate([z, a3, z], axis=1)      # per-image H padding
            acc = None
            for dy in range(kh):                           # kh accumulating dots
                lhs = ap[:, dy:dy + H, :].reshape(B * H, WCi).astype(mxu_dtype)
                t = jnp.dot(lhs, w_ref[dy], preferred_element_type=jnp.float32)
                acc = t if acc is None else acc + t
        return jnp.tanh(acc + b_ref[...])

    def kernel(x_ref, w0, b0, w1, b1, w2, b2, w3, b3, red, wh, bl, o_ref):
        WCin = x_ref.shape[2]
        a = conv(x_ref[...].reshape(B * H, WCin), w0, b0, 1)   # conv0 1x1
        a = conv(a, w1, b1, k1)                                # conv1
        a = conv(a, w2, b2, k2)                                # conv2_{1,2,3} fused
        a = conv(a, w3, b3, k3)                                # conv3
        # Head (tiny, kept f32): per-image spatial sum over H via a
        # block-diagonal ones matmul, W-sum + 1/(H*W) folded into wh.
        s = jnp.dot(red[...], a, preferred_element_type=jnp.float32)   # (B, W*C3)
        o_ref[...] = jnp.dot(s, wh[...],
                             preferred_element_type=jnp.float32) + bl[...]

    return kernel


def _next_pow2(n):
    return 1 if n <= 1 else 1 << (n - 1).bit_length()


@functools.partial(jax.jit, static_argnames=("b_tile",))
def cnet_forward(x_nchw, prep, b_tile=8):
    N, Cin, H, W = x_nchw.shape
    # Batch tile: fill the MXU M dimension (B_TILE*H rows).  For N > b_tile
    # the grid has >= 2 steps so both v7x TensorCores stay busy.
    bt = min(b_tile, _next_pow2(N))
    padded_N = ((N + bt - 1) // bt) * bt

    # NCHW (PyTorch) -> lane-dense (N, H, W*Cin); pad the batch to a multiple
    # of the tile (padded rows are discarded after the call).
    x = jnp.transpose(x_nchw, (0, 2, 3, 1)).astype(jnp.float32)
    x = x.reshape(N, H, W * Cin)
    if padded_N != N:
        x = jnp.concatenate(
            [x, jnp.zeros((padded_N - N, H, W * Cin), jnp.float32)], axis=0)

    w0, b0 = prep["w0"], prep["b0"]
    w1, b1 = prep["w1"], prep["b1"]
    w2, b2 = prep["w2"], prep["b2"]
    w3, b3 = prep["w3"], prep["b3"]
    wh, bl = prep["wh"], prep["bl"]

    k1 = w1.shape[0]
    k2 = w2.shape[0]
    k3 = w3.shape[0]
    Out = wh.shape[1]
    mxu_dtype = w1.dtype

    # Block-diagonal ones matrix: per-image row (H) reduction as one matmul.
    red = jnp.asarray(np.kron(np.eye(bt, dtype=np.float32),
                              np.ones((1, H), np.float32)))

    def const_spec(arr):
        return pl.BlockSpec(arr.shape, lambda n: (0,) * arr.ndim)

    grid = (padded_N // bt,)
    out = pl.pallas_call(
        _make_cnet_kernel(bt, H, k1, k2, k3, mxu_dtype),
        out_shape=jax.ShapeDtypeStruct((padded_N, Out), jnp.float32),
        grid=grid,
        in_specs=[
            pl.BlockSpec((bt, H, W * Cin), lambda n: (n, 0, 0)),
            const_spec(w0), const_spec(b0),
            const_spec(w1), const_spec(b1),
            const_spec(w2), const_spec(b2),
            const_spec(w3), const_spec(b3),
            const_spec(red), const_spec(wh), const_spec(bl),
        ],
        out_specs=pl.BlockSpec((bt, Out), lambda n: (n, 0)),
        compiler_params=pltpu.CompilerParams(
            dimension_semantics=("parallel",)),
    )(x, w0, b0, w1, b1, w2, b2, w3, b3, red, wh, bl)
    return out[:N]


# ---------------------------------------------------------------------------
# Pure-JAX reference (for verification)
# ---------------------------------------------------------------------------
def _conv_ref(x, w, b):
    k = w.shape[2]
    pad = (k - 1) // 2
    y = lax.conv_general_dilated(
        x, jnp.transpose(w, (2, 3, 1, 0)), (1, 1),
        [(pad, pad), (pad, pad)],
        dimension_numbers=("NHWC", "HWIO", "NHWC"),
        precision=lax.Precision.HIGHEST)
    return y + b.reshape(1, 1, 1, -1)


def cnet_reference(x_nchw, params, bias=True):
    x = jnp.transpose(x_nchw, (0, 2, 3, 1)).astype(jnp.float32)
    x = jnp.tanh(_conv_ref(x, params["conv0_w"], params["conv0_b"]))
    x = jnp.tanh(_conv_ref(x, params["conv1_w"], params["conv1_b"]))
    x1 = _conv_ref(x, params["conv2_1_w"], params["conv2_1_b"])
    x2 = _conv_ref(x, params["conv2_2_w"], params["conv2_2_b"])
    x3 = _conv_ref(x, params["conv2_3_w"], params["conv2_3_b"])
    x = jnp.tanh(jnp.concatenate([x1, x2, x3], axis=-1))
    x = jnp.tanh(_conv_ref(x, params["conv3_w"], params["conv3_b"]))
    x = jnp.mean(x, axis=(1, 2))
    y = jnp.dot(x, params["L_w"].T, precision=lax.Precision.HIGHEST)
    if bias:
        y = y + params["L_b"]
    return y


# ---------------------------------------------------------------------------
# Deterministic parameter init + demo
# ---------------------------------------------------------------------------
def init_params(key, in_ch, out_1, out_ch, out, kernel):
    keys = jax.random.split(key, 16)
    i = iter(range(16))

    def w(shape):
        fan_in = int(np.prod(shape[1:]))
        bound = 1.0 / np.sqrt(fan_in)
        return jax.random.uniform(keys[next(i)], shape, jnp.float32, -bound, bound)

    def b(n, fan_in):
        bound = 1.0 / np.sqrt(fan_in)
        return jax.random.uniform(keys[next(i)], (n,), jnp.float32, -bound, bound)

    p = {}
    p["conv0_w"] = w((out_1, in_ch, 1, 1)); p["conv0_b"] = b(out_1, in_ch)
    p["conv1_w"] = w((out_1, out_1, kernel, kernel)); p["conv1_b"] = b(out_1, out_1 * kernel * kernel)
    p["conv2_1_w"] = w((out_1, out_1, 1, 1)); p["conv2_1_b"] = b(out_1, out_1)
    p["conv2_2_w"] = w((out_1, out_1, 3, 3)); p["conv2_2_b"] = b(out_1, out_1 * 9)
    p["conv2_3_w"] = w((out_1, out_1, 5, 5)); p["conv2_3_b"] = b(out_1, out_1 * 25)
    p["conv3_w"] = w((out_ch, out_1 * 3, kernel, kernel)); p["conv3_b"] = b(out_ch, out_1 * 3 * kernel * kernel)
    p["L_w"] = w((out, out_ch)); p["L_b"] = b(out, out_ch)
    return p


if __name__ == "__main__":
    # CNet(out=16, bias=True, in_ch=4, out_ch=8, out_1=8, kernel=3)
    N, in_ch, H, W = 2, 4, 16, 16
    out_1, out_ch, out_dim, kernel = 8, 8, 16, 3

    key = jax.random.PRNGKey(0)
    k_x, k_p = jax.random.split(key)
    x = jax.random.normal(k_x, (N, in_ch, H, W), jnp.float32)   # NCHW like PyTorch
    params = init_params(k_p, in_ch, out_1, out_ch, out_dim, kernel)

    y_ref = jax.block_until_ready(cnet_reference(x, params, bias=True))

    # 1) f32 weight path: exact-semantics check against the HIGHEST-precision
    #    reference (tight tolerance).
    prep_f32 = prepare_params(params, H, W, bias=True, mxu_dtype=jnp.float32)
    y_f32 = jax.block_until_ready(cnet_forward(x, prep_f32, b_tile=8))
    assert y_f32.shape == (N, out_dim), y_f32.shape
    np.testing.assert_allclose(np.asarray(y_f32), np.asarray(y_ref),
                               rtol=2e-3, atol=2e-3)

    # 2) bf16 MXU-input path (the fast path): looser tolerance reflecting the
    #    bf16 quantization of matmul inputs (accumulation stays f32).
    prep_bf16 = prepare_params(params, H, W, bias=True, mxu_dtype=jnp.bfloat16)
    y_bf16 = jax.block_until_ready(cnet_forward(x, prep_bf16, b_tile=8))
    assert y_bf16.shape == (N, out_dim), y_bf16.shape
    np.testing.assert_allclose(np.asarray(y_bf16), np.asarray(y_ref),
                               rtol=2e-2, atol=1e-2)

    print("KERNEL_OK")
</pallas_src>

<mosaic_0001>
module attributes {stable_mosaic.version = 11 : i64} {
  func.func @kernel(%arg0: i32, %arg1: memref<2x16x64xf32, #tpu.memory_space<vmem>>, %arg2: memref<1x64x128xf32, #tpu.memory_space<vmem>>, %arg3: memref<1x128xf32, #tpu.memory_space<vmem>>, %arg4: memref<3x128x128xf32, #tpu.memory_space<vmem>>, %arg5: memref<1x128xf32, #tpu.memory_space<vmem>>, %arg6: memref<5x128x384xf32, #tpu.memory_space<vmem>>, %arg7: memref<1x384xf32, #tpu.memory_space<vmem>>, %arg8: memref<3x384x128xf32, #tpu.memory_space<vmem>>, %arg9: memref<1x128xf32, #tpu.memory_space<vmem>>, %arg10: memref<2x32xf32, #tpu.memory_space<vmem>>, %arg11: memref<128x16xf32, #tpu.memory_space<vmem>>, %arg12: memref<1x16xf32, #tpu.memory_space<vmem>>, %arg13: memref<2x16xf32, #tpu.memory_space<vmem>>) attributes {dimension_semantics = [#tpu.dimension_semantics<parallel>], iteration_bounds = array<i64: 1>, scalar_prefetch = 0 : i64, scratch_operands = 0 : i64, tpu.core_type = #tpu.core_type<tc>, window_params = [{transform_indices = @transform_0, window_bounds = array<i64: 2, 16, 64>}, {pipeline_mode = #tpu.pipeline_mode<synchronous>, transform_indices = @transform_1, window_bounds = array<i64: 1, 64, 128>}, {pipeline_mode = #tpu.pipeline_mode<synchronous>, transform_indices = @transform_2, window_bounds = array<i64: 1, 128>}, {pipeline_mode = #tpu.pipeline_mode<synchronous>, transform_indices = @transform_3, window_bounds = array<i64: 3, 128, 128>}, {pipeline_mode = #tpu.pipeline_mode<synchronous>, transform_indices = @transform_4, window_bounds = array<i64: 1, 128>}, {pipeline_mode = #tpu.pipeline_mode<synchronous>, transform_indices = @transform_5, window_bounds = array<i64: 5, 128, 384>}, {pipeline_mode = #tpu.pipeline_mode<synchronous>, transform_indices = @transform_6, window_bounds = array<i64: 1, 384>}, {pipeline_mode = #tpu.pipeline_mode<synchronous>, transform_indices = @transform_7, window_bounds = array<i64: 3, 384, 128>}, {pipeline_mode = #tpu.pipeline_mode<synchronous>, transform_indices = @transform_8, window_bounds = array<i64: 1, 128>}, {pipeline_mode = #tpu.pipeline_mode<synchronous>, transform_indices = @transform_9, window_bounds = array<i64: 2, 32>}, {pipeline_mode = #tpu.pipeline_mode<synchronous>, transform_indices = @transform_10, window_bounds = array<i64: 128, 16>}, {pipeline_mode = #tpu.pipeline_mode<synchronous>, transform_indices = @transform_11, window_bounds = array<i64: 1, 16>}, {transform_indices = @transform_12, window_bounds = array<i64: 2, 16>}]} {
    %c0 = arith.constant 0 : index
    %c0_0 = arith.constant 0 : index
    %c0_1 = arith.constant 0 : index
    %0 = vector.load %arg1[%c0, %c0_0, %c0_1] : memref<2x16x64xf32, #tpu.memory_space<vmem>>, vector<2x16x64xf32>
    %1 = vector.shape_cast %0 : vector<2x16x64xf32> to vector<32x64xf32>
    %c0_2 = arith.constant 0 : index
    %c0_3 = arith.constant 0 : index
    %c0_4 = arith.constant 0 : index
    %2 = vector.load %arg2[%c0_2, %c0_3, %c0_4] : memref<1x64x128xf32, #tpu.memory_space<vmem>>, vector<1x64x128xf32>
    %3 = vector.shape_cast %2 : vector<1x64x128xf32> to vector<64x128xf32>
    %cst = arith.constant dense<0.000000e+00> : vector<32x128xf32>
    %4 = tpu.matmul %1, %3, %cst {dimension_numbers = #tpu.dot_dimension_numbers<[1], [0], [0], [1], [0, 0, 1, 1], [], []>} : vector<32x64xf32>, vector<64x128xf32>, vector<32x128xf32> -> vector<32x128xf32>
    %c0_5 = arith.constant 0 : index
    %c0_6 = arith.constant 0 : index
    %5 = vector.load %arg3[%c0_5, %c0_6] : memref<1x128xf32, #tpu.memory_space<vmem>>, vector<1x128xf32>
    %6 = vector.broadcast %5 : vector<1x128xf32> to vector<32x128xf32>
    %7 = arith.addf %4, %6 : vector<32x128xf32>
    %8 = math.tanh %7 : vector<32x128xf32>
    %9 = vector.shape_cast %8 : vector<32x128xf32> to vector<2x16x128xf32>
    %cst_7 = arith.constant 0.000000e+00 : f32
    %10 = vector.broadcast %cst_7 : f32 to vector<2x1x128xf32>
    %11 = tpu.concatenate %10, %9, %10 in 1 : vector<2x1x128xf32>, vector<2x16x128xf32>, vector<2x1x128xf32> -> vector<2x18x128xf32>
    %12 = vector.extract_strided_slice %11 {offsets = [0, 0, 0], sizes = [2, 16, 128], strides = [1, 1, 1]} : vector<2x18x128xf32> to vector<2x16x128xf32>
    %13 = vector.shape_cast %12 : vector<2x16x128xf32> to vector<32x128xf32>
    %c0_8 = arith.constant 0 : index
    %c0_9 = arith.constant 0 : index
    %c0_10 = arith.constant 0 : index
    %14 = vector.load %arg4[%c0_8, %c0_9, %c0_10] : memref<3x128x128xf32, #tpu.memory_space<vmem>>, vector<1x128x128xf32>
    %15 = vector.shape_cast %14 : vector<1x128x128xf32> to vector<128x128xf32>
    %cst_11 = arith.constant dense<0.000000e+00> : vector<32x128xf32>
    %16 = tpu.matmul %13, %15, %cst_11 {dimension_numbers = #tpu.dot_dimension_numbers<[1], [0], [0], [1], [0, 0, 1, 1], [], []>} : vector<32x128xf32>, vector<128x128xf32>, vector<32x128xf32> -> vector<32x128xf32>
    %17 = vector.extract_strided_slice %11 {offsets = [0, 1, 0], sizes = [2, 16, 128], strides = [1, 1, 1]} : vector<2x18x128xf32> to vector<2x16x128xf32>
    %18 = vector.shape_cast %17 : vector<2x16x128xf32> to vector<32x128xf32>
    %c1 = arith.constant 1 : index
    %c0_12 = arith.constant 0 : index
    %c0_13 = arith.constant 0 : index
    %19 = vector.load %arg4[%c1, %c0_12, %c0_13] : memref<3x128x128xf32, #tpu.memory_space<vmem>>, vector<1x128x128xf32>
    %20 = vector.shape_cast %19 : vector<1x128x128xf32> to vector<128x128xf32>
    %cst_14 = arith.constant dense<0.000000e+00> : vector<32x128xf32>
    %21 = tpu.matmul %18, %20, %cst_14 {dimension_numbers = #tpu.dot_dimension_numbers<[1], [0], [0], [1], [0, 0, 1, 1], [], []>} : vector<32x128xf32>, vector<128x128xf32>, vector<32x128xf32> -> vector<32x128xf32>
    %22 = arith.addf %16, %21 : vector<32x128xf32>
    %23 = vector.extract_strided_slice %11 {offsets = [0, 2, 0], sizes = [2, 16, 128], strides = [1, 1, 1]} : vector<2x18x128xf32> to vector<2x16x128xf32>
    %24 = vector.shape_cast %23 : vector<2x16x128xf32> to vector<32x128xf32>
    %c2 = arith.constant 2 : index
    %c0_15 = arith.constant 0 : index
    %c0_16 = arith.constant 0 : index
    %25 = vector.load %arg4[%c2, %c0_15, %c0_16] : memref<3x128x128xf32, #tpu.memory_space<vmem>>, vector<1x128x128xf32>
    %26 = vector.shape_cast %25 : vector<1x128x128xf32> to vector<128x128xf32>
    %cst_17 = arith.constant dense<0.000000e+00> : vector<32x128xf32>
    %27 = tpu.matmul %24, %26, %cst_17 {dimension_numbers = #tpu.dot_dimension_numbers<[1], [0], [0], [1], [0, 0, 1, 1], [], []>} : vector<32x128xf32>, vector<128x128xf32>, vector<32x128xf32> -> vector<32x128xf32>
    %28 = arith.addf %22, %27 : vector<32x128xf32>
    %c0_18 = arith.constant 0 : index
    %c0_19 = arith.constant 0 : index
    %29 = vector.load %arg5[%c0_18, %c0_19] : memref<1x128xf32, #tpu.memory_space<vmem>>, vector<1x128xf32>
    %30 = vector.broadcast %29 : vector<1x128xf32> to vector<32x128xf32>
    %31 = arith.addf %28, %30 : vector<32x128xf32>
    %32 = math.tanh %31 : vector<32x128xf32>
    %33 = vector.shape_cast %32 : vector<32x128xf32> to vector<2x16x128xf32>
    %cst_20 = arith.constant 0.000000e+00 : f32
    %34 = vector.broadcast %cst_20 : f32 to vector<2x2x128xf32>
    %35 = tpu.concatenate %34, %33, %34 in 1 : vector<2x2x128xf32>, vector<2x16x128xf32>, vector<2x2x128xf32> -> vector<2x20x128xf32>
    %36 = vector.extract_strided_slice %35 {offsets = [0, 0, 0], sizes = [2, 16, 128], strides = [1, 1, 1]} : vector<2x20x128xf32> to vector<2x16x128xf32>
    %37 = vector.shape_cast %36 : vector<2x16x128xf32> to vector<32x128xf32>
    %c0_21 = arith.constant 0 : index
    %c0_22 = arith.constant 0 : index
    %c0_23 = arith.constant 0 : index
    %38 = vector.load %arg6[%c0_21, %c0_22, %c0_23] : memref<5x128x384xf32, #tpu.memory_space<vmem>>, vector<1x128x384xf32>
    %39 = vector.shape_cast %38 : vector<1x128x384xf32> to vector<128x384xf32>
    %cst_24 = arith.constant dense<0.000000e+00> : vector<32x384xf32>
    %40 = tpu.matmul %37, %39, %cst_24 {dimension_numbers = #tpu.dot_dimension_numbers<[1], [0], [0], [1], [0, 0, 1, 1], [], []>} : vector<32x128xf32>, vector<128x384xf32>, vector<32x384xf32> -> vector<32x384xf32>
    %41 = vector.extract_strided_slice %35 {offsets = [0, 1, 0], sizes = [2, 16, 128], strides = [1, 1, 1]} : vector<2x20x128xf32> to vector<2x16x128xf32>
    %42 = vector.shape_cast %41 : vector<2x16x128xf32> to vector<32x128xf32>
    %c1_25 = arith.constant 1 : index
    %c0_26 = arith.constant 0 : index
    %c0_27 = arith.constant 0 : index
    %43 = vector.load %arg6[%c1_25, %c0_26, %c0_27] : memref<5x128x384xf32, #tpu.memory_space<vmem>>, vector<1x128x384xf32>
    %44 = vector.shape_cast %43 : vector<1x128x384xf32> to vector<128x384xf32>
    %cst_28 = arith.constant dense<0.000000e+00> : vector<32x384xf32>
    %45 = tpu.matmul %42, %44, %cst_28 {dimension_numbers = #tpu.dot_dimension_numbers<[1], [0], [0], [1], [0, 0, 1, 1], [], []>} : vector<32x128xf32>, vector<128x384xf32>, vector<32x384xf32> -> vector<32x384xf32>
    %46 = arith.addf %40, %45 : vector<32x384xf32>
    %47 = vector.extract_strided_slice %35 {offsets = [0, 2, 0], sizes = [2, 16, 128], strides = [1, 1, 1]} : vector<2x20x128xf32> to vector<2x16x128xf32>
    %48 = vector.shape_cast %47 : vector<2x16x128xf32> to vector<32x128xf32>
    %c2_29 = arith.constant 2 : index
    %c0_30 = arith.constant 0 : index
    %c0_31 = arith.constant 0 : index
    %49 = vector.load %arg6[%c2_29, %c0_30, %c0_31] : memref<5x128x384xf32, #tpu.memory_space<vmem>>, vector<1x128x384xf32>
    %50 = vector.shape_cast %49 : vector<1x128x384xf32> to vector<128x384xf32>
    %cst_32 = arith.constant dense<0.000000e+00> : vector<32x384xf32>
    %51 = tpu.matmul %48, %50, %cst_32 {dimension_numbers = #tpu.dot_dimension_numbers<[1], [0], [0], [1], [0, 0, 1, 1], [], []>} : vector<32x128xf32>, vector<128x384xf32>, vector<32x384xf32> -> vector<32x384xf32>
    %52 = arith.addf %46, %51 : vector<32x384xf32>
    %53 = vector.extract_strided_slice %35 {offsets = [0, 3, 0], sizes = [2, 16, 128], strides = [1, 1, 1]} : vector<2x20x128xf32> to vector<2x16x128xf32>
    %54 = vector.shape_cast %53 : vector<2x16x128xf32> to vector<32x128xf32>
    %c3 = arith.constant 3 : index
    %c0_33 = arith.constant 0 : index
    %c0_34 = arith.constant 0 : index
    %55 = vector.load %arg6[%c3, %c0_33, %c0_34] : memref<5x128x384xf32, #tpu.memory_space<vmem>>, vector<1x128x384xf32>
    %56 = vector.shape_cast %55 : vector<1x128x384xf32> to vector<128x384xf32>
    %cst_35 = arith.constant dense<0.000000e+00> : vector<32x384xf32>
    %57 = tpu.matmul %54, %56, %cst_35 {dimension_numbers = #tpu.dot_dimension_numbers<[1], [0], [0], [1], [0, 0, 1, 1], [], []>} : vector<32x128xf32>, vector<128x384xf32>, vector<32x384xf32> -> vector<32x384xf32>
    %58 = arith.addf %52, %57 : vector<32x384xf32>
    %59 = vector.extract_strided_slice %35 {offsets = [0, 4, 0], sizes = [2, 16, 128], strides = [1, 1, 1]} : vector<2x20x128xf32> to vector<2x16x128xf32>
    %60 = vector.shape_cast %59 : vector<2x16x128xf32> to vector<32x128xf32>
    %c4 = arith.constant 4 : index
    %c0_36 = arith.constant 0 : index
    %c0_37 = arith.constant 0 : index
    %61 = vector.load %arg6[%c4, %c0_36, %c0_37] : memref<5x128x384xf32, #tpu.memory_space<vmem>>, vector<1x128x384xf32>
    %62 = vector.shape_cast %61 : vector<1x128x384xf32> to vector<128x384xf32>
    %cst_38 = arith.constant dense<0.000000e+00> : vector<32x384xf32>
    %63 = tpu.matmul %60, %62, %cst_38 {dimension_numbers = #tpu.dot_dimension_numbers<[1], [0], [0], [1], [0, 0, 1, 1], [], []>} : vector<32x128xf32>, vector<128x384xf32>, vector<32x384xf32> -> vector<32x384xf32>
    %64 = arith.addf %58, %63 : vector<32x384xf32>
    %c0_39 = arith.constant 0 : index
    %c0_40 = arith.constant 0 : index
    %65 = vector.load %arg7[%c0_39, %c0_40] : memref<1x384xf32, #tpu.memory_space<vmem>>, vector<1x384xf32>
    %66 = vector.broadcast %65 : vector<1x384xf32> to vector<32x384xf32>
    %67 = arith.addf %64, %66 : vector<32x384xf32>
    %68 = math.tanh %67 : vector<32x384xf32>
    %69 = vector.shape_cast %68 : vector<32x384xf32> to vector<2x16x384xf32>
    %cst_41 = arith.constant 0.000000e+00 : f32
    %70 = vector.broadcast %cst_41 : f32 to vector<2x1x384xf32>
    %71 = tpu.concatenate %70, %69, %70 in 1 : vector<2x1x384xf32>, vector<2x16x384xf32>, vector<2x1x384xf32> -> vector<2x18x384xf32>
    %72 = vector.extract_strided_slice %71 {offsets = [0, 0, 0], sizes = [2, 16, 384], strides = [1, 1, 1]} : vector<2x18x384xf32> to vector<2x16x384xf32>
    %73 = vector.shape_cast %72 : vector<2x16x384xf32> to vector<32x384xf32>
    %c0_42 = arith.constant 0 : index
    %c0_43 = arith.constant 0 : index
    %c0_44 = arith.constant 0 : index
    %74 = vector.load %arg8[%c0_42, %c0_43, %c0_44] : memref<3x384x128xf32, #tpu.memory_space<vmem>>, vector<1x384x128xf32>
    %75 = vector.shape_cast %74 : vector<1x384x128xf32> to vector<384x128xf32>
    %cst_45 = arith.constant dense<0.000000e+00> : vector<32x128xf32>
    %76 = tpu.matmul %73, %75, %cst_45 {dimension_numbers = #tpu.dot_dimension_numbers<[1], [0], [0], [1], [0, 0, 1, 1], [], []>} : vector<32x384xf32>, vector<384x128xf32>, vector<32x128xf32> -> vector<32x128xf32>
    %77 = vector.extract_strided_slice %71 {offsets = [0, 1, 0], sizes = [2, 16, 384], strides = [1, 1, 1]} : vector<2x18x384xf32> to vector<2x16x384xf32>
    %78 = vector.shape_cast %77 : vector<2x16x384xf32> to vector<32x384xf32>
    %c1_46 = arith.constant 1 : index
    %c0_47 = arith.constant 0 : index
    %c0_48 = arith.constant 0 : index
    %79 = vector.load %arg8[%c1_46, %c0_47, %c0_48] : memref<3x384x128xf32, #tpu.memory_space<vmem>>, vector<1x384x128xf32>
    %80 = vector.shape_cast %79 : vector<1x384x128xf32> to vector<384x128xf32>
    %cst_49 = arith.constant dense<0.000000e+00> : vector<32x128xf32>
    %81 = tpu.matmul %78, %80, %cst_49 {dimension_numbers = #tpu.dot_dimension_numbers<[1], [0], [0], [1], [0, 0, 1, 1], [], []>} : vector<32x384xf32>, vector<384x128xf32>, vector<32x128xf32> -> vector<32x128xf32>
    %82 = arith.addf %76, %81 : vector<32x128xf32>
    %83 = vector.extract_strided_slice %71 {offsets = [0, 2, 0], sizes = [2, 16, 384], strides = [1, 1, 1]} : vector<2x18x384xf32> to vector<2x16x384xf32>
    %84 = vector.shape_cast %83 : vector<2x16x384xf32> to vector<32x384xf32>
    %c2_50 = arith.constant 2 : index
    %c0_51 = arith.constant 0 : index
    %c0_52 = arith.constant 0 : index
    %85 = vector.load %arg8[%c2_50, %c0_51, %c0_52] : memref<3x384x128xf32, #tpu.memory_space<vmem>>, vector<1x384x128xf32>
    %86 = vector.shape_cast %85 : vector<1x384x128xf32> to vector<384x128xf32>
    %cst_53 = arith.constant dense<0.000000e+00> : vector<32x128xf32>
    %87 = tpu.matmul %84, %86, %cst_53 {dimension_numbers = #tpu.dot_dimension_numbers<[1], [0], [0], [1], [0, 0, 1, 1], [], []>} : vector<32x384xf32>, vector<384x128xf32>, vector<32x128xf32> -> vector<32x128xf32>
    %88 = arith.addf %82, %87 : vector<32x128xf32>
    %c0_54 = arith.constant 0 : index
    %c0_55 = arith.constant 0 : index
    %89 = vector.load %arg9[%c0_54, %c0_55] : memref<1x128xf32, #tpu.memory_space<vmem>>, vector<1x128xf32>
    %90 = vector.broadcast %89 : vector<1x128xf32> to vector<32x128xf32>
    %91 = arith.addf %88, %90 : vector<32x128xf32>
    %92 = math.tanh %91 : vector<32x128xf32>
    %c0_56 = arith.constant 0 : index
    %c0_57 = arith.constant 0 : index
    %93 = vector.load %arg10[%c0_56, %c0_57] : memref<2x32xf32, #tpu.memory_space<vmem>>, vector<2x32xf32>
    %cst_58 = arith.constant dense<0.000000e+00> : vector<2x128xf32>
    %94 = tpu.matmul %93, %92, %cst_58 {dimension_numbers = #tpu.dot_dimension_numbers<[1], [0], [0], [1], [0, 0, 1, 1], [], []>} : vector<2x32xf32>, vector<32x128xf32>, vector<2x128xf32> -> vector<2x128xf32>
    %c0_59 = arith.constant 0 : index
    %c0_60 = arith.constant 0 : index
    %95 = vector.load %arg11[%c0_59, %c0_60] : memref<128x16xf32, #tpu.memory_space<vmem>>, vector<128x16xf32>
    %cst_61 = arith.constant dense<0.000000e+00> : vector<2x16xf32>
    %96 = tpu.matmul %94, %95, %cst_61 {dimension_numbers = #tpu.dot_dimension_numbers<[1], [0], [0], [1], [0, 0, 1, 1], [], []>} : vector<2x128xf32>, vector<128x16xf32>, vector<2x16xf32> -> vector<2x16xf32>
    %c0_62 = arith.constant 0 : index
    %c0_63 = arith.constant 0 : index
    %97 = vector.load %arg12[%c0_62, %c0_63] : memref<1x16xf32, #tpu.memory_space<vmem>>, vector<1x16xf32>
    %98 = vector.broadcast %97 : vector<1x16xf32> to vector<2x16xf32>
    %99 = arith.addf %96, %98 : vector<2x16xf32>
    %c0_64 = arith.constant 0 : index
    %c0_65 = arith.constant 0 : index
    %100 = vector.load %arg13[%c0_64, %c0_65] : memref<2x16xf32, #tpu.memory_space<vmem>>, vector<2x16xf32>
    tpu.vector_store %arg13[%c0_64, %c0_65], %99 {strides = array<i32>} : memref<2x16xf32, #tpu.memory_space<vmem>>, vector<2x16xf32>,
    return
  }
  func.func @transform_0(%arg0: i32) -> (i32, i32, i32) {
    %c0_i32 = arith.constant 0 : i32
    %c0_i32_0 = arith.constant 0 : i32
    %c0_i32_1 = arith.constant 0 : i32
    return %arg0, %c0_i32, %c0_i32_0 : i32, i32, i32
  }
  func.func @transform_1(%arg0: i32) -> (i32, i32, i32) {
    %c0_i32 = arith.constant 0 : i32
    %c0_i32_0 = arith.constant 0 : i32
    %c0_i32_1 = arith.constant 0 : i32
    %c0_i32_2 = arith.constant 0 : i32
    return %c0_i32, %c0_i32_0, %c0_i32_1 : i32, i32, i32
  }
  func.func @transform_2(%arg0: i32) -> (i32, i32) {
    %c0_i32 = arith.constant 0 : i32
    %c0_i32_0 = arith.constant 0 : i32
    %c0_i32_1 = arith.constant 0 : i32
    return %c0_i32, %c0_i32_0 : i32, i32
  }
  func.func @transform_3(%arg0: i32) -> (i32, i32, i32) {
    %c0_i32 = arith.constant 0 : i32
    %c0_i32_0 = arith.constant 0 : i32
    %c0_i32_1 = arith.constant 0 : i32
    %c0_i32_2 = arith.constant 0 : i32
    return %c0_i32, %c0_i32_0, %c0_i32_1 : i32, i32, i32
  }
  func.func @transform_4(%arg0: i32) -> (i32, i32) {
    %c0_i32 = arith.constant 0 : i32
    %c0_i32_0 = arith.constant 0 : i32
    %c0_i32_1 = arith.constant 0 : i32
    return %c0_i32, %c0_i32_0 : i32, i32
  }
  func.func @transform_5(%arg0: i32) -> (i32, i32, i32) {
    %c0_i32 = arith.constant 0 : i32
    %c0_i32_0 = arith.constant 0 : i32
    %c0_i32_1 = arith.constant 0 : i32
    %c0_i32_2 = arith.constant 0 : i32
    return %c0_i32, %c0_i32_0, %c0_i32_1 : i32, i32, i32
  }
  func.func @transform_6(%arg0: i32) -> (i32, i32) {
    %c0_i32 = arith.constant 0 : i32
    %c0_i32_0 = arith.constant 0 : i32
    %c0_i32_1 = arith.constant 0 : i32
    return %c0_i32, %c0_i32_0 : i32, i32
  }
  func.func @transform_7(%arg0: i32) -> (i32, i32, i32) {
    %c0_i32 = arith.constant 0 : i32
    %c0_i32_0 = arith.constant 0 : i32
    %c0_i32_1 = arith.constant 0 : i32
    %c0_i32_2 = arith.constant 0 : i32
    return %c0_i32, %c0_i32_0, %c0_i32_1 : i32, i32, i32
  }
  func.func @transform_8(%arg0: i32) -> (i32, i32) {
    %c0_i32 = arith.constant 0 : i32
    %c0_i32_0 = arith.constant 0 : i32
    %c0_i32_1 = arith.constant 0 : i32
    return %c0_i32, %c0_i32_0 : i32, i32
  }
  func.func @transform_9(%arg0: i32) -> (i32, i32) {
    %c0_i32 = arith.constant 0 : i32
    %c0_i32_0 = arith.constant 0 : i32
    %c0_i32_1 = arith.constant 0 : i32
    return %c0_i32, %c0_i32_0 : i32, i32
  }
  func.func @transform_10(%arg0: i32) -> (i32, i32) {
    %c0_i32 = arith.constant 0 : i32
    %c0_i32_0 = arith.constant 0 : i32
    %c0_i32_1 = arith.constant 0 : i32
    return %c0_i32, %c0_i32_0 : i32, i32
  }
  func.func @transform_11(%arg0: i32) -> (i32, i32) {
    %c0_i32 = arith.constant 0 : i32
    %c0_i32_0 = arith.constant 0 : i32
    %c0_i32_1 = arith.constant 0 : i32
    return %c0_i32, %c0_i32_0 : i32, i32
  }
  func.func @transform_12(%arg0: i32) -> (i32, i32) {
    %c0_i32 = arith.constant 0 : i32
    %c0_i32_0 = arith.constant 0 : i32
    return %arg0, %c0_i32 : i32, i32
  }
}

</mosaic_0001>

<llo_original>
// kernel: cnet_forward.1
$region0: #{cnet_forward.1}
  #allocation0 [shape = 'u32[]', space=smem, size = 0x4, offset = 0x4, fixed_abs, tag = 'smem constant byte address 0x4 - core index']
  #allocation1 [shape = 'u32[144,128]{1,0:T(1,128)}', space=vmem, size = 0x12000, scoped, tag = 'internal scratch']
  %s0 = inlined_call_operand.vmem [shape: f32[2,16,64], index: 0, kind: input, shape index: {}]
  %s1 = inlined_call_operand.vmem [shape: f32[1,64,128], index: 1, kind: input, shape index: {}]
  %s2 = inlined_call_operand.vmem [shape: f32[1,128], index: 2, kind: input, shape index: {}]
  %s3 = inlined_call_operand.vmem [shape: f32[3,128,128], index: 3, kind: input, shape index: {}]
  %s4 = inlined_call_operand.vmem [shape: f32[1,128], index: 4, kind: input, shape index: {}]
  %s5 = inlined_call_operand.hbm [shape: f32[5,128,384], index: 5, kind: input, shape index: {}]
  %s6 = inlined_call_operand.vmem [shape: f32[1,384], index: 6, kind: input, shape index: {}]
  %s7 = inlined_call_operand.hbm [shape: f32[3,384,128], index: 7, kind: input, shape index: {}]
  %s8 = inlined_call_operand.vmem [shape: f32[1,128], index: 8, kind: input, shape index: {}]
  %s9 = inlined_call_operand.vmem [shape: f32[2,32], index: 9, kind: input, shape index: {}]
  %s10 = inlined_call_operand.vmem [shape: f32[128,16], index: 10, kind: input, shape index: {}]
  %s11 = inlined_call_operand.vmem [shape: f32[1,16], index: 11, kind: input, shape index: {}]
  %s12 = inlined_call_operand.hbm [shape: f32[2,16], index: 12, kind: output, shape index: {}]
  %s13 = sld [smem:[#allocation0]]
  $region66: #{cnet_forward.1} parent=0
    _
  %s15 = ssub.s32 1, %s13
  %s16 = scalar_select 0, %s15, %s13
  $region1: #{cnet_forward.1} parent=0
    #allocation2 [shape = 'u8[983040]{0}', space=vmem, size = 0xf0000, scoped, tag = 'input window, operand 5, single buffered']
    #allocation3 [shape = 's32[1]{0}', space=sflag, size = 0x4, scoped, tag = 'scoped memory for cnet_forward.1']
    #allocation4 [shape = 's32[1]{0}', space=sflag, size = 0x4, scoped, tag = 'scoped memory for cnet_forward.1']
    #allocation5 [shape = 'u8[589824]{0}', space=vmem, size = 0x90000, scoped, tag = 'input window, operand 7, single buffered']
    #allocation6 [shape = 's32[1]{0}', space=sflag, size = 0x4, scoped, tag = 'scoped memory for cnet_forward.1']
    #allocation7 [shape = 'u8[1024]{0}', space=vmem, size = 0x400, scoped, tag = 'output window, operand 0, single buffered']
    %17 = vsyncpa [#allocation3], 0
    %18 = vsyncpa [#allocation6], 0
    %19 = vsyncpa [#allocation4], 0
    // Predicated region
    $region2: #{cnet_forward.1} parent=1 // pred_check
      _
    $region3: #{cnet_forward.1} parent=1 // pred_check_branch
      %21 = sbr.rel (0) target = $region5
    $region4: #{cnet_forward.1} parent=1 // pred_region
      _
    $region5: #{cnet_forward.1} parent=1 // pred_fallthru
      _
    // Predicated region
    $region6: #{cnet_forward.1} parent=1 // pred_check
      _
    $region7: #{cnet_forward.1} parent=1 // pred_check_branch
      %23 = sbr.rel (0) target = $region9
    $region8: #{cnet_forward.1} parent=1 // pred_region
      _
    $region9: #{cnet_forward.1} parent=1 // pred_fallthru
      _
    // Predicated region
    $region10: #{cnet_forward.1} parent=1 // pred_check
      _
    $region11: #{cnet_forward.1} parent=1 // pred_check_branch
      %25 = sbr.rel (0) target = $region13
    $region12: #{cnet_forward.1} parent=1 // pred_region
      _
    $region13: #{cnet_forward.1} parent=1 // pred_fallthru
      _
    // Predicated region
    $region14: #{cnet_forward.1} parent=1 // pred_check
      _
    $region15: #{cnet_forward.1} parent=1 // pred_check_branch
      %27 = sbr.rel (0) target = $region17
    $region16: #{cnet_forward.1} parent=1 // pred_region
      _
    $region17: #{cnet_forward.1} parent=1 // pred_fallthru
      _
    // Predicated region
    $region18: #{cnet_forward.1} parent=1 // pred_check
      _
    $region19: #{cnet_forward.1} parent=1 // pred_check_branch
      %29 = sbr.rel (0) target = $region21
    $region20: #{cnet_forward.1} parent=1 // pred_region
      _
    $region21: #{cnet_forward.1} parent=1 // pred_fallthru
      _
    // Predicated region
    $region22: #{cnet_forward.1} parent=1 // pred_check
      _
    $region23: #{cnet_forward.1} parent=1 // pred_check_branch
      %31 = sbr.rel (0) target = $region25
    $region24: #{cnet_forward.1} parent=1 // pred_region
      %s33 = ssub.s32 30720, 30720
      %34 = vsyncadd [#allocation3], %s33
      %s35 = sshll.u32 [#allocation2], 4
      %s36 = int_to_ptr.vmem [resolvable:$true] %s35
      %41 = dma.hbm_to_vmem [thread:$0]  %s5, 30720, %s36, [#allocation3], 384, 384, 24
    $region25: #{cnet_forward.1} parent=1 // pred_fallthru
      _
    // Predicated region
    $region26: #{cnet_forward.1} parent=1 // pred_check
      _
    $region27: #{cnet_forward.1} parent=1 // pred_check_branch
      %43 = sbr.rel (0) target = $region29
    $region28: #{cnet_forward.1} parent=1 // pred_region
      _
    $region29: #{cnet_forward.1} parent=1 // pred_fallthru
      _
    // Predicated region
    $region30: #{cnet_forward.1} parent=1 // pred_check
      _
    $region31: #{cnet_forward.1} parent=1 // pred_check_branch
      %45 = sbr.rel (0) target = $region33
    $region32: #{cnet_forward.1} parent=1 // pred_region
      %s47 = ssub.s32 18432, 18432
      %48 = vsyncadd [#allocation6], %s47
      %s49 = sshll.u32 [#allocation5], 4
      %s50 = int_to_ptr.vmem [resolvable:$true] %s49
      %55 = dma.hbm_to_vmem [thread:$0]  %s7, 18432, %s50, [#allocation6], 128, 128, 8
    $region33: #{cnet_forward.1} parent=1 // pred_fallthru
      _
    // Predicated region
    $region34: #{cnet_forward.1} parent=1 // pred_check
      _
    $region35: #{cnet_forward.1} parent=1 // pred_check_branch
      %57 = sbr.rel (0) target = $region37
    $region36: #{cnet_forward.1} parent=1 // pred_region
      _
    $region37: #{cnet_forward.1} parent=1 // pred_fallthru
      _
    // Predicated region
    $region38: #{cnet_forward.1} parent=1 // pred_check
      _
    $region39: #{cnet_forward.1} parent=1 // pred_check_branch
      %59 = sbr.rel (0) target = $region41
    $region40: #{cnet_forward.1} parent=1 // pred_region
      _
    $region41: #{cnet_forward.1} parent=1 // pred_fallthru
      _
    // Predicated region
    $region42: #{cnet_forward.1} parent=1 // pred_check
      _
    $region43: #{cnet_forward.1} parent=1 // pred_check_branch
      %61 = sbr.rel (0) target = $region45
    $region44: #{cnet_forward.1} parent=1 // pred_region
      _
    $region45: #{cnet_forward.1} parent=1 // pred_fallthru
      _
    // Predicated region
    $region46: #{cnet_forward.1} parent=1 // pred_check
      _
    $region47: #{cnet_forward.1} parent=1 // pred_check_branch
      %63 = sbr.rel (0) target = $region49
    $region48: #{cnet_forward.1} parent=1 // pred_region
      _
    $region49: #{cnet_forward.1} parent=1 // pred_fallthru
      _
    // Predicated region
    $region50: #{cnet_forward.1} parent=1 // pred_check
      _
    $region51: #{cnet_forward.1} parent=1 // pred_check_branch
      %65 = sbr.rel (0) target = $region53
    $region52: #{cnet_forward.1} parent=1 // pred_region
      %66 = dma.done [#allocation3], 30720
    $region53: #{cnet_forward.1} parent=1 // pred_fallthru
      _
    // Predicated region
    $region54: #{cnet_forward.1} parent=1 // pred_check
      _
    $region55: #{cnet_forward.1} parent=1 // pred_check_branch
      %68 = sbr.rel (0) target = $region57
    $region56: #{cnet_forward.1} parent=1 // pred_region
      %69 = dma.done [#allocation6], 18432
    $region57: #{cnet_forward.1} parent=1 // pred_fallthru
      _
    %v70 = vld [vmem:[%s0] sm:$0xff]
    %v71 = vld [vmem:[%s0 + $0x8] sm:$0xff]
    %v72 = vld [vmem:[%s0 + $0x10] sm:$0xff]
    %v73 = vld [vmem:[%s0 + $0x18] sm:$0xff]
    %v74 = vld [vmem:[%s1] sm:$0xff]
    %v75 = vld [vmem:[%s1 + $0x8] sm:$0xff]
    %v76 = vld [vmem:[%s1 + $0x10] sm:$0xff]
    %v77 = vld [vmem:[%s1 + $0x18] sm:$0xff]
    %v78 = vld [vmem:[%s1 + $0x20] sm:$0xff]
    %v79 = vld [vmem:[%s1 + $0x28] sm:$0xff]
    %v80 = vld [vmem:[%s1 + $0x30] sm:$0xff]
    %v81 = vld [vmem:[%s1 + $0x38] sm:$0xff]
    %v82 = vld [vmem:[%s2] sm:$0x1]
    %v84 = vlaneseq
    %v85 = vshrl.u32 %v84, 7
    %v86 = vsub.s32 0, %v85
    %v87 = vrot.slane %v82, %v86
    %vm89 = vcmask 523264
    %v91 = vsel %vm89, %v70, 0
    %v94 = vsel %vm89, %v71, 0
    %v97 = vsel %vm89, %v72, 0
    %v100 = vsel %vm89, %v73, 0
    %102 = vmatprep.subr.mxu0 0.0
    %103 = vmatpush1.msra.mxu0 %v74
    %104 = vmatprep.subr.mxu0 0.0
    %105 = vmatpush1.msra.mxu0 %v75
    %106 = vmatprep.subr.mxu0 0.0
    %107 = vmatpush1.msra.mxu0 %v76
    %108 = vmatprep.subr.mxu0 0.0
    %109 = vmatpush1.msra.mxu0 %v77
    %110 = vmatprep.subr.mxu0 0.0
    %111 = vmatpush1.msra.mxu0 %v78
    %112 = vmatprep.subr.mxu0 0.0
    %113 = vmatpush1.msra.mxu0 %v79
    %114 = vmatprep.subr.mxu0 0.0
    %115 = vmatpush1.msra.mxu0 %v80
    %116 = vmatprep.subr.mxu0 0.0
    %117 = vmatpush1.msra.mxu0 %v81
    %118 = vmatprep.subr.mxu0 0.0
    %119 = vmatpush1.msra.mxu0 0.0
    %120 = vmatprep.subr.mxu0 0.0
    %121 = vmatpush1.msra.mxu0 0.0
    %122 = vmatprep.subr.mxu0 0.0
    %123 = vmatpush1.msra.mxu0 0.0
    %124 = vmatprep.subr.mxu0 0.0
    %125 = vmatpush1.msra.mxu0 0.0
    %126 = vmatprep.subr.mxu0 0.0
    %127 = vmatpush1.msra.mxu0 0.0
    %128 = vmatprep.subr.mxu0 0.0
    %129 = vmatpush1.msra.mxu0 0.0
    %130 = vmatprep.subr.mxu0 0.0
    %131 = vmatpush1.msra.mxu0 0.0
    %132 = vmatprep.subr.mxu0 0.0
    %133 = vmatpush1.msra.mxu0 0.0
    %134 = vmatprep.subr.mxu0 0.0
    %135 = vmatpush1.msra.mxu0 0.0
    %136 = vmatprep.subr.mxu0 0.0
    %137 = vmatpush1.msra.mxu0 0.0
    %138 = vmatprep.subr.mxu0 0.0
    %139 = vmatpush1.msra.mxu0 0.0
    %140 = vmatprep.subr.mxu0 0.0
    %141 = vmatpush1.msra.mxu0 0.0
    %142 = vmatprep.subr.mxu0 0.0
    %143 = vmatpush1.msra.mxu0 0.0
    %144 = vmatprep.subr.mxu0 0.0
    %145 = vmatpush1.msra.mxu0 0.0
    %146 = vmatprep.subr.mxu0 0.0
    %147 = vmatpush1.msra.mxu0 0.0
    %148 = vmatprep.subr.mxu0 0.0
    %149 = vmatpush1.msra.mxu0 0.0
    %150 = vmatprep.subr.mxu0 0.0
    %151 = vmatpush1.msra.mxu0 0.0
    %152 = vmatprep.subr.mxu0 0.0
    %153 = vmatpush1.msra.mxu0 0.0
    %154 = vmatprep.subr.mxu0 0.0
    %155 = vmatpush1.msra.mxu0 0.0
    %156 = vmatprep.subr.mxu0 0.0
    %157 = vmatpush1.msra.mxu0 0.0
    %158 = vmatprep.subr.mxu0 0.0
    %159 = vmatpush1.msra.mxu0 0.0
    %160 = vmatprep.subr.mxu0 0.0
    %161 = vmatpush1.msra.mxu0 0.0
    %162 = vmatprep.subr.mxu0 0.0
    %163 = vmatpush1.msra.mxu0 0.0
    %164 = vmatprep.subr.mxu0 0.0
    %165 = vmatpush1.msra.mxu0 0.0
    %166 = vmatprep.mubr.f32.mxu0 0.0
    %167 = vmatmul.mubr.f32.gmra.mrb[0].mxu0 %v91
    %v168 = vpop.f32.mrb[0].mxu0
    %v169 = vadd.f32 %v87, %v168
    %v170 = vpop.f32.mrb[0].mxu0
    %171 = vmatprep.mubr.f32.mxu0 0.0
    %172 = vmatmul.mubr.f32.gmra.mrb[0].mxu0 %v94
    %v173 = vpop.f32.mrb[0].mxu0
    %v174 = vadd.f32 %v87, %v173
    %v175 = vpop.f32.mrb[0].mxu0
    %176 = vmatprep.mubr.f32.mxu0 0.0
    %177 = vmatmul.mubr.f32.gmra.mrb[0].mxu0 %v97
    %v178 = vpop.f32.mrb[0].mxu0
    %v179 = vadd.f32 %v87, %v178
    %v180 = vpop.f32.mrb[0].mxu0
    %181 = vmatprep.mubr.f32.mxu0 0.0
    %182 = vmatmul.mubr.f32.gmra.mrb[0].mxu0 %v100
    %v183 = vpop.f32.mrb[0].mxu0
    %v184 = vadd.f32 %v87, %v183
    %v185 = vpop.f32.mrb[0].mxu0
    %186 = vdwg.mxu0
    %v187 = vtanh.pop %v169
    %v188 = vtanh.pop %v174
    %v189 = vtanh.pop %v179
    %v190 = vtanh.pop %v184
    %vm195 = vcmask 1040384
    %v196 = vrot.slane %v187, 7
    %v197 = vrot.slane %v188, 7
    %v198 = vsel %vm195, %v196, %v197
    %v199 = vrot.slane %v189, 7
    %v200 = vrot.slane %v190, 7
    %v201 = vsel %vm195, %v199, %v200
    %v208 = vsel %vm195, 0.0, %v196
    %v209 = vsel %vm195, 0.0, %v199
    %v210 = vsel %vm195, %v197, 0.0
    %v211 = vsel %vm195, %v200, 0.0
    %v212 = vld [vmem:[%s3] sm:$0xff]
    %v213 = vld [vmem:[%s3 + $0x8] sm:$0xff]
    %v214 = vld [vmem:[%s3 + $0x10] sm:$0xff]
    %v215 = vld [vmem:[%s3 + $0x18] sm:$0xff]
    %v216 = vld [vmem:[%s3 + $0x20] sm:$0xff]
    %v217 = vld [vmem:[%s3 + $0x28] sm:$0xff]
    %v218 = vld [vmem:[%s3 + $0x30] sm:$0xff]
    %v219 = vld [vmem:[%s3 + $0x38] sm:$0xff]
    %v220 = vld [vmem:[%s3 + $0x40] sm:$0xff]
    %v221 = vld [vmem:[%s3 + $0x48] sm:$0xff]
    %v222 = vld [vmem:[%s3 + $0x50] sm:$0xff]
    %v223 = vld [vmem:[%s3 + $0x58] sm:$0xff]
    %v224 = vld [vmem:[%s3 + $0x60] sm:$0xff]
    %v225 = vld [vmem:[%s3 + $0x68] sm:$0xff]
    %v226 = vld [vmem:[%s3 + $0x70] sm:$0xff]
    %v227 = vld [vmem:[%s3 + $0x78] sm:$0xff]
    %vm232 = vcmask 1046528
    %v233 = vrot.slane %v208, 1
    %v234 = vrot.slane %v198, 1
    %v235 = vsel %vm232, %v233, %v234
    %v236 = vrot.slane %v210, 1
    %v237 = vsel %vm232, %v234, %v236
    %v238 = vrot.slane %v209, 1
    %v239 = vrot.slane %v201, 1
    %v240 = vsel %vm232, %v238, %v239
    %v241 = vrot.slane %v211, 1
    %v242 = vsel %vm232, %v239, %v241
    %s247 = scalar_lea.vmem %s3, 128
    %v248 = vld [vmem:[%s247] sm:$0xff]
    %v249 = vld [vmem:[%s247 + $0x8] sm:$0xff]
    %v250 = vld [vmem:[%s247 + $0x10] sm:$0xff]
    %v251 = vld [vmem:[%s247 + $0x18] sm:$0xff]
    %v252 = vld [vmem:[%s247 + $0x20] sm:$0xff]
    %v253 = vld [vmem:[%s247 + $0x28] sm:$0xff]
    %v254 = vld [vmem:[%s247 + $0x30] sm:$0xff]
    %v255 = vld [vmem:[%s247 + $0x38] sm:$0xff]
    %v256 = vld [vmem:[%s247 + $0x40] sm:$0xff]
    %v257 = vld [vmem:[%s247 + $0x48] sm:$0xff]
    %v258 = vld [vmem:[%s247 + $0x50] sm:$0xff]
    %v259 = vld [vmem:[%s247 + $0x58] sm:$0xff]
    %v260 = vld [vmem:[%s247 + $0x60] sm:$0xff]
    %v261 = vld [vmem:[%s247 + $0x68] sm:$0xff]
    %v262 = vld [vmem:[%s247 + $0x70] sm:$0xff]
    %v263 = vld [vmem:[%s247 + $0x78] sm:$0xff]
    %264 = vmatprep.subr.mxu0 0.0
    %265 = vmatpush1.msra.mxu0 %v248
    %266 = vmatprep.subr.mxu0 0.0
    %267 = vmatpush1.msra.mxu0 %v249
    %268 = vmatprep.subr.mxu0 0.0
    %269 = vmatpush1.msra.mxu0 %v250
    %270 = vmatprep.subr.mxu0 0.0
    %271 = vmatpush1.msra.mxu0 %v251
    %272 = vmatprep.subr.mxu0 0.0
    %273 = vmatpush1.msra.mxu0 %v252
    %274 = vmatprep.subr.mxu0 0.0
    %275 = vmatpush1.msra.mxu0 %v253
    %276 = vmatprep.subr.mxu0 0.0
    %277 = vmatpush1.msra.mxu0 %v254
    %278 = vmatprep.subr.mxu0 0.0
    %279 = vmatpush1.msra.mxu0 %v255
    %280 = vmatprep.subr.mxu0 0.0
    %281 = vmatpush1.msra.mxu0 %v256
    %282 = vmatprep.subr.mxu0 0.0
    %283 = vmatpush1.msra.mxu0 %v257
    %284 = vmatprep.subr.mxu0 0.0
    %285 = vmatpush1.msra.mxu0 %v258
    %286 = vmatprep.subr.mxu0 0.0
    %287 = vmatpush1.msra.mxu0 %v259
    %288 = vmatprep.subr.mxu0 0.0
    %289 = vmatpush1.msra.mxu0 %v260
    %290 = vmatprep.subr.mxu0 0.0
    %291 = vmatpush1.msra.mxu0 %v261
    %292 = vmatprep.subr.mxu0 0.0
    %293 = vmatpush1.msra.mxu0 %v262
    %294 = vmatprep.subr.mxu0 0.0
    %295 = vmatpush1.msra.mxu0 %v263
    %296 = vmatprep.subr.mxu0 0.0
    %297 = vmatpush1.msra.mxu0 0.0
    %298 = vmatprep.subr.mxu0 0.0
    %299 = vmatpush1.msra.mxu0 0.0
    %300 = vmatprep.subr.mxu0 0.0
    %301 = vmatpush1.msra.mxu0 0.0
    %302 = vmatprep.subr.mxu0 0.0
    %303 = vmatpush1.msra.mxu0 0.0
    %304 = vmatprep.subr.mxu0 0.0
    %305 = vmatpush1.msra.mxu0 0.0
    %306 = vmatprep.subr.mxu0 0.0
    %307 = vmatpush1.msra.mxu0 0.0
    %308 = vmatprep.subr.mxu0 0.0
    %309 = vmatpush1.msra.mxu0 0.0
    %310 = vmatprep.subr.mxu0 0.0
    %311 = vmatpush1.msra.mxu0 0.0
    %312 = vmatprep.subr.mxu0 0.0
    %313 = vmatpush1.msra.mxu0 0.0
    %314 = vmatprep.subr.mxu0 0.0
    %315 = vmatpush1.msra.mxu0 0.0
    %316 = vmatprep.subr.mxu0 0.0
    %317 = vmatpush1.msra.mxu0 0.0
    %318 = vmatprep.subr.mxu0 0.0
    %319 = vmatpush1.msra.mxu0 0.0
    %320 = vmatprep.subr.mxu0 0.0
    %321 = vmatpush1.msra.mxu0 0.0
    %322 = vmatprep.subr.mxu0 0.0
    %323 = vmatpush1.msra.mxu0 0.0
    %324 = vmatprep.subr.mxu0 0.0
    %325 = vmatpush1.msra.mxu0 0.0
    %326 = vmatprep.subr.mxu0 0.0
    %327 = vmatpush1.msra.mxu0 0.0
    %328 = vmatprep.mubr.f32.mxu0 0.0
    %329 = vmatmul.mubr.f32.gmra.mrb[0].mxu0 %v235
    %v330 = vpop.f32.mrb[0].mxu0
    %v331 = vadd.f32 0.0, %v330
    %v332 = vpop.f32.mrb[0].mxu0
    %333 = vmatprep.mubr.f32.mxu0 0.0
    %334 = vmatmul.mubr.f32.gmra.mrb[0].mxu0 %v237
    %v335 = vpop.f32.mrb[0].mxu0
    %v336 = vadd.f32 0.0, %v335
    %v337 = vpop.f32.mrb[0].mxu0
    %338 = vmatprep.mubr.f32.mxu0 0.0
    %339 = vmatmul.mubr.f32.gmra.mrb[0].mxu0 %v240
    %v340 = vpop.f32.mrb[0].mxu0
    %v341 = vadd.f32 0.0, %v340
    %v342 = vpop.f32.mrb[0].mxu0
    %343 = vmatprep.mubr.f32.mxu0 0.0
    %344 = vmatmul.mubr.f32.gmra.mrb[0].mxu0 %v242
    %v345 = vpop.f32.mrb[0].mxu0
    %v346 = vadd.f32 0.0, %v345
    %v347 = vpop.f32.mrb[0].mxu0
    %348 = vdwg.mxu0
    %349 = vmatprep.subr.mxu0 0.0
    %350 = vmatpush1.msra.mxu0 %v212
    %351 = vmatprep.subr.mxu0 0.0
    %352 = vmatpush1.msra.mxu0 %v213
    %353 = vmatprep.subr.mxu0 0.0
    %354 = vmatpush1.msra.mxu0 %v214
    %355 = vmatprep.subr.mxu0 0.0
    %356 = vmatpush1.msra.mxu0 %v215
    %357 = vmatprep.subr.mxu0 0.0
    %358 = vmatpush1.msra.mxu0 %v216
    %359 = vmatprep.subr.mxu0 0.0
    %360 = vmatpush1.msra.mxu0 %v217
    %361 = vmatprep.subr.mxu0 0.0
    %362 = vmatpush1.msra.mxu0 %v218
    %363 = vmatprep.subr.mxu0 0.0
    %364 = vmatpush1.msra.mxu0 %v219
    %365 = vmatprep.subr.mxu0 0.0
    %366 = vmatpush1.msra.mxu0 %v220
    %367 = vmatprep.subr.mxu0 0.0
    %368 = vmatpush1.msra.mxu0 %v221
    %369 = vmatprep.subr.mxu0 0.0
    %370 = vmatpush1.msra.mxu0 %v222
    %371 = vmatprep.subr.mxu0 0.0
    %372 = vmatpush1.msra.mxu0 %v223
    %373 = vmatprep.subr.mxu0 0.0
    %374 = vmatpush1.msra.mxu0 %v224
    %375 = vmatprep.subr.mxu0 0.0
    %376 = vmatpush1.msra.mxu0 %v225
    %377 = vmatprep.subr.mxu0 0.0
    %378 = vmatpush1.msra.mxu0 %v226
    %379 = vmatprep.subr.mxu0 0.0
    %380 = vmatpush1.msra.mxu0 %v227
    %381 = vmatprep.subr.mxu0 0.0
    %382 = vmatpush1.msra.mxu0 0.0
    %383 = vmatprep.subr.mxu0 0.0
    %384 = vmatpush1.msra.mxu0 0.0
    %385 = vmatprep.subr.mxu0 0.0
    %386 = vmatpush1.msra.mxu0 0.0
    %387 = vmatprep.subr.mxu0 0.0
    %388 = vmatpush1.msra.mxu0 0.0
    %389 = vmatprep.subr.mxu0 0.0
    %390 = vmatpush1.msra.mxu0 0.0
    %391 = vmatprep.subr.mxu0 0.0
    %392 = vmatpush1.msra.mxu0 0.0
    %393 = vmatprep.subr.mxu0 0.0
    %394 = vmatpush1.msra.mxu0 0.0
    %395 = vmatprep.subr.mxu0 0.0
    %396 = vmatpush1.msra.mxu0 0.0
    %397 = vmatprep.subr.mxu0 0.0
    %398 = vmatpush1.msra.mxu0 0.0
    %399 = vmatprep.subr.mxu0 0.0
    %400 = vmatpush1.msra.mxu0 0.0
    %401 = vmatprep.subr.mxu0 0.0
    %402 = vmatpush1.msra.mxu0 0.0
    %403 = vmatprep.subr.mxu0 0.0
    %404 = vmatpush1.msra.mxu0 0.0
    %405 = vmatprep.subr.mxu0 0.0
    %406 = vmatpush1.msra.mxu0 0.0
    %407 = vmatprep.subr.mxu0 0.0
    %408 = vmatpush1.msra.mxu0 0.0
    %409 = vmatprep.subr.mxu0 0.0
    %410 = vmatpush1.msra.mxu0 0.0
    %411 = vmatprep.subr.mxu0 0.0
    %412 = vmatpush1.msra.mxu0 0.0
    %413 = vmatprep.mubr.f32.mxu0 0.0
    %414 = vmatmul.mubr.f32.gmra.mrb[0].mxu0 %v208
    %v415 = vpop.f32.mrb[0].mxu0
    %v416 = vadd.f32 %v331, %v415
    %v417 = vpop.f32.mrb[0].mxu0
    %418 = vmatprep.mubr.f32.mxu0 0.0
    %419 = vmatmul.mubr.f32.gmra.mrb[0].mxu0 %v198
    %v420 = vpop.f32.mrb[0].mxu0
    %v421 = vadd.f32 %v336, %v420
    %v422 = vpop.f32.mrb[0].mxu0
    %423 = vmatprep.mubr.f32.mxu0 0.0
    %424 = vmatmul.mubr.f32.gmra.mrb[0].mxu0 %v209
    %v425 = vpop.f32.mrb[0].mxu0
    %v426 = vadd.f32 %v341, %v425
    %v427 = vpop.f32.mrb[0].mxu0
    %428 = vmatprep.mubr.f32.mxu0 0.0
    %429 = vmatmul.mubr.f32.gmra.mrb[0].mxu0 %v201
    %v430 = vpop.f32.mrb[0].mxu0
    %v431 = vadd.f32 %v346, %v430
    %v432 = vpop.f32.mrb[0].mxu0
    %433 = vdwg.mxu0
    %vm434 = vcmask 1045504
    %v435 = vrot.slane %v208, 2
    %v436 = vrot.slane %v198, 2
    %v437 = vsel %vm434, %v435, %v436
    %v438 = vrot.slane %v210, 2
    %v439 = vsel %vm434, %v436, %v438
    %v440 = vrot.slane %v209, 2
    %v441 = vrot.slane %v201, 2
    %v442 = vsel %vm434, %v440, %v441
    %v443 = vrot.slane %v211, 2
    %v444 = vsel %vm434, %v441, %v443
    %s449 = scalar_lea.vmem %s3, 256
    %v450 = vld [vmem:[%s449] sm:$0xff]
    %v451 = vld [vmem:[%s449 + $0x8] sm:$0xff]
    %v452 = vld [vmem:[%s449 + $0x10] sm:$0xff]
    %v453 = vld [vmem:[%s449 + $0x18] sm:$0xff]
    %v454 = vld [vmem:[%s449 + $0x20] sm:$0xff]
    %v455 = vld [vmem:[%s449 + $0x28] sm:$0xff]
    %v456 = vld [vmem:[%s449 + $0x30] sm:$0xff]
    %v457 = vld [vmem:[%s449 + $0x38] sm:$0xff]
    %v458 = vld [vmem:[%s449 + $0x40] sm:$0xff]
    %v459 = vld [vmem:[%s449 + $0x48] sm:$0xff]
    %v460 = vld [vmem:[%s449 + $0x50] sm:$0xff]
    %v461 = vld [vmem:[%s449 + $0x58] sm:$0xff]
    %v462 = vld [vmem:[%s449 + $0x60] sm:$0xff]
    %v463 = vld [vmem:[%s449 + $0x68] sm:$0xff]
    %v464 = vld [vmem:[%s449 + $0x70] sm:$0xff]
    %v465 = vld [vmem:[%s449 + $0x78] sm:$0xff]
    %466 = vmatprep.subr.mxu0 0.0
    %467 = vmatpush1.msra.mxu0 %v450
    %468 = vmatprep.subr.mxu0 0.0
    %469 = vmatpush1.msra.mxu0 %v451
    %470 = vmatprep.subr.mxu0 0.0
    %471 = vmatpush1.msra.mxu0 %v452
    %472 = vmatprep.subr.mxu0 0.0
    %473 = vmatpush1.msra.mxu0 %v453
    %474 = vmatprep.subr.mxu0 0.0
    %475 = vmatpush1.msra.mxu0 %v454
    %476 = vmatprep.subr.mxu0 0.0
    %477 = vmatpush1.msra.mxu0 %v455
    %478 = vmatprep.subr.mxu0 0.0
    %479 = vmatpush1.msra.mxu0 %v456
    %480 = vmatprep.subr.mxu0 0.0
    %481 = vmatpush1.msra.mxu0 %v457
    %482 = vmatprep.subr.mxu0 0.0
    %483 = vmatpush1.msra.mxu0 %v458
    %484 = vmatprep.subr.mxu0 0.0
    %485 = vmatpush1.msra.mxu0 %v459
    %486 = vmatprep.subr.mxu0 0.0
    %487 = vmatpush1.msra.mxu0 %v460
    %488 = vmatprep.subr.mxu0 0.0
    %489 = vmatpush1.msra.mxu0 %v461
    %490 = vmatprep.subr.mxu0 0.0
    %491 = vmatpush1.msra.mxu0 %v462
    %492 = vmatprep.subr.mxu0 0.0
    %493 = vmatpush1.msra.mxu0 %v463
    %494 = vmatprep.subr.mxu0 0.0
    %495 = vmatpush1.msra.mxu0 %v464
    %496 = vmatprep.subr.mxu0 0.0
    %497 = vmatpush1.msra.mxu0 %v465
    %498 = vmatprep.subr.mxu0 0.0
    %499 = vmatpush1.msra.mxu0 0.0
    %500 = vmatprep.subr.mxu0 0.0
    %501 = vmatpush1.msra.mxu0 0.0
    %502 = vmatprep.subr.mxu0 0.0
    %503 = vmatpush1.msra.mxu0 0.0
    %504 = vmatprep.subr.mxu0 0.0
    %505 = vmatpush1.msra.mxu0 0.0
    %506 = vmatprep.subr.mxu0 0.0
    %507 = vmatpush1.msra.mxu0 0.0
    %508 = vmatprep.subr.mxu0 0.0
    %509 = vmatpush1.msra.mxu0 0.0
    %510 = vmatprep.subr.mxu0 0.0
    %511 = vmatpush1.msra.mxu0 0.0
    %512 = vmatprep.subr.mxu0 0.0
    %513 = vmatpush1.msra.mxu0 0.0
    %514 = vmatprep.subr.mxu0 0.0
    %515 = vmatpush1.msra.mxu0 0.0
    %516 = vmatprep.subr.mxu0 0.0
    %517 = vmatpush1.msra.mxu0 0.0
    %518 = vmatprep.subr.mxu0 0.0
    %519 = vmatpush1.msra.mxu0 0.0
    %520 = vmatprep.subr.mxu0 0.0
    %521 = vmatpush1.msra.mxu0 0.0
    %522 = vmatprep.subr.mxu0 0.0
    %523 = vmatpush1.msra.mxu0 0.0
    %524 = vmatprep.subr.mxu0 0.0
    %525 = vmatpush1.msra.mxu0 0.0
    %526 = vmatprep.subr.mxu0 0.0
    %527 = vmatpush1.msra.mxu0 0.0
    %528 = vmatprep.subr.mxu0 0.0
    %529 = vmatpush1.msra.mxu0 0.0
    %530 = vmatprep.mubr.f32.mxu0 0.0
    %531 = vmatmul.mubr.f32.gmra.mrb[0].mxu0 %v437
    %v532 = vpop.f32.mrb[0].mxu0
    %v533 = vadd.f32 0.0, %v532
    %v534 = vpop.f32.mrb[0].mxu0
    %535 = vmatprep.mubr.f32.mxu0 0.0
    %536 = vmatmul.mubr.f32.gmra.mrb[0].mxu0 %v439
    %v537 = vpop.f32.mrb[0].mxu0
    %v538 = vadd.f32 0.0, %v537
    %v539 = vpop.f32.mrb[0].mxu0
    %540 = vmatprep.mubr.f32.mxu0 0.0
    %541 = vmatmul.mubr.f32.gmra.mrb[0].mxu0 %v442
    %v542 = vpop.f32.mrb[0].mxu0
    %v543 = vadd.f32 0.0, %v542
    %v544 = vpop.f32.mrb[0].mxu0
    %545 = vmatprep.mubr.f32.mxu0 0.0
    %546 = vmatmul.mubr.f32.gmra.mrb[0].mxu0 %v444
    %v547 = vpop.f32.mrb[0].mxu0
    %v548 = vadd.f32 0.0, %v547
    %v549 = vpop.f32.mrb[0].mxu0
    %550 = vdwg.mxu0
    %v551 = vadd.f32 %v416, %v533
    %v552 = vadd.f32 %v421, %v538
    %v553 = vadd.f32 %v426, %v543
    %v554 = vadd.f32 %v431, %v548
    %v555 = vld [vmem:[%s4] sm:$0x1]
    %v557 = vlaneseq
    %v558 = vshrl.u32 %v557, 7
    %v559 = vsub.s32 0, %v558
    %v560 = vrot.slane %v555, %v559
    %v562 = vadd.f32 %v551, %v560
    %v563 = vadd.f32 %v552, %v560
    %v564 = vadd.f32 %v553, %v560
    %v565 = vadd.f32 %v554, %v560
    %v566 = vtanh.pop %v562
    %v567 = vtanh.pop %v563
    %v568 = vtanh.pop %v564
    %v569 = vtanh.pop %v565
    %vm574 = vcmask 1041408
    %v575 = vrot.slane %v566, 6
    %v576 = vrot.slane %v567, 6
    %v577 = vsel %vm574, %v575, %v576
    %v578 = vrot.slane %v568, 6
    %v579 = vrot.slane %v569, 6
    %v580 = vsel %vm574, %v578, %v579
    %v587 = vsel %vm574, 0.0, %v575
    %v588 = vsel %vm574, 0.0, %v578
    %v589 = vsel %vm574, %v576, 0.0
    %v590 = vsel %vm574, %v579, 0.0
    %v591 = vld [vmem:[#allocation2] sm:$0xff]
    %v592 = vld [vmem:[#allocation2 + $0x8] sm:$0xff]
    %v593 = vld [vmem:[#allocation2 + $0x10] sm:$0xff]
    %v594 = vld [vmem:[#allocation2 + $0x18] sm:$0xff]
    %v595 = vld [vmem:[#allocation2 + $0x20] sm:$0xff]
    %v596 = vld [vmem:[#allocation2 + $0x28] sm:$0xff]
    %v597 = vld [vmem:[#allocation2 + $0x30] sm:$0xff]
    %v598 = vld [vmem:[#allocation2 + $0x38] sm:$0xff]
    %v599 = vld [vmem:[#allocation2 + $0x40] sm:$0xff]
    %v600 = vld [vmem:[#allocation2 + $0x48] sm:$0xff]
    %v601 = vld [vmem:[#allocation2 + $0x50] sm:$0xff]
    %v602 = vld [vmem:[#allocation2 + $0x58] sm:$0xff]
    %v603 = vld [vmem:[#allocation2 + $0x60] sm:$0xff]
    %v604 = vld [vmem:[#allocation2 + $0x68] sm:$0xff]
    %v605 = vld [vmem:[#allocation2 + $0x70] sm:$0xff]
    %v606 = vld [vmem:[#allocation2 + $0x78] sm:$0xff]
    %v607 = vld [vmem:[#allocation2 + $0x80] sm:$0xff]
    %v608 = vld [vmem:[#allocation2 + $0x88] sm:$0xff]
    %v609 = vld [vmem:[#allocation2 + $0x90] sm:$0xff]
    %v610 = vld [vmem:[#allocation2 + $0x98] sm:$0xff]
    %v611 = vld [vmem:[#allocation2 + $0xa0] sm:$0xff]
    %v612 = vld [vmem:[#allocation2 + $0xa8] sm:$0xff]
    %v613 = vld [vmem:[#allocation2 + $0xb0] sm:$0xff]
    %v614 = vld [vmem:[#allocation2 + $0xb8] sm:$0xff]
    %v615 = vld [vmem:[#allocation2 + $0xc0] sm:$0xff]
    %v616 = vld [vmem:[#allocation2 + $0xc8] sm:$0xff]
    %v617 = vld [vmem:[#allocation2 + $0xd0] sm:$0xff]
    %v618 = vld [vmem:[#allocation2 + $0xd8] sm:$0xff]
    %v619 = vld [vmem:[#allocation2 + $0xe0] sm:$0xff]
    %v620 = vld [vmem:[#allocation2 + $0xe8] sm:$0xff]
    %v621 = vld [vmem:[#allocation2 + $0xf0] sm:$0xff]
    %v622 = vld [vmem:[#allocation2 + $0xf8] sm:$0xff]
    %v623 = vld [vmem:[#allocation2 + $0x100] sm:$0xff]
    %v624 = vld [vmem:[#allocation2 + $0x108] sm:$0xff]
    %v625 = vld [vmem:[#allocation2 + $0x110] sm:$0xff]
    %v626 = vld [vmem:[#allocation2 + $0x118] sm:$0xff]
    %v627 = vld [vmem:[#allocation2 + $0x120] sm:$0xff]
    %v628 = vld [vmem:[#allocation2 + $0x128] sm:$0xff]
    %v629 = vld [vmem:[#allocation2 + $0x130] sm:$0xff]
    %v630 = vld [vmem:[#allocation2 + $0x138] sm:$0xff]
    %v631 = vld [vmem:[#allocation2 + $0x140] sm:$0xff]
    %v632 = vld [vmem:[#allocation2 + $0x148] sm:$0xff]
    %v633 = vld [vmem:[#allocation2 + $0x150] sm:$0xff]
    %v634 = vld [vmem:[#allocation2 + $0x158] sm:$0xff]
    %v635 = vld [vmem:[#allocation2 + $0x160] sm:$0xff]
    %v636 = vld [vmem:[#allocation2 + $0x168] sm:$0xff]
    %v637 = vld [vmem:[#allocation2 + $0x170] sm:$0xff]
    %v638 = vld [vmem:[#allocation2 + $0x178] sm:$0xff]
    %v643 = vrot.slane %v587, 1
    %v644 = vrot.slane %v577, 1
    %v645 = vsel %vm232, %v643, %v644
    %v646 = vrot.slane %v589, 1
    %v647 = vsel %vm232, %v644, %v646
    %v648 = vrot.slane %v588, 1
    %v649 = vrot.slane %v580, 1
    %v650 = vsel %vm232, %v648, %v649
    %v651 = vrot.slane %v590, 1
    %v652 = vsel %vm232, %v649, %v651
    %s657 = scalar_lea.vmem [#allocation2], 384
    %v658 = vld [vmem:[%s657] sm:$0xff]
    %v659 = vld [vmem:[%s657 + $0x8] sm:$0xff]
    %v660 = vld [vmem:[%s657 + $0x10] sm:$0xff]
    %v661 = vld [vmem:[%s657 + $0x18] sm:$0xff]
    %v662 = vld [vmem:[%s657 + $0x20] sm:$0xff]
    %v663 = vld [vmem:[%s657 + $0x28] sm:$0xff]
    %v664 = vld [vmem:[%s657 + $0x30] sm:$0xff]
    %v665 = vld [vmem:[%s657 + $0x38] sm:$0xff]
    %v666 = vld [vmem:[%s657 + $0x40] sm:$0xff]
    %v667 = vld [vmem:[%s657 + $0x48] sm:$0xff]
    %v668 = vld [vmem:[%s657 + $0x50] sm:$0xff]
    %v669 = vld [vmem:[%s657 + $0x58] sm:$0xff]
    %v670 = vld [vmem:[%s657 + $0x60] sm:$0xff]
    %v671 = vld [vmem:[%s657 + $0x68] sm:$0xff]
    %v672 = vld [vmem:[%s657 + $0x70] sm:$0xff]
    %v673 = vld [vmem:[%s657 + $0x78] sm:$0xff]
    %v674 = vld [vmem:[%s657 + $0x80] sm:$0xff]
    %v675 = vld [vmem:[%s657 + $0x88] sm:$0xff]
    %v676 = vld [vmem:[%s657 + $0x90] sm:$0xff]
    %v677 = vld [vmem:[%s657 + $0x98] sm:$0xff]
    %v678 = vld [vmem:[%s657 + $0xa0] sm:$0xff]
    %v679 = vld [vmem:[%s657 + $0xa8] sm:$0xff]
    %v680 = vld [vmem:[%s657 + $0xb0] sm:$0xff]
    %v681 = vld [vmem:[%s657 + $0xb8] sm:$0xff]
    %v682 = vld [vmem:[%s657 + $0xc0] sm:$0xff]
    %v683 = vld [vmem:[%s657 + $0xc8] sm:$0xff]
    %v684 = vld [vmem:[%s657 + $0xd0] sm:$0xff]
    %v685 = vld [vmem:[%s657 + $0xd8] sm:$0xff]
    %v686 = vld [vmem:[%s657 + $0xe0] sm:$0xff]
    %v687 = vld [vmem:[%s657 + $0xe8] sm:$0xff]
    %v688 = vld [vmem:[%s657 + $0xf0] sm:$0xff]
    %v689 = vld [vmem:[%s657 + $0xf8] sm:$0xff]
    %v690 = vld [vmem:[%s657 + $0x100] sm:$0xff]
    %v691 = vld [vmem:[%s657 + $0x108] sm:$0xff]
    %v692 = vld [vmem:[%s657 + $0x110] sm:$0xff]
    %v693 = vld [vmem:[%s657 + $0x118] sm:$0xff]
    %v694 = vld [vmem:[%s657 + $0x120] sm:$0xff]
    %v695 = vld [vmem:[%s657 + $0x128] sm:$0xff]
    %v696 = vld [vmem:[%s657 + $0x130] sm:$0xff]
    %v697 = vld [vmem:[%s657 + $0x138] sm:$0xff]
    %v698 = vld [vmem:[%s657 + $0x140] sm:$0xff]
    %v699 = vld [vmem:[%s657 + $0x148] sm:$0xff]
    %v700 = vld [vmem:[%s657 + $0x150] sm:$0xff]
    %v701 = vld [vmem:[%s657 + $0x158] sm:$0xff]
    %v702 = vld [vmem:[%s657 + $0x160] sm:$0xff]
    %v703 = vld [vmem:[%s657 + $0x168] sm:$0xff]
    %v704 = vld [vmem:[%s657 + $0x170] sm:$0xff]
    %v705 = vld [vmem:[%s657 + $0x178] sm:$0xff]
    %706 = vmatprep.subr.mxu0 %v659
    %707 = vmatpush1.msra.mxu0 %v658
    %708 = vmatprep.subr.mxu0 %v662
    %709 = vmatpush1.msra.mxu0 %v661
    %710 = vmatprep.subr.mxu0 %v665
    %711 = vmatpush1.msra.mxu0 %v664
    %712 = vmatprep.subr.mxu0 %v668
    %713 = vmatpush1.msra.mxu0 %v667
    %714 = vmatprep.subr.mxu0 %v671
    %715 = vmatpush1.msra.mxu0 %v670
    %716 = vmatprep.subr.mxu0 %v674
    %717 = vmatpush1.msra.mxu0 %v673
    %718 = vmatprep.subr.mxu0 %v677
    %719 = vmatpush1.msra.mxu0 %v676
    %720 = vmatprep.subr.mxu0 %v680
    %721 = vmatpush1.msra.mxu0 %v679
    %722 = vmatprep.subr.mxu0 %v683
    %723 = vmatpush1.msra.mxu0 %v682
    %724 = vmatprep.subr.mxu0 %v686
    %725 = vmatpush1.msra.mxu0 %v685
    %726 = vmatprep.subr.mxu0 %v689
    %727 = vmatpush1.msra.mxu0 %v688
    %728 = vmatprep.subr.mxu0 %v692
    %729 = vmatpush1.msra.mxu0 %v691
    %730 = vmatprep.subr.mxu0 %v695
    %731 = vmatpush1.msra.mxu0 %v694
    %732 = vmatprep.subr.mxu0 %v698
    %733 = vmatpush1.msra.mxu0 %v697
    %734 = vmatprep.subr.mxu0 %v701
    %735 = vmatpush1.msra.mxu0 %v700
    %736 = vmatprep.subr.mxu0 %v704
    %737 = vmatpush1.msra.mxu0 %v703
    %738 = vmatprep.subr.mxu0 0.0
    %739 = vmatpush1.msra.mxu0 0.0
    %740 = vmatprep.subr.mxu0 0.0
    %741 = vmatpush1.msra.mxu0 0.0
    %742 = vmatprep.subr.mxu0 0.0
    %743 = vmatpush1.msra.mxu0 0.0
    %744 = vmatprep.subr.mxu0 0.0
    %745 = vmatpush1.msra.mxu0 0.0
    %746 = vmatprep.subr.mxu0 0.0
    %747 = vmatpush1.msra.mxu0 0.0
    %748 = vmatprep.subr.mxu0 0.0
    %749 = vmatpush1.msra.mxu0 0.0
    %750 = vmatprep.subr.mxu0 0.0
    %751 = vmatpush1.msra.mxu0 0.0
    %752 = vmatprep.subr.mxu0 0.0
    %753 = vmatpush1.msra.mxu0 0.0
    %754 = vmatprep.subr.mxu0 0.0
    %755 = vmatpush1.msra.mxu0 0.0
    %756 = vmatprep.subr.mxu0 0.0
    %757 = vmatpush1.msra.mxu0 0.0
    %758 = vmatprep.subr.mxu0 0.0
    %759 = vmatpush1.msra.mxu0 0.0
    %760 = vmatprep.subr.mxu0 0.0
    %761 = vmatpush1.msra.mxu0 0.0
    %762 = vmatprep.subr.mxu0 0.0
    %763 = vmatpush1.msra.mxu0 0.0
    %764 = vmatprep.subr.mxu0 0.0
    %765 = vmatpush1.msra.mxu0 0.0
    %766 = vmatprep.subr.mxu0 0.0
    %767 = vmatpush1.msra.mxu0 0.0
    %768 = vmatprep.subr.mxu0 0.0
    %769 = vmatpush1.msra.mxu0 0.0
    %770 = vmatprep.mubr.f32.mxu0 0.0
    %771 = vmatmul.mubr.f32.gmra.mrb[0].mxu0 %v645
    %v772 = vpop.f32.mrb[0].mxu0
    %v773 = vadd.f32 0.0, %v772
    %v774 = vpop.f32.mrb[0].mxu0
    %v775 = vadd.f32 0.0, %v774
    %776 = vmatprep.mubr.f32.mxu0 0.0
    %777 = vmatmul.mubr.f32.gmra.mrb[0].mxu0 %v647
    %v778 = vpop.f32.mrb[0].mxu0
    %v779 = vadd.f32 0.0, %v778
    %v780 = vpop.f32.mrb[0].mxu0
    %v781 = vadd.f32 0.0, %v780
    %782 = vmatprep.mubr.f32.mxu0 0.0
    %783 = vmatmul.mubr.f32.gmra.mrb[0].mxu0 %v650
    %v784 = vpop.f32.mrb[0].mxu0
    %v785 = vadd.f32 0.0, %v784
    %v786 = vpop.f32.mrb[0].mxu0
    %v787 = vadd.f32 0.0, %v786
    %788 = vmatprep.mubr.f32.mxu0 0.0
    %789 = vmatmul.mubr.f32.gmra.mrb[0].mxu0 %v652
    %v790 = vpop.f32.mrb[0].mxu0
    %v791 = vadd.f32 0.0, %v790
    %v792 = vpop.f32.mrb[0].mxu0
    %v793 = vadd.f32 0.0, %v792
    %794 = vdwg.mxu0
    %795 = vmatprep.subr.mxu0 0.0
    %796 = vmatpush1.msra.mxu0 %v660
    %797 = vmatprep.subr.mxu0 0.0
    %798 = vmatpush1.msra.mxu0 %v663
    %799 = vmatprep.subr.mxu0 0.0
    %800 = vmatpush1.msra.mxu0 %v666
    %801 = vmatprep.subr.mxu0 0.0
    %802 = vmatpush1.msra.mxu0 %v669
    %803 = vmatprep.subr.mxu0 0.0
    %804 = vmatpush1.msra.mxu0 %v672
    %805 = vmatprep.subr.mxu0 0.0
    %806 = vmatpush1.msra.mxu0 %v675
    %807 = vmatprep.subr.mxu0 0.0
    %808 = vmatpush1.msra.mxu0 %v678
    %809 = vmatprep.subr.mxu0 0.0
    %810 = vmatpush1.msra.mxu0 %v681
    %811 = vmatprep.subr.mxu0 0.0
    %812 = vmatpush1.msra.mxu0 %v684
    %813 = vmatprep.subr.mxu0 0.0
    %814 = vmatpush1.msra.mxu0 %v687
    %815 = vmatprep.subr.mxu0 0.0
    %816 = vmatpush1.msra.mxu0 %v690
    %817 = vmatprep.subr.mxu0 0.0
    %818 = vmatpush1.msra.mxu0 %v693
    %819 = vmatprep.subr.mxu0 0.0
    %820 = vmatpush1.msra.mxu0 %v696
    %821 = vmatprep.subr.mxu0 0.0
    %822 = vmatpush1.msra.mxu0 %v699
    %823 = vmatprep.subr.mxu0 0.0
    %824 = vmatpush1.msra.mxu0 %v702
    %825 = vmatprep.subr.mxu0 0.0
    %826 = vmatpush1.msra.mxu0 %v705
    %827 = vmatprep.subr.mxu0 0.0
    %828 = vmatpush1.msra.mxu0 0.0
    %829 = vmatprep.subr.mxu0 0.0
    %830 = vmatpush1.msra.mxu0 0.0
    %831 = vmatprep.subr.mxu0 0.0
    %832 = vmatpush1.msra.mxu0 0.0
    %833 = vmatprep.subr.mxu0 0.0
    %834 = vmatpush1.msra.mxu0 0.0
    %835 = vmatprep.subr.mxu0 0.0
    %836 = vmatpush1.msra.mxu0 0.0
    %837 = vmatprep.subr.mxu0 0.0
    %838 = vmatpush1.msra.mxu0 0.0
    %839 = vmatprep.subr.mxu0 0.0
    %840 = vmatpush1.msra.mxu0 0.0
    %841 = vmatprep.subr.mxu0 0.0
    %842 = vmatpush1.msra.mxu0 0.0
    %843 = vmatprep.subr.mxu0 0.0
    %844 = vmatpush1.msra.mxu0 0.0
    %845 = vmatprep.subr.mxu0 0.0
    %846 = vmatpush1.msra.mxu0 0.0
    %847 = vmatprep.subr.mxu0 0.0
    %848 = vmatpush1.msra.mxu0 0.0
    %849 = vmatprep.subr.mxu0 0.0
    %850 = vmatpush1.msra.mxu0 0.0
    %851 = vmatprep.subr.mxu0 0.0
    %852 = vmatpush1.msra.mxu0 0.0
    %853 = vmatprep.subr.mxu0 0.0
    %854 = vmatpush1.msra.mxu0 0.0
    %855 = vmatprep.subr.mxu0 0.0
    %856 = vmatpush1.msra.mxu0 0.0
    %857 = vmatprep.subr.mxu0 0.0
    %858 = vmatpush1.msra.mxu0 0.0
    %859 = vmatprep.mubr.f32.mxu0 0.0
    %860 = vmatmul.mubr.f32.gmra.mrb[0].mxu0 %v645
    %v861 = vpop.f32.mrb[0].mxu0
    %v862 = vadd.f32 0.0, %v861
    %v863 = vpop.f32.mrb[0].mxu0
    %864 = vmatprep.mubr.f32.mxu0 0.0
    %865 = vmatmul.mubr.f32.gmra.mrb[0].mxu0 %v647
    %v866 = vpop.f32.mrb[0].mxu0
    %v867 = vadd.f32 0.0, %v866
    %v868 = vpop.f32.mrb[0].mxu0
    %869 = vmatprep.mubr.f32.mxu0 0.0
    %870 = vmatmul.mubr.f32.gmra.mrb[0].mxu0 %v650
    %v871 = vpop.f32.mrb[0].mxu0
    %v872 = vadd.f32 0.0, %v871
    %v873 = vpop.f32.mrb[0].mxu0
    %874 = vmatprep.mubr.f32.mxu0 0.0
    %875 = vmatmul.mubr.f32.gmra.mrb[0].mxu0 %v652
    %v876 = vpop.f32.mrb[0].mxu0
    %v877 = vadd.f32 0.0, %v876
    %v878 = vpop.f32.mrb[0].mxu0
    %879 = vdwg.mxu0
    %880 = vmatprep.subr.mxu0 %v592
    %881 = vmatpush1.msra.mxu0 %v591
    %882 = vmatprep.subr.mxu0 %v595
    %883 = vmatpush1.msra.mxu0 %v594
    %884 = vmatprep.subr.mxu0 %v598
    %885 = vmatpush1.msra.mxu0 %v597
    %886 = vmatprep.subr.mxu0 %v601
    %887 = vmatpush1.msra.mxu0 %v600
    %888 = vmatprep.subr.mxu0 %v604
    %889 = vmatpush1.msra.mxu0 %v603
    %890 = vmatprep.subr.mxu0 %v607
    %891 = vmatpush1.msra.mxu0 %v606
    %892 = vmatprep.subr.mxu0 %v610
    %893 = vmatpush1.msra.mxu0 %v609
    %894 = vmatprep.subr.mxu0 %v613
    %895 = vmatpush1.msra.mxu0 %v612
    %896 = vmatprep.subr.mxu0 %v616
    %897 = vmatpush1.msra.mxu0 %v615
    %898 = vmatprep.subr.mxu0 %v619
    %899 = vmatpush1.msra.mxu0 %v618
    %900 = vmatprep.subr.mxu0 %v622
    %901 = vmatpush1.msra.mxu0 %v621
    %902 = vmatprep.subr.mxu0 %v625
    %903 = vmatpush1.msra.mxu0 %v624
    %904 = vmatprep.subr.mxu0 %v628
    %905 = vmatpush1.msra.mxu0 %v627
    %906 = vmatprep.subr.mxu0 %v631
    %907 = vmatpush1.msra.mxu0 %v630
    %908 = vmatprep.subr.mxu0 %v634
    %909 = vmatpush1.msra.mxu0 %v633
    %910 = vmatprep.subr.mxu0 %v637
    %911 = vmatpush1.msra.mxu0 %v636
    %912 = vmatprep.subr.mxu0 0.0
    %913 = vmatpush1.msra.mxu0 0.0
    %914 = vmatprep.subr.mxu0 0.0
    %915 = vmatpush1.msra.mxu0 0.0
    %916 = vmatprep.subr.mxu0 0.0
    %917 = vmatpush1.msra.mxu0 0.0
    %918 = vmatprep.subr.mxu0 0.0
    %919 = vmatpush1.msra.mxu0 0.0
    %920 = vmatprep.subr.mxu0 0.0
    %921 = vmatpush1.msra.mxu0 0.0
    %922 = vmatprep.subr.mxu0 0.0
    %923 = vmatpush1.msra.mxu0 0.0
    %924 = vmatprep.subr.mxu0 0.0
    %925 = vmatpush1.msra.mxu0 0.0
    %926 = vmatprep.subr.mxu0 0.0
    %927 = vmatpush1.msra.mxu0 0.0
    %928 = vmatprep.subr.mxu0 0.0
    %929 = vmatpush1.msra.mxu0 0.0
    %930 = vmatprep.subr.mxu0 0.0
    %931 = vmatpush1.msra.mxu0 0.0
    %932 = vmatprep.subr.mxu0 0.0
    %933 = vmatpush1.msra.mxu0 0.0
    %934 = vmatprep.subr.mxu0 0.0
    %935 = vmatpush1.msra.mxu0 0.0
    %936 = vmatprep.subr.mxu0 0.0
    %937 = vmatpush1.msra.mxu0 0.0
    %938 = vmatprep.subr.mxu0 0.0
    %939 = vmatpush1.msra.mxu0 0.0
    %940 = vmatprep.subr.mxu0 0.0
    %941 = vmatpush1.msra.mxu0 0.0
    %942 = vmatprep.subr.mxu0 0.0
    %943 = vmatpush1.msra.mxu0 0.0
    %944 = vmatprep.mubr.f32.mxu0 0.0
    %945 = vmatmul.mubr.f32.gmra.mrb[0].mxu0 %v587
    %v946 = vpop.f32.mrb[0].mxu0
    %v947 = vadd.f32 %v773, %v946
    %v948 = vpop.f32.mrb[0].mxu0
    %v949 = vadd.f32 %v775, %v948
    %950 = vmatprep.mubr.f32.mxu0 0.0
    %951 = vmatmul.mubr.f32.gmra.mrb[0].mxu0 %v577
    %v952 = vpop.f32.mrb[0].mxu0
    %v953 = vadd.f32 %v779, %v952
    %v954 = vpop.f32.mrb[0].mxu0
    %v955 = vadd.f32 %v781, %v954
    %956 = vmatprep.mubr.f32.mxu0 0.0
    %957 = vmatmul.mubr.f32.gmra.mrb[0].mxu0 %v588
    %v958 = vpop.f32.mrb[0].mxu0
    %v959 = vadd.f32 %v785, %v958
    %v960 = vpop.f32.mrb[0].mxu0
    %v961 = vadd.f32 %v787, %v960
    %962 = vmatprep.mubr.f32.mxu0 0.0
    %963 = vmatmul.mubr.f32.gmra.mrb[0].mxu0 %v580
    %v964 = vpop.f32.mrb[0].mxu0
    %v965 = vadd.f32 %v791, %v964
    %v966 = vpop.f32.mrb[0].mxu0
    %v967 = vadd.f32 %v793, %v966
    %968 = vdwg.mxu0
    %969 = vmatprep.subr.mxu0 0.0
    %970 = vmatpush1.msra.mxu0 %v593
    %971 = vmatprep.subr.mxu0 0.0
    %972 = vmatpush1.msra.mxu0 %v596
    %973 = vmatprep.subr.mxu0 0.0
    %974 = vmatpush1.msra.mxu0 %v599
    %975 = vmatprep.subr.mxu0 0.0
    %976 = vmatpush1.msra.mxu0 %v602
    %977 = vmatprep.subr.mxu0 0.0
    %978 = vmatpush1.msra.mxu0 %v605
    %979 = vmatprep.subr.mxu0 0.0
    %980 = vmatpush1.msra.mxu0 %v608
    %981 = vmatprep.subr.mxu0 0.0
    %982 = vmatpush1.msra.mxu0 %v611
    %983 = vmatprep.subr.mxu0 0.0
    %984 = vmatpush1.msra.mxu0 %v614
    %985 = vmatprep.subr.mxu0 0.0
    %986 = vmatpush1.msra.mxu0 %v617
    %987 = vmatprep.subr.mxu0 0.0
    %988 = vmatpush1.msra.mxu0 %v620
    %989 = vmatprep.subr.mxu0 0.0
    %990 = vmatpush1.msra.mxu0 %v623
    %991 = vmatprep.subr.mxu0 0.0
    %992 = vmatpush1.msra.mxu0 %v626
    %993 = vmatprep.subr.mxu0 0.0
    %994 = vmatpush1.msra.mxu0 %v629
    %995 = vmatprep.subr.mxu0 0.0
    %996 = vmatpush1.msra.mxu0 %v632
    %997 = vmatprep.subr.mxu0 0.0
    %998 = vmatpush1.msra.mxu0 %v635
    %999 = vmatprep.subr.mxu0 0.0
    %1000 = vmatpush1.msra.mxu0 %v638
    %1001 = vmatprep.subr.mxu0 0.0
    %1002 = vmatpush1.msra.mxu0 0.0
    %1003 = vmatprep.subr.mxu0 0.0
    %1004 = vmatpush1.msra.mxu0 0.0
    %1005 = vmatprep.subr.mxu0 0.0
    %1006 = vmatpush1.msra.mxu0 0.0
    %1007 = vmatprep.subr.mxu0 0.0
    %1008 = vmatpush1.msra.mxu0 0.0
    %1009 = vmatprep.subr.mxu0 0.0
    %1010 = vmatpush1.msra.mxu0 0.0
    %1011 = vmatprep.subr.mxu0 0.0
    %1012 = vmatpush1.msra.mxu0 0.0
    %1013 = vmatprep.subr.mxu0 0.0
    %1014 = vmatpush1.msra.mxu0 0.0
    %1015 = vmatprep.subr.mxu0 0.0
    %1016 = vmatpush1.msra.mxu0 0.0
    %1017 = vmatprep.subr.mxu0 0.0
    %1018 = vmatpush1.msra.mxu0 0.0
    %1019 = vmatprep.subr.mxu0 0.0
    %1020 = vmatpush1.msra.mxu0 0.0
    %1021 = vmatprep.subr.mxu0 0.0
    %1022 = vmatpush1.msra.mxu0 0.0
    %1023 = vmatprep.subr.mxu0 0.0
    %1024 = vmatpush1.msra.mxu0 0.0
    %1025 = vmatprep.subr.mxu0 0.0
    %1026 = vmatpush1.msra.mxu0 0.0
    %1027 = vmatprep.subr.mxu0 0.0
    %1028 = vmatpush1.msra.mxu0 0.0
    %1029 = vmatprep.subr.mxu0 0.0
    %1030 = vmatpush1.msra.mxu0 0.0
    %1031 = vmatprep.subr.mxu0 0.0
    %1032 = vmatpush1.msra.mxu0 0.0
    %1033 = vmatprep.mubr.f32.mxu0 0.0
    %1034 = vmatmul.mubr.f32.gmra.mrb[0].mxu0 %v587
    %v1035 = vpop.f32.mrb[0].mxu0
    %v1036 = vadd.f32 %v862, %v1035
    %v1037 = vpop.f32.mrb[0].mxu0
    %1038 = vmatprep.mubr.f32.mxu0 0.0
    %1039 = vmatmul.mubr.f32.gmra.mrb[0].mxu0 %v577
    %v1040 = vpop.f32.mrb[0].mxu0
    %v1041 = vadd.f32 %v867, %v1040
    %v1042 = vpop.f32.mrb[0].mxu0
    %1043 = vmatprep.mubr.f32.mxu0 0.0
    %1044 = vmatmul.mubr.f32.gmra.mrb[0].mxu0 %v588
    %v1045 = vpop.f32.mrb[0].mxu0
    %v1046 = vadd.f32 %v872, %v1045
    %v1047 = vpop.f32.mrb[0].mxu0
    %1048 = vmatprep.mubr.f32.mxu0 0.0
    %1049 = vmatmul.mubr.f32.gmra.mrb[0].mxu0 %v580
    %v1050 = vpop.f32.mrb[0].mxu0
    %v1051 = vadd.f32 %v877, %v1050
    %v1052 = vpop.f32.mrb[0].mxu0
    %1053 = vdwg.mxu0
    %v1054 = vrot.slane %v587, 2
    %v1055 = vrot.slane %v577, 2
    %v1056 = vsel %vm434, %v1054, %v1055
    %v1057 = vrot.slane %v589, 2
    %v1058 = vsel %vm434, %v1055, %v1057
    %v1059 = vrot.slane %v588, 2
    %v1060 = vrot.slane %v580, 2
    %v1061 = vsel %vm434, %v1059, %v1060
    %v1062 = vrot.slane %v590, 2
    %v1063 = vsel %vm434, %v1060, %v1062
    %s1068 = scalar_lea.vmem [#allocation2], 768
    %v1069 = vld [vmem:[%s1068] sm:$0xff]
    %v1070 = vld [vmem:[%s1068 + $0x8] sm:$0xff]
    %v1071 = vld [vmem:[%s1068 + $0x10] sm:$0xff]
    %v1072 = vld [vmem:[%s1068 + $0x18] sm:$0xff]
    %v1073 = vld [vmem:[%s1068 + $0x20] sm:$0xff]
    %v1074 = vld [vmem:[%s1068 + $0x28] sm:$0xff]
    %v1075 = vld [vmem:[%s1068 + $0x30] sm:$0xff]
    %v1076 = vld [vmem:[%s1068 + $0x38] sm:$0xff]
    %v1077 = vld [vmem:[%s1068 + $0x40] sm:$0xff]
    %v1078 = vld [vmem:[%s1068 + $0x48] sm:$0xff]
    %v1079 = vld [vmem:[%s1068 + $0x50] sm:$0xff]
    %v1080 = vld [vmem:[%s1068 + $0x58] sm:$0xff]
    %v1081 = vld [vmem:[%s1068 + $0x60] sm:$0xff]
    %v1082 = vld [vmem:[%s1068 + $0x68] sm:$0xff]
    %v1083 = vld [vmem:[%s1068 + $0x70] sm:$0xff]
    %v1084 = vld [vmem:[%s1068 + $0x78] sm:$0xff]
    %v1085 = vld [vmem:[%s1068 + $0x80] sm:$0xff]
    %v1086 = vld [vmem:[%s1068 + $0x88] sm:$0xff]
    %v1087 = vld [vmem:[%s1068 + $0x90] sm:$0xff]
    %v1088 = vld [vmem:[%s1068 + $0x98] sm:$0xff]
    %v1089 = vld [vmem:[%s1068 + $0xa0] sm:$0xff]
    %v1090 = vld [vmem:[%s1068 + $0xa8] sm:$0xff]
    %v1091 = vld [vmem:[%s1068 + $0xb0] sm:$0xff]
    %v1092 = vld [vmem:[%s1068 + $0xb8] sm:$0xff]
    %v1093 = vld [vmem:[%s1068 + $0xc0] sm:$0xff]
    %v1094 = vld [vmem:[%s1068 + $0xc8] sm:$0xff]
    %v1095 = vld [vmem:[%s1068 + $0xd0] sm:$0xff]
    %v1096 = vld [vmem:[%s1068 + $0xd8] sm:$0xff]
    %v1097 = vld [vmem:[%s1068 + $0xe0] sm:$0xff]
    %v1098 = vld [vmem:[%s1068 + $0xe8] sm:$0xff]
    %v1099 = vld [vmem:[%s1068 + $0xf0] sm:$0xff]
    %v1100 = vld [vmem:[%s1068 + $0xf8] sm:$0xff]
    %v1101 = vld [vmem:[%s1068 + $0x100] sm:$0xff]
    %v1102 = vld [vmem:[%s1068 + $0x108] sm:$0xff]
    %v1103 = vld [vmem:[%s1068 + $0x110] sm:$0xff]
    %v1104 = vld [vmem:[%s1068 + $0x118] sm:$0xff]
    %v1105 = vld [vmem:[%s1068 + $0x120] sm:$0xff]
    %v1106 = vld [vmem:[%s1068 + $0x128] sm:$0xff]
    %v1107 = vld [vmem:[%s1068 + $0x130] sm:$0xff]
    %v1108 = vld [vmem:[%s1068 + $0x138] sm:$0xff]
    %v1109 = vld [vmem:[%s1068 + $0x140] sm:$0xff]
    %v1110 = vld [vmem:[%s1068 + $0x148] sm:$0xff]
    %v1111 = vld [vmem:[%s1068 + $0x150] sm:$0xff]
    %v1112 = vld [vmem:[%s1068 + $0x158] sm:$0xff]
    %v1113 = vld [vmem:[%s1068 + $0x160] sm:$0xff]
    %v1114 = vld [vmem:[%s1068 + $0x168] sm:$0xff]
    %v1115 = vld [vmem:[%s1068 + $0x170] sm:$0xff]
    %v1116 = vld [vmem:[%s1068 + $0x178] sm:$0xff]
    %1117 = vmatprep.subr.mxu0 %v1070
    %1118 = vmatpush1.msra.mxu0 %v1069
    %1119 = vmatprep.subr.mxu0 %v1073
    %1120 = vmatpush1.msra.mxu0 %v1072
    %1121 = vmatprep.subr.mxu0 %v1076
    %1122 = vmatpush1.msra.mxu0 %v1075
    %1123 = vmatprep.subr.mxu0 %v1079
    %1124 = vmatpush1.msra.mxu0 %v1078
    %1125 = vmatprep.subr.mxu0 %v1082
    %1126 = vmatpush1.msra.mxu0 %v1081
    %1127 = vmatprep.subr.mxu0 %v1085
    %1128 = vmatpush1.msra.mxu0 %v1084
    %1129 = vmatprep.subr.mxu0 %v1088
    %1130 = vmatpush1.msra.mxu0 %v1087
    %1131 = vmatprep.subr.mxu0 %v1091
    %1132 = vmatpush1.msra.mxu0 %v1090
    %1133 = vmatprep.subr.mxu0 %v1094
    %1134 = vmatpush1.msra.mxu0 %v1093
    %1135 = vmatprep.subr.mxu0 %v1097
    %1136 = vmatpush1.msra.mxu0 %v1096
    %1137 = vmatprep.subr.mxu0 %v1100
    %1138 = vmatpush1.msra.mxu0 %v1099
    %1139 = vmatprep.subr.mxu0 %v1103
    %1140 = vmatpush1.msra.mxu0 %v1102
    %1141 = vmatprep.subr.mxu0 %v1106
    %1142 = vmatpush1.msra.mxu0 %v1105
    %1143 = vmatprep.subr.mxu0 %v1109
    %1144 = vmatpush1.msra.mxu0 %v1108
    %1145 = vmatprep.subr.mxu0 %v1112
    %1146 = vmatpush1.msra.mxu0 %v1111
    %1147 = vmatprep.subr.mxu0 %v1115
    %1148 = vmatpush1.msra.mxu0 %v1114
    %1149 = vmatprep.subr.mxu0 0.0
    %1150 = vmatpush1.msra.mxu0 0.0
    %1151 = vmatprep.subr.mxu0 0.0
    %1152 = vmatpush1.msra.mxu0 0.0
    %1153 = vmatprep.subr.mxu0 0.0
    %1154 = vmatpush1.msra.mxu0 0.0
    %1155 = vmatprep.subr.mxu0 0.0
    %1156 = vmatpush1.msra.mxu0 0.0
    %1157 = vmatprep.subr.mxu0 0.0
    %1158 = vmatpush1.msra.mxu0 0.0
    %1159 = vmatprep.subr.mxu0 0.0
    %1160 = vmatpush1.msra.mxu0 0.0
    %1161 = vmatprep.subr.mxu0 0.0
    %1162 = vmatpush1.msra.mxu0 0.0
    %1163 = vmatprep.subr.mxu0 0.0
    %1164 = vmatpush1.msra.mxu0 0.0
    %1165 = vmatprep.subr.mxu0 0.0
    %1166 = vmatpush1.msra.mxu0 0.0
    %1167 = vmatprep.subr.mxu0 0.0
    %1168 = vmatpush1.msra.mxu0 0.0
    %1169 = vmatprep.subr.mxu0 0.0
    %1170 = vmatpush1.msra.mxu0 0.0
    %1171 = vmatprep.subr.mxu0 0.0
    %1172 = vmatpush1.msra.mxu0 0.0
    %1173 = vmatprep.subr.mxu0 0.0
    %1174 = vmatpush1.msra.mxu0 0.0
    %1175 = vmatprep.subr.mxu0 0.0
    %1176 = vmatpush1.msra.mxu0 0.0
    %1177 = vmatprep.subr.mxu0 0.0
    %1178 = vmatpush1.msra.mxu0 0.0
    %1179 = vmatprep.subr.mxu0 0.0
    %1180 = vmatpush1.msra.mxu0 0.0
    %1181 = vmatprep.mubr.f32.mxu0 0.0
    %1182 = vmatmul.mubr.f32.gmra.mrb[0].mxu0 %v1056
    %v1183 = vpop.f32.mrb[0].mxu0
    %v1184 = vadd.f32 0.0, %v1183
    %v1185 = vpop.f32.mrb[0].mxu0
    %v1186 = vadd.f32 0.0, %v1185
    %1187 = vmatprep.mubr.f32.mxu0 0.0
    %1188 = vmatmul.mubr.f32.gmra.mrb[0].mxu0 %v1058
    %v1189 = vpop.f32.mrb[0].mxu0
    %v1190 = vadd.f32 0.0, %v1189
    %v1191 = vpop.f32.mrb[0].mxu0
    %v1192 = vadd.f32 0.0, %v1191
    %1193 = vmatprep.mubr.f32.mxu0 0.0
    %1194 = vmatmul.mubr.f32.gmra.mrb[0].mxu0 %v1061
    %v1195 = vpop.f32.mrb[0].mxu0
    %v1196 = vadd.f32 0.0, %v1195
    %v1197 = vpop.f32.mrb[0].mxu0
    %v1198 = vadd.f32 0.0, %v1197
    %1199 = vmatprep.mubr.f32.mxu0 0.0
    %1200 = vmatmul.mubr.f32.gmra.mrb[0].mxu0 %v1063
    %v1201 = vpop.f32.mrb[0].mxu0
    %v1202 = vadd.f32 0.0, %v1201
    %v1203 = vpop.f32.mrb[0].mxu0
    %v1204 = vadd.f32 0.0, %v1203
    %1205 = vdwg.mxu0
    %1206 = vmatprep.subr.mxu0 0.0
    %1207 = vmatpush1.msra.mxu0 %v1071
    %1208 = vmatprep.subr.mxu0 0.0
    %1209 = vmatpush1.msra.mxu0 %v1074
    %1210 = vmatprep.subr.mxu0 0.0
    %1211 = vmatpush1.msra.mxu0 %v1077
    %1212 = vmatprep.subr.mxu0 0.0
    %1213 = vmatpush1.msra.mxu0 %v1080
    %1214 = vmatprep.subr.mxu0 0.0
    %1215 = vmatpush1.msra.mxu0 %v1083
    %1216 = vmatprep.subr.mxu0 0.0
    %1217 = vmatpush1.msra.mxu0 %v1086
    %1218 = vmatprep.subr.mxu0 0.0
    %1219 = vmatpush1.msra.mxu0 %v1089
    %1220 = vmatprep.subr.mxu0 0.0
    %1221 = vmatpush1.msra.mxu0 %v1092
    %1222 = vmatprep.subr.mxu0 0.0
    %1223 = vmatpush1.msra.mxu0 %v1095
    %1224 = vmatprep.subr.mxu0 0.0
    %1225 = vmatpush1.msra.mxu0 %v1098
    %1226 = vmatprep.subr.mxu0 0.0
    %1227 = vmatpush1.msra.mxu0 %v1101
    %1228 = vmatprep.subr.mxu0 0.0
    %1229 = vmatpush1.msra.mxu0 %v1104
    %1230 = vmatprep.subr.mxu0 0.0
    %1231 = vmatpush1.msra.mxu0 %v1107
    %1232 = vmatprep.subr.mxu0 0.0
    %1233 = vmatpush1.msra.mxu0 %v1110
    %1234 = vmatprep.subr.mxu0 0.0
    %1235 = vmatpush1.msra.mxu0 %v1113
    %1236 = vmatprep.subr.mxu0 0.0
    %1237 = vmatpush1.msra.mxu0 %v1116
    %1238 = vmatprep.subr.mxu0 0.0
    %1239 = vmatpush1.msra.mxu0 0.0
    %1240 = vmatprep.subr.mxu0 0.0
    %1241 = vmatpush1.msra.mxu0 0.0
    %1242 = vmatprep.subr.mxu0 0.0
    %1243 = vmatpush1.msra.mxu0 0.0
    %1244 = vmatprep.subr.mxu0 0.0
    %1245 = vmatpush1.msra.mxu0 0.0
    %1246 = vmatprep.subr.mxu0 0.0
    %1247 = vmatpush1.msra.mxu0 0.0
    %1248 = vmatprep.subr.mxu0 0.0
    %1249 = vmatpush1.msra.mxu0 0.0
    %1250 = vmatprep.subr.mxu0 0.0
    %1251 = vmatpush1.msra.mxu0 0.0
    %1252 = vmatprep.subr.mxu0 0.0
    %1253 = vmatpush1.msra.mxu0 0.0
    %1254 = vmatprep.subr.mxu0 0.0
    %1255 = vmatpush1.msra.mxu0 0.0
    %1256 = vmatprep.subr.mxu0 0.0
    %1257 = vmatpush1.msra.mxu0 0.0
    %1258 = vmatprep.subr.mxu0 0.0
    %1259 = vmatpush1.msra.mxu0 0.0
    %1260 = vmatprep.subr.mxu0 0.0
    %1261 = vmatpush1.msra.mxu0 0.0
    %1262 = vmatprep.subr.mxu0 0.0
    %1263 = vmatpush1.msra.mxu0 0.0
    %1264 = vmatprep.subr.mxu0 0.0
    %1265 = vmatpush1.msra.mxu0 0.0
    %1266 = vmatprep.subr.mxu0 0.0
    %1267 = vmatpush1.msra.mxu0 0.0
    %1268 = vmatprep.subr.mxu0 0.0
    %1269 = vmatpush1.msra.mxu0 0.0
    %1270 = vmatprep.mubr.f32.mxu0 0.0
    %1271 = vmatmul.mubr.f32.gmra.mrb[0].mxu0 %v1056
    %v1272 = vpop.f32.mrb[0].mxu0
    %v1273 = vadd.f32 0.0, %v1272
    %v1274 = vpop.f32.mrb[0].mxu0
    %1275 = vmatprep.mubr.f32.mxu0 0.0
    %1276 = vmatmul.mubr.f32.gmra.mrb[0].mxu0 %v1058
    %v1277 = vpop.f32.mrb[0].mxu0
    %v1278 = vadd.f32 0.0, %v1277
    %v1279 = vpop.f32.mrb[0].mxu0
    %1280 = vmatprep.mubr.f32.mxu0 0.0
    %1281 = vmatmul.mubr.f32.gmra.mrb[0].mxu0 %v1061
    %v1282 = vpop.f32.mrb[0].mxu0
    %v1283 = vadd.f32 0.0, %v1282
    %v1284 = vpop.f32.mrb[0].mxu0
    %1285 = vmatprep.mubr.f32.mxu0 0.0
    %1286 = vmatmul.mubr.f32.gmra.mrb[0].mxu0 %v1063
    %v1287 = vpop.f32.mrb[0].mxu0
    %v1288 = vadd.f32 0.0, %v1287
    %v1289 = vpop.f32.mrb[0].mxu0
    %1290 = vdwg.mxu0
    %v1291 = vadd.f32 %v947, %v1184
    %v1292 = vadd.f32 %v949, %v1186
    %v1293 = vadd.f32 %v1036, %v1273
    %v1294 = vadd.f32 %v953, %v1190
    %v1295 = vadd.f32 %v955, %v1192
    %v1296 = vadd.f32 %v1041, %v1278
    %v1297 = vadd.f32 %v959, %v1196
    %v1298 = vadd.f32 %v961, %v1198
    %v1299 = vadd.f32 %v1046, %v1283
    %v1300 = vadd.f32 %v965, %v1202
    %v1301 = vadd.f32 %v967, %v1204
    %v1302 = vadd.f32 %v1051, %v1288
    %vm1303 = vcmask 1044480
    %v1304 = vrot.slane %v587, 3
    %v1305 = vrot.slane %v577, 3
    %v1306 = vsel %vm1303, %v1304, %v1305
    %v1307 = vrot.slane %v589, 3
    %v1308 = vsel %vm1303, %v1305, %v1307
    %v1309 = vrot.slane %v588, 3
    %v1310 = vrot.slane %v580, 3
    %v1311 = vsel %vm1303, %v1309, %v1310
    %v1312 = vrot.slane %v590, 3
    %v1313 = vsel %vm1303, %v1310, %v1312
    %s1318 = scalar_lea.vmem [#allocation2], 1152
    %v1319 = vld [vmem:[%s1318] sm:$0xff]
    %v1320 = vld [vmem:[%s1318 + $0x8] sm:$0xff]
    %v1321 = vld [vmem:[%s1318 + $0x10] sm:$0xff]
    %v1322 = vld [vmem:[%s1318 + $0x18] sm:$0xff]
    %v1323 = vld [vmem:[%s1318 + $0x20] sm:$0xff]
    %v1324 = vld [vmem:[%s1318 + $0x28] sm:$0xff]
    %v1325 = vld [vmem:[%s1318 + $0x30] sm:$0xff]
    %v1326 = vld [vmem:[%s1318 + $0x38] sm:$0xff]
    %v1327 = vld [vmem:[%s1318 + $0x40] sm:$0xff]
    %v1328 = vld [vmem:[%s1318 + $0x48] sm:$0xff]
    %v1329 = vld [vmem:[%s1318 + $0x50] sm:$0xff]
    %v1330 = vld [vmem:[%s1318 + $0x58] sm:$0xff]
    %v1331 = vld [vmem:[%s1318 + $0x60] sm:$0xff]
    %v1332 = vld [vmem:[%s1318 + $0x68] sm:$0xff]
    %v1333 = vld [vmem:[%s1318 + $0x70] sm:$0xff]
    %v1334 = vld [vmem:[%s1318 + $0x78] sm:$0xff]
    %v1335 = vld [vmem:[%s1318 + $0x80] sm:$0xff]
    %v1336 = vld [vmem:[%s1318 + $0x88] sm:$0xff]
    %v1337 = vld [vmem:[%s1318 + $0x90] sm:$0xff]
    %v1338 = vld [vmem:[%s1318 + $0x98] sm:$0xff]
    %v1339 = vld [vmem:[%s1318 + $0xa0] sm:$0xff]
    %v1340 = vld [vmem:[%s1318 + $0xa8] sm:$0xff]
    %v1341 = vld [vmem:[%s1318 + $0xb0] sm:$0xff]
    %v1342 = vld [vmem:[%s1318 + $0xb8] sm:$0xff]
    %v1343 = vld [vmem:[%s1318 + $0xc0] sm:$0xff]
    %v1344 = vld [vmem:[%s1318 + $0xc8] sm:$0xff]
    %v1345 = vld [vmem:[%s1318 + $0xd0] sm:$0xff]
    %v1346 = vld [vmem:[%s1318 + $0xd8] sm:$0xff]
    %v1347 = vld [vmem:[%s1318 + $0xe0] sm:$0xff]
    %v1348 = vld [vmem:[%s1318 + $0xe8] sm:$0xff]
    %v1349 = vld [vmem:[%s1318 + $0xf0] sm:$0xff]
    %v1350 = vld [vmem:[%s1318 + $0xf8] sm:$0xff]
    %v1351 = vld [vmem:[%s1318 + $0x100] sm:$0xff]
    %v1352 = vld [vmem:[%s1318 + $0x108] sm:$0xff]
    %v1353 = vld [vmem:[%s1318 + $0x110] sm:$0xff]
    %v1354 = vld [vmem:[%s1318 + $0x118] sm:$0xff]
    %v1355 = vld [vmem:[%s1318 + $0x120] sm:$0xff]
    %v1356 = vld [vmem:[%s1318 + $0x128] sm:$0xff]
    %v1357 = vld [vmem:[%s1318 + $0x130] sm:$0xff]
    %v1358 = vld [vmem:[%s1318 + $0x138] sm:$0xff]
    %v1359 = vld [vmem:[%s1318 + $0x140] sm:$0xff]
    %v1360 = vld [vmem:[%s1318 + $0x148] sm:$0xff]
    %v1361 = vld [vmem:[%s1318 + $0x150] sm:$0xff]
    %v1362 = vld [vmem:[%s1318 + $0x158] sm:$0xff]
    %v1363 = vld [vmem:[%s1318 + $0x160] sm:$0xff]
    %v1364 = vld [vmem:[%s1318 + $0x168] sm:$0xff]
    %v1365 = vld [vmem:[%s1318 + $0x170] sm:$0xff]
    %v1366 = vld [vmem:[%s1318 + $0x178] sm:$0xff]
    %1367 = vmatprep.subr.mxu0 %v1320
    %1368 = vmatpush1.msra.mxu0 %v1319
    %1369 = vmatprep.subr.mxu0 %v1323
    %1370 = vmatpush1.msra.mxu0 %v1322
    %1371 = vmatprep.subr.mxu0 %v1326
    %1372 = vmatpush1.msra.mxu0 %v1325
    %1373 = vmatprep.subr.mxu0 %v1329
    %1374 = vmatpush1.msra.mxu0 %v1328
    %1375 = vmatprep.subr.mxu0 %v1332
    %1376 = vmatpush1.msra.mxu0 %v1331
    %1377 = vmatprep.subr.mxu0 %v1335
    %1378 = vmatpush1.msra.mxu0 %v1334
    %1379 = vmatprep.subr.mxu0 %v1338
    %1380 = vmatpush1.msra.mxu0 %v1337
    %1381 = vmatprep.subr.mxu0 %v1341
    %1382 = vmatpush1.msra.mxu0 %v1340
    %1383 = vmatprep.subr.mxu0 %v1344
    %1384 = vmatpush1.msra.mxu0 %v1343
    %1385 = vmatprep.subr.mxu0 %v1347
    %1386 = vmatpush1.msra.mxu0 %v1346
    %1387 = vmatprep.subr.mxu0 %v1350
    %1388 = vmatpush1.msra.mxu0 %v1349
    %1389 = vmatprep.subr.mxu0 %v1353
    %1390 = vmatpush1.msra.mxu0 %v1352
    %1391 = vmatprep.subr.mxu0 %v1356
    %1392 = vmatpush1.msra.mxu0 %v1355
    %1393 = vmatprep.subr.mxu0 %v1359
    %1394 = vmatpush1.msra.mxu0 %v1358
    %1395 = vmatprep.subr.mxu0 %v1362
    %1396 = vmatpush1.msra.mxu0 %v1361
    %1397 = vmatprep.subr.mxu0 %v1365
    %1398 = vmatpush1.msra.mxu0 %v1364
    %1399 = vmatprep.subr.mxu0 0.0
    %1400 = vmatpush1.msra.mxu0 0.0
    %1401 = vmatprep.subr.mxu0 0.0
    %1402 = vmatpush1.msra.mxu0 0.0
    %1403 = vmatprep.subr.mxu0 0.0
    %1404 = vmatpush1.msra.mxu0 0.0
    %1405 = vmatprep.subr.mxu0 0.0
    %1406 = vmatpush1.msra.mxu0 0.0
    %1407 = vmatprep.subr.mxu0 0.0
    %1408 = vmatpush1.msra.mxu0 0.0
    %1409 = vmatprep.subr.mxu0 0.0
    %1410 = vmatpush1.msra.mxu0 0.0
    %1411 = vmatprep.subr.mxu0 0.0
    %1412 = vmatpush1.msra.mxu0 0.0
    %1413 = vmatprep.subr.mxu0 0.0
    %1414 = vmatpush1.msra.mxu0 0.0
    %1415 = vmatprep.subr.mxu0 0.0
    %1416 = vmatpush1.msra.mxu0 0.0
    %1417 = vmatprep.subr.mxu0 0.0
    %1418 = vmatpush1.msra.mxu0 0.0
    %1419 = vmatprep.subr.mxu0 0.0
    %1420 = vmatpush1.msra.mxu0 0.0
    %1421 = vmatprep.subr.mxu0 0.0
    %1422 = vmatpush1.msra.mxu0 0.0
    %1423 = vmatprep.subr.mxu0 0.0
    %1424 = vmatpush1.msra.mxu0 0.0
    %1425 = vmatprep.subr.mxu0 0.0
    %1426 = vmatpush1.msra.mxu0 0.0
    %1427 = vmatprep.subr.mxu0 0.0
    %1428 = vmatpush1.msra.mxu0 0.0
    %1429 = vmatprep.subr.mxu0 0.0
    %1430 = vmatpush1.msra.mxu0 0.0
    %1431 = vmatprep.mubr.f32.mxu0 0.0
    %1432 = vmatmul.mubr.f32.gmra.mrb[0].mxu0 %v1306
    %v1433 = vpop.f32.mrb[0].mxu0
    %v1434 = vadd.f32 0.0, %v1433
    %v1435 = vpop.f32.mrb[0].mxu0
    %v1436 = vadd.f32 0.0, %v1435
    %1437 = vmatprep.mubr.f32.mxu0 0.0
    %1438 = vmatmul.mubr.f32.gmra.mrb[0].mxu0 %v1308
    %v1439 = vpop.f32.mrb[0].mxu0
    %v1440 = vadd.f32 0.0, %v1439
    %v1441 = vpop.f32.mrb[0].mxu0
    %v1442 = vadd.f32 0.0, %v1441
    %1443 = vmatprep.mubr.f32.mxu0 0.0
    %1444 = vmatmul.mubr.f32.gmra.mrb[0].mxu0 %v1311
    %v1445 = vpop.f32.mrb[0].mxu0
    %v1446 = vadd.f32 0.0, %v1445
    %v1447 = vpop.f32.mrb[0].mxu0
    %v1448 = vadd.f32 0.0, %v1447
    %1449 = vmatprep.mubr.f32.mxu0 0.0
    %1450 = vmatmul.mubr.f32.gmra.mrb[0].mxu0 %v1313
    %v1451 = vpop.f32.mrb[0].mxu0
    %v1452 = vadd.f32 0.0, %v1451
    %v1453 = vpop.f32.mrb[0].mxu0
    %v1454 = vadd.f32 0.0, %v1453
    %1455 = vdwg.mxu0
    %1456 = vmatprep.subr.mxu0 0.0
    %1457 = vmatpush1.msra.mxu0 %v1321
    %1458 = vmatprep.subr.mxu0 0.0
    %1459 = vmatpush1.msra.mxu0 %v1324
    %1460 = vmatprep.subr.mxu0 0.0
    %1461 = vmatpush1.msra.mxu0 %v1327
    %1462 = vmatprep.subr.mxu0 0.0
    %1463 = vmatpush1.msra.mxu0 %v1330
    %1464 = vmatprep.subr.mxu0 0.0
    %1465 = vmatpush1.msra.mxu0 %v1333
    %1466 = vmatprep.subr.mxu0 0.0
    %1467 = vmatpush1.msra.mxu0 %v1336
    %1468 = vmatprep.subr.mxu0 0.0
    %1469 = vmatpush1.msra.mxu0 %v1339
    %1470 = vmatprep.subr.mxu0 0.0
    %1471 = vmatpush1.msra.mxu0 %v1342
    %1472 = vmatprep.subr.mxu0 0.0
    %1473 = vmatpush1.msra.mxu0 %v1345
    %1474 = vmatprep.subr.mxu0 0.0
    %1475 = vmatpush1.msra.mxu0 %v1348
    %1476 = vmatprep.subr.mxu0 0.0
    %1477 = vmatpush1.msra.mxu0 %v1351
    %1478 = vmatprep.subr.mxu0 0.0
    %1479 = vmatpush1.msra.mxu0 %v1354
    %1480 = vmatprep.subr.mxu0 0.0
    %1481 = vmatpush1.msra.mxu0 %v1357
    %1482 = vmatprep.subr.mxu0 0.0
    %1483 = vmatpush1.msra.mxu0 %v1360
    %1484 = vmatprep.subr.mxu0 0.0
    %1485 = vmatpush1.msra.mxu0 %v1363
    %1486 = vmatprep.subr.mxu0 0.0
    %1487 = vmatpush1.msra.mxu0 %v1366
    %1488 = vmatprep.subr.mxu0 0.0
    %1489 = vmatpush1.msra.mxu0 0.0
    %1490 = vmatprep.subr.mxu0 0.0
    %1491 = vmatpush1.msra.mxu0 0.0
    %1492 = vmatprep.subr.mxu0 0.0
    %1493 = vmatpush1.msra.mxu0 0.0
    %1494 = vmatprep.subr.mxu0 0.0
    %1495 = vmatpush1.msra.mxu0 0.0
    %1496 = vmatprep.subr.mxu0 0.0
    %1497 = vmatpush1.msra.mxu0 0.0
    %1498 = vmatprep.subr.mxu0 0.0
    %1499 = vmatpush1.msra.mxu0 0.0
    %1500 = vmatprep.subr.mxu0 0.0
    %1501 = vmatpush1.msra.mxu0 0.0
    %1502 = vmatprep.subr.mxu0 0.0
    %1503 = vmatpush1.msra.mxu0 0.0
    %1504 = vmatprep.subr.mxu0 0.0
    %1505 = vmatpush1.msra.mxu0 0.0
    %1506 = vmatprep.subr.mxu0 0.0
    %1507 = vmatpush1.msra.mxu0 0.0
    %1508 = vmatprep.subr.mxu0 0.0
    %1509 = vmatpush1.msra.mxu0 0.0
    %1510 = vmatprep.subr.mxu0 0.0
    %1511 = vmatpush1.msra.mxu0 0.0
    %1512 = vmatprep.subr.mxu0 0.0
    %1513 = vmatpush1.msra.mxu0 0.0
    %1514 = vmatprep.subr.mxu0 0.0
    %1515 = vmatpush1.msra.mxu0 0.0
    %1516 = vmatprep.subr.mxu0 0.0
    %1517 = vmatpush1.msra.mxu0 0.0
    %1518 = vmatprep.subr.mxu0 0.0
    %1519 = vmatpush1.msra.mxu0 0.0
    %1520 = vmatprep.mubr.f32.mxu0 0.0
    %1521 = vmatmul.mubr.f32.gmra.mrb[0].mxu0 %v1306
    %v1522 = vpop.f32.mrb[0].mxu0
    %v1523 = vadd.f32 0.0, %v1522
    %v1524 = vpop.f32.mrb[0].mxu0
    %1525 = vmatprep.mubr.f32.mxu0 0.0
    %1526 = vmatmul.mubr.f32.gmra.mrb[0].mxu0 %v1308
    %v1527 = vpop.f32.mrb[0].mxu0
    %v1528 = vadd.f32 0.0, %v1527
    %v1529 = vpop.f32.mrb[0].mxu0
    %1530 = vmatprep.mubr.f32.mxu0 0.0
    %1531 = vmatmul.mubr.f32.gmra.mrb[0].mxu0 %v1311
    %v1532 = vpop.f32.mrb[0].mxu0
    %v1533 = vadd.f32 0.0, %v1532
    %v1534 = vpop.f32.mrb[0].mxu0
    %1535 = vmatprep.mubr.f32.mxu0 0.0
    %1536 = vmatmul.mubr.f32.gmra.mrb[0].mxu0 %v1313
    %v1537 = vpop.f32.mrb[0].mxu0
    %v1538 = vadd.f32 0.0, %v1537
    %v1539 = vpop.f32.mrb[0].mxu0
    %1540 = vdwg.mxu0
    %v1541 = vadd.f32 %v1291, %v1434
    %v1542 = vadd.f32 %v1292, %v1436
    %v1543 = vadd.f32 %v1293, %v1523
    %v1544 = vadd.f32 %v1294, %v1440
    %v1545 = vadd.f32 %v1295, %v1442
    %v1546 = vadd.f32 %v1296, %v1528
    %v1547 = vadd.f32 %v1297, %v1446
    %v1548 = vadd.f32 %v1298, %v1448
    %v1549 = vadd.f32 %v1299, %v1533
    %v1550 = vadd.f32 %v1300, %v1452
    %v1551 = vadd.f32 %v1301, %v1454
    %v1552 = vadd.f32 %v1302, %v1538
    %vm1553 = vcmask 1043456
    %v1554 = vrot.slane %v587, 4
    %v1555 = vrot.slane %v577, 4
    %v1556 = vsel %vm1553, %v1554, %v1555
    %v1557 = vrot.slane %v589, 4
    %v1558 = vsel %vm1553, %v1555, %v1557
    %v1559 = vrot.slane %v588, 4
    %v1560 = vrot.slane %v580, 4
    %v1561 = vsel %vm1553, %v1559, %v1560
    %v1562 = vrot.slane %v590, 4
    %v1563 = vsel %vm1553, %v1560, %v1562
    %s1568 = scalar_lea.vmem [#allocation2], 1536
    %v1569 = vld [vmem:[%s1568] sm:$0xff]
    %v1570 = vld [vmem:[%s1568 + $0x8] sm:$0xff]
    %v1571 = vld [vmem:[%s1568 + $0x10] sm:$0xff]
    %v1572 = vld [vmem:[%s1568 + $0x18] sm:$0xff]
    %v1573 = vld [vmem:[%s1568 + $0x20] sm:$0xff]
    %v1574 = vld [vmem:[%s1568 + $0x28] sm:$0xff]
    %v1575 = vld [vmem:[%s1568 + $0x30] sm:$0xff]
    %v1576 = vld [vmem:[%s1568 + $0x38] sm:$0xff]
    %v1577 = vld [vmem:[%s1568 + $0x40] sm:$0xff]
    %v1578 = vld [vmem:[%s1568 + $0x48] sm:$0xff]
    %v1579 = vld [vmem:[%s1568 + $0x50] sm:$0xff]
    %v1580 = vld [vmem:[%s1568 + $0x58] sm:$0xff]
    %v1581 = vld [vmem:[%s1568 + $0x60] sm:$0xff]
    %v1582 = vld [vmem:[%s1568 + $0x68] sm:$0xff]
    %v1583 = vld [vmem:[%s1568 + $0x70] sm:$0xff]
    %v1584 = vld [vmem:[%s1568 + $0x78] sm:$0xff]
    %v1585 = vld [vmem:[%s1568 + $0x80] sm:$0xff]
    %v1586 = vld [vmem:[%s1568 + $0x88] sm:$0xff]
    %v1587 = vld [vmem:[%s1568 + $0x90] sm:$0xff]
    %v1588 = vld [vmem:[%s1568 + $0x98] sm:$0xff]
    %v1589 = vld [vmem:[%s1568 + $0xa0] sm:$0xff]
    %v1590 = vld [vmem:[%s1568 + $0xa8] sm:$0xff]
    %v1591 = vld [vmem:[%s1568 + $0xb0] sm:$0xff]
    %v1592 = vld [vmem:[%s1568 + $0xb8] sm:$0xff]
    %v1593 = vld [vmem:[%s1568 + $0xc0] sm:$0xff]
    %v1594 = vld [vmem:[%s1568 + $0xc8] sm:$0xff]
    %v1595 = vld [vmem:[%s1568 + $0xd0] sm:$0xff]
    %v1596 = vld [vmem:[%s1568 + $0xd8] sm:$0xff]
    %v1597 = vld [vmem:[%s1568 + $0xe0] sm:$0xff]
    %v1598 = vld [vmem:[%s1568 + $0xe8] sm:$0xff]
    %v1599 = vld [vmem:[%s1568 + $0xf0] sm:$0xff]
    %v1600 = vld [vmem:[%s1568 + $0xf8] sm:$0xff]
    %v1601 = vld [vmem:[%s1568 + $0x100] sm:$0xff]
    %v1602 = vld [vmem:[%s1568 + $0x108] sm:$0xff]
    %v1603 = vld [vmem:[%s1568 + $0x110] sm:$0xff]
    %v1604 = vld [vmem:[%s1568 + $0x118] sm:$0xff]
    %v1605 = vld [vmem:[%s1568 + $0x120] sm:$0xff]
    %v1606 = vld [vmem:[%s1568 + $0x128] sm:$0xff]
    %v1607 = vld [vmem:[%s1568 + $0x130] sm:$0xff]
    %v1608 = vld [vmem:[%s1568 + $0x138] sm:$0xff]
    %v1609 = vld [vmem:[%s1568 + $0x140] sm:$0xff]
    %v1610 = vld [vmem:[%s1568 + $0x148] sm:$0xff]
    %v1611 = vld [vmem:[%s1568 + $0x150] sm:$0xff]
    %v1612 = vld [vmem:[%s1568 + $0x158] sm:$0xff]
    %v1613 = vld [vmem:[%s1568 + $0x160] sm:$0xff]
    %v1614 = vld [vmem:[%s1568 + $0x168] sm:$0xff]
    %v1615 = vld [vmem:[%s1568 + $0x170] sm:$0xff]
    %v1616 = vld [vmem:[%s1568 + $0x178] sm:$0xff]
    %1617 = vmatprep.subr.mxu0 %v1570
    %1618 = vmatpush1.msra.mxu0 %v1569
    %1619 = vmatprep.subr.mxu0 %v1573
    %1620 = vmatpush1.msra.mxu0 %v1572
    %1621 = vmatprep.subr.mxu0 %v1576
    %1622 = vmatpush1.msra.mxu0 %v1575
    %1623 = vmatprep.subr.mxu0 %v1579
    %1624 = vmatpush1.msra.mxu0 %v1578
    %1625 = vmatprep.subr.mxu0 %v1582
    %1626 = vmatpush1.msra.mxu0 %v1581
    %1627 = vmatprep.subr.mxu0 %v1585
    %1628 = vmatpush1.msra.mxu0 %v1584
    %1629 = vmatprep.subr.mxu0 %v1588
    %1630 = vmatpush1.msra.mxu0 %v1587
    %1631 = vmatprep.subr.mxu0 %v1591
    %1632 = vmatpush1.msra.mxu0 %v1590
    %1633 = vmatprep.subr.mxu0 %v1594
    %1634 = vmatpush1.msra.mxu0 %v1593
    %1635 = vmatprep.subr.mxu0 %v1597
    %1636 = vmatpush1.msra.mxu0 %v1596
    %1637 = vmatprep.subr.mxu0 %v1600
    %1638 = vmatpush1.msra.mxu0 %v1599
    %1639 = vmatprep.subr.mxu0 %v1603
    %1640 = vmatpush1.msra.mxu0 %v1602
    %1641 = vmatprep.subr.mxu0 %v1606
    %1642 = vmatpush1.msra.mxu0 %v1605
    %1643 = vmatprep.subr.mxu0 %v1609
    %1644 = vmatpush1.msra.mxu0 %v1608
    %1645 = vmatprep.subr.mxu0 %v1612
    %1646 = vmatpush1.msra.mxu0 %v1611
    %1647 = vmatprep.subr.mxu0 %v1615
    %1648 = vmatpush1.msra.mxu0 %v1614
    %1649 = vmatprep.subr.mxu0 0.0
    %1650 = vmatpush1.msra.mxu0 0.0
    %1651 = vmatprep.subr.mxu0 0.0
    %1652 = vmatpush1.msra.mxu0 0.0
    %1653 = vmatprep.subr.mxu0 0.0
    %1654 = vmatpush1.msra.mxu0 0.0
    %1655 = vmatprep.subr.mxu0 0.0
    %1656 = vmatpush1.msra.mxu0 0.0
    %1657 = vmatprep.subr.mxu0 0.0
    %1658 = vmatpush1.msra.mxu0 0.0
    %1659 = vmatprep.subr.mxu0 0.0
    %1660 = vmatpush1.msra.mxu0 0.0
    %1661 = vmatprep.subr.mxu0 0.0
    %1662 = vmatpush1.msra.mxu0 0.0
    %1663 = vmatprep.subr.mxu0 0.0
    %1664 = vmatpush1.msra.mxu0 0.0
    %1665 = vmatprep.subr.mxu0 0.0
    %1666 = vmatpush1.msra.mxu0 0.0
    %1667 = vmatprep.subr.mxu0 0.0
    %1668 = vmatpush1.msra.mxu0 0.0
    %1669 = vmatprep.subr.mxu0 0.0
    %1670 = vmatpush1.msra.mxu0 0.0
    %1671 = vmatprep.subr.mxu0 0.0
    %1672 = vmatpush1.msra.mxu0 0.0
    %1673 = vmatprep.subr.mxu0 0.0
    %1674 = vmatpush1.msra.mxu0 0.0
    %1675 = vmatprep.subr.mxu0 0.0
    %1676 = vmatpush1.msra.mxu0 0.0
    %1677 = vmatprep.subr.mxu0 0.0
    %1678 = vmatpush1.msra.mxu0 0.0
    %1679 = vmatprep.subr.mxu0 0.0
    %1680 = vmatpush1.msra.mxu0 0.0
    %1681 = vmatprep.mubr.f32.mxu0 0.0
    %1682 = vmatmul.mubr.f32.gmra.mrb[0].mxu0 %v1556
    %v1683 = vpop.f32.mrb[0].mxu0
    %v1684 = vadd.f32 0.0, %v1683
    %v1685 = vpop.f32.mrb[0].mxu0
    %v1686 = vadd.f32 0.0, %v1685
    %1687 = vmatprep.mubr.f32.mxu0 0.0
    %1688 = vmatmul.mubr.f32.gmra.mrb[0].mxu0 %v1558
    %v1689 = vpop.f32.mrb[0].mxu0
    %v1690 = vadd.f32 0.0, %v1689
    %v1691 = vpop.f32.mrb[0].mxu0
    %v1692 = vadd.f32 0.0, %v1691
    %1693 = vmatprep.mubr.f32.mxu0 0.0
    %1694 = vmatmul.mubr.f32.gmra.mrb[0].mxu0 %v1561
    %v1695 = vpop.f32.mrb[0].mxu0
    %v1696 = vadd.f32 0.0, %v1695
    %v1697 = vpop.f32.mrb[0].mxu0
    %v1698 = vadd.f32 0.0, %v1697
    %1699 = vmatprep.mubr.f32.mxu0 0.0
    %1700 = vmatmul.mubr.f32.gmra.mrb[0].mxu0 %v1563
    %v1701 = vpop.f32.mrb[0].mxu0
    %v1702 = vadd.f32 0.0, %v1701
    %v1703 = vpop.f32.mrb[0].mxu0
    %v1704 = vadd.f32 0.0, %v1703
    %1705 = vdwg.mxu0
    %1706 = vmatprep.subr.mxu0 0.0
    %1707 = vmatpush1.msra.mxu0 %v1571
    %1708 = vmatprep.subr.mxu0 0.0
    %1709 = vmatpush1.msra.mxu0 %v1574
    %1710 = vmatprep.subr.mxu0 0.0
    %1711 = vmatpush1.msra.mxu0 %v1577
    %1712 = vmatprep.subr.mxu0 0.0
    %1713 = vmatpush1.msra.mxu0 %v1580
    %1714 = vmatprep.subr.mxu0 0.0
    %1715 = vmatpush1.msra.mxu0 %v1583
    %1716 = vmatprep.subr.mxu0 0.0
    %1717 = vmatpush1.msra.mxu0 %v1586
    %1718 = vmatprep.subr.mxu0 0.0
    %1719 = vmatpush1.msra.mxu0 %v1589
    %1720 = vmatprep.subr.mxu0 0.0
    %1721 = vmatpush1.msra.mxu0 %v1592
    %1722 = vmatprep.subr.mxu0 0.0
    %1723 = vmatpush1.msra.mxu0 %v1595
    %1724 = vmatprep.subr.mxu0 0.0
    %1725 = vmatpush1.msra.mxu0 %v1598
    %1726 = vmatprep.subr.mxu0 0.0
    %1727 = vmatpush1.msra.mxu0 %v1601
    %1728 = vmatprep.subr.mxu0 0.0
    %1729 = vmatpush1.msra.mxu0 %v1604
    %1730 = vmatprep.subr.mxu0 0.0
    %1731 = vmatpush1.msra.mxu0 %v1607
    %1732 = vmatprep.subr.mxu0 0.0
    %1733 = vmatpush1.msra.mxu0 %v1610
    %1734 = vmatprep.subr.mxu0 0.0
    %1735 = vmatpush1.msra.mxu0 %v1613
    %1736 = vmatprep.subr.mxu0 0.0
    %1737 = vmatpush1.msra.mxu0 %v1616
    %1738 = vmatprep.subr.mxu0 0.0
    %1739 = vmatpush1.msra.mxu0 0.0
    %1740 = vmatprep.subr.mxu0 0.0
    %1741 = vmatpush1.msra.mxu0 0.0
    %1742 = vmatprep.subr.mxu0 0.0
    %1743 = vmatpush1.msra.mxu0 0.0
    %1744 = vmatprep.subr.mxu0 0.0
    %1745 = vmatpush1.msra.mxu0 0.0
    %1746 = vmatprep.subr.mxu0 0.0
    %1747 = vmatpush1.msra.mxu0 0.0
    %1748 = vmatprep.subr.mxu0 0.0
    %1749 = vmatpush1.msra.mxu0 0.0
    %1750 = vmatprep.subr.mxu0 0.0
    %1751 = vmatpush1.msra.mxu0 0.0
    %1752 = vmatprep.subr.mxu0 0.0
    %1753 = vmatpush1.msra.mxu0 0.0
    %1754 = vmatprep.subr.mxu0 0.0
    %1755 = vmatpush1.msra.mxu0 0.0
    %1756 = vmatprep.subr.mxu0 0.0
    %1757 = vmatpush1.msra.mxu0 0.0
    %1758 = vmatprep.subr.mxu0 0.0
    %1759 = vmatpush1.msra.mxu0 0.0
    %1760 = vmatprep.subr.mxu0 0.0
    %1761 = vmatpush1.msra.mxu0 0.0
    %1762 = vmatprep.subr.mxu0 0.0
    %1763 = vmatpush1.msra.mxu0 0.0
    %1764 = vmatprep.subr.mxu0 0.0
    %1765 = vmatpush1.msra.mxu0 0.0
    %1766 = vmatprep.subr.mxu0 0.0
    %1767 = vmatpush1.msra.mxu0 0.0
    %1768 = vmatprep.subr.mxu0 0.0
    %1769 = vmatpush1.msra.mxu0 0.0
    %1770 = vmatprep.mubr.f32.mxu0 0.0
    %1771 = vmatmul.mubr.f32.gmra.mrb[0].mxu0 %v1556
    %v1772 = vpop.f32.mrb[0].mxu0
    %v1773 = vadd.f32 0.0, %v1772
    %v1774 = vpop.f32.mrb[0].mxu0
    %1775 = vmatprep.mubr.f32.mxu0 0.0
    %1776 = vmatmul.mubr.f32.gmra.mrb[0].mxu0 %v1558
    %v1777 = vpop.f32.mrb[0].mxu0
    %v1778 = vadd.f32 0.0, %v1777
    %v1779 = vpop.f32.mrb[0].mxu0
    %1780 = vmatprep.mubr.f32.mxu0 0.0
    %1781 = vmatmul.mubr.f32.gmra.mrb[0].mxu0 %v1561
    %v1782 = vpop.f32.mrb[0].mxu0
    %v1783 = vadd.f32 0.0, %v1782
    %v1784 = vpop.f32.mrb[0].mxu0
    %1785 = vmatprep.mubr.f32.mxu0 0.0
    %1786 = vmatmul.mubr.f32.gmra.mrb[0].mxu0 %v1563
    %v1787 = vpop.f32.mrb[0].mxu0
    %v1788 = vadd.f32 0.0, %v1787
    %v1789 = vpop.f32.mrb[0].mxu0
    %1790 = vdwg.mxu0
    %v1791 = vadd.f32 %v1541, %v1684
    %v1792 = vadd.f32 %v1542, %v1686
    %v1793 = vadd.f32 %v1543, %v1773
    %v1794 = vadd.f32 %v1544, %v1690
    %v1795 = vadd.f32 %v1545, %v1692
    %v1796 = vadd.f32 %v1546, %v1778
    %v1797 = vadd.f32 %v1547, %v1696
    %v1798 = vadd.f32 %v1548, %v1698
    %v1799 = vadd.f32 %v1549, %v1783
    %v1800 = vadd.f32 %v1550, %v1702
    %v1801 = vadd.f32 %v1551, %v1704
    %v1802 = vadd.f32 %v1552, %v1788
    %v1803 = vld [vmem:[%s6] sm:$0x7]
    %v1805 = vlaneseq
    %v1806 = vshrl.u32 %v1805, 7
    %v1807 = vsub.s32 0, %v1806
    %v1808 = vrot.slane %v1803, %v1807
    %v1809 = vlaneseq
    %v1810 = vshrl.u32 %v1809, 7
    %v1811 = vsub.s32 1, %v1810
    %v1812 = vrot.slane %v1803, %v1811
    %v1813 = vlaneseq
    %v1814 = vshrl.u32 %v1813, 7
    %v1815 = vsub.s32 2, %v1814
    %v1816 = vrot.slane %v1803, %v1815
    %v1820 = vadd.f32 %v1791, %v1808
    %v1821 = vadd.f32 %v1792, %v1812
    %v1822 = vadd.f32 %v1793, %v1816
    %v1823 = vadd.f32 %v1794, %v1808
    %v1824 = vadd.f32 %v1795, %v1812
    %v1825 = vadd.f32 %v1796, %v1816
    %v1826 = vadd.f32 %v1797, %v1808
    %v1827 = vadd.f32 %v1798, %v1812
    %v1828 = vadd.f32 %v1799, %v1816
    %v1829 = vadd.f32 %v1800, %v1808
    %v1830 = vadd.f32 %v1801, %v1812
    %v1831 = vadd.f32 %v1802, %v1816
    %v1832 = vtanh.pop %v1820
    %v1833 = vtanh.pop %v1821
    %v1834 = vtanh.pop %v1822
    %v1835 = vtanh.pop %v1823
    %v1836 = vtanh.pop %v1824
    %v1837 = vtanh.pop %v1825
    %v1838 = vtanh.pop %v1826
    %v1839 = vtanh.pop %v1827
    %v1840 = vtanh.pop %v1828
    %v1841 = vtanh.pop %v1829
    %v1842 = vtanh.pop %v1830
    %v1843 = vtanh.pop %v1831
    %v1856 = vrot.slane %v1832, 7
    %v1857 = vrot.slane %v1833, 7
    %v1858 = vrot.slane %v1834, 7
    %v1859 = vrot.slane %v1835, 7
    %v1860 = vsel %vm195, %v1856, %v1859
    %v1861 = vrot.slane %v1836, 7
    %v1862 = vsel %vm195, %v1857, %v1861
    %v1863 = vrot.slane %v1837, 7
    %v1864 = vsel %vm195, %v1858, %v1863
    %v1865 = vrot.slane %v1838, 7
    %v1866 = vrot.slane %v1839, 7
    %v1867 = vrot.slane %v1840, 7
    %v1868 = vrot.slane %v1841, 7
    %v1869 = vsel %vm195, %v1865, %v1868
    %v1870 = vrot.slane %v1842, 7
    %v1871 = vsel %vm195, %v1866, %v1870
    %v1872 = vrot.slane %v1843, 7
    %v1873 = vsel %vm195, %v1867, %v1872
    %v1892 = vsel %vm195, 0.0, %v1856
    %v1893 = vsel %vm195, 0.0, %v1857
    %v1894 = vsel %vm195, 0.0, %v1858
    %v1895 = vsel %vm195, 0.0, %v1865
    %v1896 = vsel %vm195, 0.0, %v1866
    %v1897 = vsel %vm195, 0.0, %v1867
    %v1898 = vsel %vm195, %v1859, 0.0
    %v1899 = vsel %vm195, %v1861, 0.0
    %v1900 = vsel %vm195, %v1863, 0.0
    %v1901 = vsel %vm195, %v1868, 0.0
    %v1902 = vsel %vm195, %v1870, 0.0
    %v1903 = vsel %vm195, %v1872, 0.0
    %v1904 = vld [vmem:[#allocation5] sm:$0xff]
    %v1905 = vld [vmem:[#allocation5 + $0x8] sm:$0xff]
    %v1906 = vld [vmem:[#allocation5 + $0x10] sm:$0xff]
    %v1907 = vld [vmem:[#allocation5 + $0x18] sm:$0xff]
    %v1908 = vld [vmem:[#allocation5 + $0x20] sm:$0xff]
    %v1909 = vld [vmem:[#allocation5 + $0x28] sm:$0xff]
    %v1910 = vld [vmem:[#allocation5 + $0x30] sm:$0xff]
    %v1911 = vld [vmem:[#allocation5 + $0x38] sm:$0xff]
    %v1912 = vld [vmem:[#allocation5 + $0x40] sm:$0xff]
    %v1913 = vld [vmem:[#allocation5 + $0x48] sm:$0xff]
    %v1914 = vld [vmem:[#allocation5 + $0x50] sm:$0xff]
    %v1915 = vld [vmem:[#allocation5 + $0x58] sm:$0xff]
    %v1916 = vld [vmem:[#allocation5 + $0x60] sm:$0xff]
    %v1917 = vld [vmem:[#allocation5 + $0x68] sm:$0xff]
    %v1918 = vld [vmem:[#allocation5 + $0x70] sm:$0xff]
    %v1919 = vld [vmem:[#allocation5 + $0x78] sm:$0xff]
    %v1920 = vld [vmem:[#allocation5 + $0x80] sm:$0xff]
    %v1921 = vld [vmem:[#allocation5 + $0x88] sm:$0xff]
    %v1922 = vld [vmem:[#allocation5 + $0x90] sm:$0xff]
    %v1923 = vld [vmem:[#allocation5 + $0x98] sm:$0xff]
    %v1924 = vld [vmem:[#allocation5 + $0xa0] sm:$0xff]
    %v1925 = vld [vmem:[#allocation5 + $0xa8] sm:$0xff]
    %v1926 = vld [vmem:[#allocation5 + $0xb0] sm:$0xff]
    %v1927 = vld [vmem:[#allocation5 + $0xb8] sm:$0xff]
    %v1928 = vld [vmem:[#allocation5 + $0xc0] sm:$0xff]
    %v1929 = vld [vmem:[#allocation5 + $0xc8] sm:$0xff]
    %v1930 = vld [vmem:[#allocation5 + $0xd0] sm:$0xff]
    %v1931 = vld [vmem:[#allocation5 + $0xd8] sm:$0xff]
    %v1932 = vld [vmem:[#allocation5 + $0xe0] sm:$0xff]
    %v1933 = vld [vmem:[#allocation5 + $0xe8] sm:$0xff]
    %v1934 = vld [vmem:[#allocation5 + $0xf0] sm:$0xff]
    %v1935 = vld [vmem:[#allocation5 + $0xf8] sm:$0xff]
    %v1936 = vld [vmem:[#allocation5 + $0x100] sm:$0xff]
    %v1937 = vld [vmem:[#allocation5 + $0x108] sm:$0xff]
    %v1938 = vld [vmem:[#allocation5 + $0x110] sm:$0xff]
    %v1939 = vld [vmem:[#allocation5 + $0x118] sm:$0xff]
    %v1940 = vld [vmem:[#allocation5 + $0x120] sm:$0xff]
    %v1941 = vld [vmem:[#allocation5 + $0x128] sm:$0xff]
    %v1942 = vld [vmem:[#allocation5 + $0x130] sm:$0xff]
    %v1943 = vld [vmem:[#allocation5 + $0x138] sm:$0xff]
    %v1944 = vld [vmem:[#allocation5 + $0x140] sm:$0xff]
    %v1945 = vld [vmem:[#allocation5 + $0x148] sm:$0xff]
    %v1946 = vld [vmem:[#allocation5 + $0x150] sm:$0xff]
    %v1947 = vld [vmem:[#allocation5 + $0x158] sm:$0xff]
    %v1948 = vld [vmem:[#allocation5 + $0x160] sm:$0xff]
    %v1949 = vld [vmem:[#allocation5 + $0x168] sm:$0xff]
    %v1950 = vld [vmem:[#allocation5 + $0x170] sm:$0xff]
    %v1951 = vld [vmem:[#allocation5 + $0x178] sm:$0xff]
    %v1964 = vrot.slane %v1892, 1
    %v1965 = vrot.slane %v1860, 1
    %v1966 = vsel %vm232, %v1964, %v1965
    %v1967 = vrot.slane %v1893, 1
    %v1968 = vrot.slane %v1862, 1
    %v1969 = vsel %vm232, %v1967, %v1968
    %v1970 = vrot.slane %v1894, 1
    %v1971 = vrot.slane %v1864, 1
    %v1972 = vsel %vm232, %v1970, %v1971
    %v1973 = vrot.slane %v1898, 1
    %v1974 = vsel %vm232, %v1965, %v1973
    %v1975 = vrot.slane %v1899, 1
    %v1976 = vsel %vm232, %v1968, %v1975
    %v1977 = vrot.slane %v1900, 1
    %v1978 = vsel %vm232, %v1971, %v1977
    %v1979 = vrot.slane %v1895, 1
    %v1980 = vrot.slane %v1869, 1
    %v1981 = vsel %vm232, %v1979, %v1980
    %v1982 = vrot.slane %v1896, 1
    %v1983 = vrot.slane %v1871, 1
    %v1984 = vsel %vm232, %v1982, %v1983
    %v1985 = vrot.slane %v1897, 1
    %v1986 = vrot.slane %v1873, 1
    %v1987 = vsel %vm232, %v1985, %v1986
    %v1988 = vrot.slane %v1901, 1
    %v1989 = vsel %vm232, %v1980, %v1988
    %v1990 = vrot.slane %v1902, 1
    %v1991 = vsel %vm232, %v1983, %v1990
    %v1992 = vrot.slane %v1903, 1
    %v1993 = vsel %vm232, %v1986, %v1992
    %s2006 = scalar_lea.vmem [#allocation5], 384
    %v2007 = vld [vmem:[%s2006] sm:$0xff]
    %v2008 = vld [vmem:[%s2006 + $0x8] sm:$0xff]
    %v2009 = vld [vmem:[%s2006 + $0x10] sm:$0xff]
    %v2010 = vld [vmem:[%s2006 + $0x18] sm:$0xff]
    %v2011 = vld [vmem:[%s2006 + $0x20] sm:$0xff]
    %v2012 = vld [vmem:[%s2006 + $0x28] sm:$0xff]
    %v2013 = vld [vmem:[%s2006 + $0x30] sm:$0xff]
    %v2014 = vld [vmem:[%s2006 + $0x38] sm:$0xff]
    %v2015 = vld [vmem:[%s2006 + $0x40] sm:$0xff]
    %v2016 = vld [vmem:[%s2006 + $0x48] sm:$0xff]
    %v2017 = vld [vmem:[%s2006 + $0x50] sm:$0xff]
    %v2018 = vld [vmem:[%s2006 + $0x58] sm:$0xff]
    %v2019 = vld [vmem:[%s2006 + $0x60] sm:$0xff]
    %v2020 = vld [vmem:[%s2006 + $0x68] sm:$0xff]
    %v2021 = vld [vmem:[%s2006 + $0x70] sm:$0xff]
    %v2022 = vld [vmem:[%s2006 + $0x78] sm:$0xff]
    %v2023 = vld [vmem:[%s2006 + $0x80] sm:$0xff]
    %v2024 = vld [vmem:[%s2006 + $0x88] sm:$0xff]
    %v2025 = vld [vmem:[%s2006 + $0x90] sm:$0xff]
    %v2026 = vld [vmem:[%s2006 + $0x98] sm:$0xff]
    %v2027 = vld [vmem:[%s2006 + $0xa0] sm:$0xff]
    %v2028 = vld [vmem:[%s2006 + $0xa8] sm:$0xff]
    %v2029 = vld [vmem:[%s2006 + $0xb0] sm:$0xff]
    %v2030 = vld [vmem:[%s2006 + $0xb8] sm:$0xff]
    %v2031 = vld [vmem:[%s2006 + $0xc0] sm:$0xff]
    %v2032 = vld [vmem:[%s2006 + $0xc8] sm:$0xff]
    %v2033 = vld [vmem:[%s2006 + $0xd0] sm:$0xff]
    %v2034 = vld [vmem:[%s2006 + $0xd8] sm:$0xff]
    %v2035 = vld [vmem:[%s2006 + $0xe0] sm:$0xff]
    %v2036 = vld [vmem:[%s2006 + $0xe8] sm:$0xff]
    %v2037 = vld [vmem:[%s2006 + $0xf0] sm:$0xff]
    %v2038 = vld [vmem:[%s2006 + $0xf8] sm:$0xff]
    %v2039 = vld [vmem:[%s2006 + $0x100] sm:$0xff]
    %v2040 = vld [vmem:[%s2006 + $0x108] sm:$0xff]
    %v2041 = vld [vmem:[%s2006 + $0x110] sm:$0xff]
    %v2042 = vld [vmem:[%s2006 + $0x118] sm:$0xff]
    %v2043 = vld [vmem:[%s2006 + $0x120] sm:$0xff]
    %v2044 = vld [vmem:[%s2006 + $0x128] sm:$0xff]
    %v2045 = vld [vmem:[%s2006 + $0x130] sm:$0xff]
    %v2046 = vld [vmem:[%s2006 + $0x138] sm:$0xff]
    %v2047 = vld [vmem:[%s2006 + $0x140] sm:$0xff]
    %v2048 = vld [vmem:[%s2006 + $0x148] sm:$0xff]
    %v2049 = vld [vmem:[%s2006 + $0x150] sm:$0xff]
    %v2050 = vld [vmem:[%s2006 + $0x158] sm:$0xff]
    %v2051 = vld [vmem:[%s2006 + $0x160] sm:$0xff]
    %v2052 = vld [vmem:[%s2006 + $0x168] sm:$0xff]
    %v2053 = vld [vmem:[%s2006 + $0x170] sm:$0xff]
    %v2054 = vld [vmem:[%s2006 + $0x178] sm:$0xff]
    %2055 = vmatprep.subr.mxu0 0.0
    %2056 = vmatpush1.msra.mxu0 %v2007
    %2057 = vmatprep.subr.mxu0 0.0
    %2058 = vmatpush1.msra.mxu0 %v2008
    %2059 = vmatprep.subr.mxu0 0.0
    %2060 = vmatpush1.msra.mxu0 %v2009
    %2061 = vmatprep.subr.mxu0 0.0
    %2062 = vmatpush1.msra.mxu0 %v2010
    %2063 = vmatprep.subr.mxu0 0.0
    %2064 = vmatpush1.msra.mxu0 %v2011
    %2065 = vmatprep.subr.mxu0 0.0
    %2066 = vmatpush1.msra.mxu0 %v2012
    %2067 = vmatprep.subr.mxu0 0.0
    %2068 = vmatpush1.msra.mxu0 %v2013
    %2069 = vmatprep.subr.mxu0 0.0
    %2070 = vmatpush1.msra.mxu0 %v2014
    %2071 = vmatprep.subr.mxu0 0.0
    %2072 = vmatpush1.msra.mxu0 %v2015
    %2073 = vmatprep.subr.mxu0 0.0
    %2074 = vmatpush1.msra.mxu0 %v2016
    %2075 = vmatprep.subr.mxu0 0.0
    %2076 = vmatpush1.msra.mxu0 %v2017
    %2077 = vmatprep.subr.mxu0 0.0
    %2078 = vmatpush1.msra.mxu0 %v2018
    %2079 = vmatprep.subr.mxu0 0.0
    %2080 = vmatpush1.msra.mxu0 %v2019
    %2081 = vmatprep.subr.mxu0 0.0
    %2082 = vmatpush1.msra.mxu0 %v2020
    %2083 = vmatprep.subr.mxu0 0.0
    %2084 = vmatpush1.msra.mxu0 %v2021
    %2085 = vmatprep.subr.mxu0 0.0
    %2086 = vmatpush1.msra.mxu0 %v2022
    %2087 = vmatprep.subr.mxu0 0.0
    %2088 = vmatpush1.msra.mxu0 %v2023
    %2089 = vmatprep.subr.mxu0 0.0
    %2090 = vmatpush1.msra.mxu0 %v2024
    %2091 = vmatprep.subr.mxu0 0.0
    %2092 = vmatpush1.msra.mxu0 %v2025
    %2093 = vmatprep.subr.mxu0 0.0
    %2094 = vmatpush1.msra.mxu0 %v2026
    %2095 = vmatprep.subr.mxu0 0.0
    %2096 = vmatpush1.msra.mxu0 %v2027
    %2097 = vmatprep.subr.mxu0 0.0
    %2098 = vmatpush1.msra.mxu0 %v2028
    %2099 = vmatprep.subr.mxu0 0.0
    %2100 = vmatpush1.msra.mxu0 %v2029
    %2101 = vmatprep.subr.mxu0 0.0
    %2102 = vmatpush1.msra.mxu0 %v2030
    %2103 = vmatprep.subr.mxu0 0.0
    %2104 = vmatpush1.msra.mxu0 %v2031
    %2105 = vmatprep.subr.mxu0 0.0
    %2106 = vmatpush1.msra.mxu0 %v2032
    %2107 = vmatprep.subr.mxu0 0.0
    %2108 = vmatpush1.msra.mxu0 %v2033
    %2109 = vmatprep.subr.mxu0 0.0
    %2110 = vmatpush1.msra.mxu0 %v2034
    %2111 = vmatprep.subr.mxu0 0.0
    %2112 = vmatpush1.msra.mxu0 %v2035
    %2113 = vmatprep.subr.mxu0 0.0
    %2114 = vmatpush1.msra.mxu0 %v2036
    %2115 = vmatprep.subr.mxu0 0.0
    %2116 = vmatpush1.msra.mxu0 %v2037
    %2117 = vmatprep.subr.mxu0 0.0
    %2118 = vmatpush1.msra.mxu0 %v2038
    %2119 = vmatprep.mubr.f32.mxu0 %v1969
    %2120 = vmatmul.mubr.f32.gmra.mrb[0].mxu0 %v1966
    %v2121 = vpop.f32.mrb[0].mxu0
    %v2122 = vadd.f32 0.0, %v2121
    %v2123 = vpop.f32.mrb[0].mxu0
    %2124 = vmatprep.mubr.f32.mxu0 %v1976
    %2125 = vmatmul.mubr.f32.gmra.mrb[0].mxu0 %v1974
    %v2126 = vpop.f32.mrb[0].mxu0
    %v2127 = vadd.f32 0.0, %v2126
    %v2128 = vpop.f32.mrb[0].mxu0
    %2129 = vmatprep.mubr.f32.mxu0 %v1984
    %2130 = vmatmul.mubr.f32.gmra.mrb[0].mxu0 %v1981
    %v2131 = vpop.f32.mrb[0].mxu0
    %v2132 = vadd.f32 0.0, %v2131
    %v2133 = vpop.f32.mrb[0].mxu0
    %2134 = vmatprep.mubr.f32.mxu0 %v1991
    %2135 = vmatmul.mubr.f32.gmra.mrb[0].mxu0 %v1989
    %v2136 = vpop.f32.mrb[0].mxu0
    %v2137 = vadd.f32 0.0, %v2136
    %v2138 = vpop.f32.mrb[0].mxu0
    %2139 = vdwg.mxu0
    %2140 = vmatprep.subr.mxu0 0.0
    %2141 = vmatpush1.msra.mxu0 %v2039
    %2142 = vmatprep.subr.mxu0 0.0
    %2143 = vmatpush1.msra.mxu0 %v2040
    %2144 = vmatprep.subr.mxu0 0.0
    %2145 = vmatpush1.msra.mxu0 %v2041
    %2146 = vmatprep.subr.mxu0 0.0
    %2147 = vmatpush1.msra.mxu0 %v2042
    %2148 = vmatprep.subr.mxu0 0.0
    %2149 = vmatpush1.msra.mxu0 %v2043
    %2150 = vmatprep.subr.mxu0 0.0
    %2151 = vmatpush1.msra.mxu0 %v2044
    %2152 = vmatprep.subr.mxu0 0.0
    %2153 = vmatpush1.msra.mxu0 %v2045
    %2154 = vmatprep.subr.mxu0 0.0
    %2155 = vmatpush1.msra.mxu0 %v2046
    %2156 = vmatprep.subr.mxu0 0.0
    %2157 = vmatpush1.msra.mxu0 %v2047
    %2158 = vmatprep.subr.mxu0 0.0
    %2159 = vmatpush1.msra.mxu0 %v2048
    %2160 = vmatprep.subr.mxu0 0.0
    %2161 = vmatpush1.msra.mxu0 %v2049
    %2162 = vmatprep.subr.mxu0 0.0
    %2163 = vmatpush1.msra.mxu0 %v2050
    %2164 = vmatprep.subr.mxu0 0.0
    %2165 = vmatpush1.msra.mxu0 %v2051
    %2166 = vmatprep.subr.mxu0 0.0
    %2167 = vmatpush1.msra.mxu0 %v2052
    %2168 = vmatprep.subr.mxu0 0.0
    %2169 = vmatpush1.msra.mxu0 %v2053
    %2170 = vmatprep.subr.mxu0 0.0
    %2171 = vmatpush1.msra.mxu0 %v2054
    %2172 = vmatprep.subr.mxu0 0.0
    %2173 = vmatpush1.msra.mxu0 0.0
    %2174 = vmatprep.subr.mxu0 0.0
    %2175 = vmatpush1.msra.mxu0 0.0
    %2176 = vmatprep.subr.mxu0 0.0
    %2177 = vmatpush1.msra.mxu0 0.0
    %2178 = vmatprep.subr.mxu0 0.0
    %2179 = vmatpush1.msra.mxu0 0.0
    %2180 = vmatprep.subr.mxu0 0.0
    %2181 = vmatpush1.msra.mxu0 0.0
    %2182 = vmatprep.subr.mxu0 0.0
    %2183 = vmatpush1.msra.mxu0 0.0
    %2184 = vmatprep.subr.mxu0 0.0
    %2185 = vmatpush1.msra.mxu0 0.0
    %2186 = vmatprep.subr.mxu0 0.0
    %2187 = vmatpush1.msra.mxu0 0.0
    %2188 = vmatprep.subr.mxu0 0.0
    %2189 = vmatpush1.msra.mxu0 0.0
    %2190 = vmatprep.subr.mxu0 0.0
    %2191 = vmatpush1.msra.mxu0 0.0
    %2192 = vmatprep.subr.mxu0 0.0
    %2193 = vmatpush1.msra.mxu0 0.0
    %2194 = vmatprep.subr.mxu0 0.0
    %2195 = vmatpush1.msra.mxu0 0.0
    %2196 = vmatprep.subr.mxu0 0.0
    %2197 = vmatpush1.msra.mxu0 0.0
    %2198 = vmatprep.subr.mxu0 0.0
    %2199 = vmatpush1.msra.mxu0 0.0
    %2200 = vmatprep.subr.mxu0 0.0
    %2201 = vmatpush1.msra.mxu0 0.0
    %2202 = vmatprep.subr.mxu0 0.0
    %2203 = vmatpush1.msra.mxu0 0.0
    %2204 = vmatprep.mubr.f32.mxu0 0.0
    %2205 = vmatmul.mubr.f32.gmra.mrb[0].mxu0 %v1972
    %v2206 = vpop.f32.mrb[0].mxu0
    %v2207 = vadd.f32 %v2122, %v2206
    %v2208 = vpop.f32.mrb[0].mxu0
    %2209 = vmatprep.mubr.f32.mxu0 0.0
    %2210 = vmatmul.mubr.f32.gmra.mrb[0].mxu0 %v1978
    %v2211 = vpop.f32.mrb[0].mxu0
    %v2212 = vadd.f32 %v2127, %v2211
    %v2213 = vpop.f32.mrb[0].mxu0
    %2214 = vmatprep.mubr.f32.mxu0 0.0
    %2215 = vmatmul.mubr.f32.gmra.mrb[0].mxu0 %v1987
    %v2216 = vpop.f32.mrb[0].mxu0
    %v2217 = vadd.f32 %v2132, %v2216
    %v2218 = vpop.f32.mrb[0].mxu0
    %2219 = vmatprep.mubr.f32.mxu0 0.0
    %2220 = vmatmul.mubr.f32.gmra.mrb[0].mxu0 %v1993
    %v2221 = vpop.f32.mrb[0].mxu0
    %v2222 = vadd.f32 %v2137, %v2221
    %v2223 = vpop.f32.mrb[0].mxu0
    %2224 = vdwg.mxu0
    %2225 = vmatprep.subr.mxu0 0.0
    %2226 = vmatpush1.msra.mxu0 %v1904
    %2227 = vmatprep.subr.mxu0 0.0
    %2228 = vmatpush1.msra.mxu0 %v1905
    %2229 = vmatprep.subr.mxu0 0.0
    %2230 = vmatpush1.msra.mxu0 %v1906
    %2231 = vmatprep.subr.mxu0 0.0
    %2232 = vmatpush1.msra.mxu0 %v1907
    %2233 = vmatprep.subr.mxu0 0.0
    %2234 = vmatpush1.msra.mxu0 %v1908
    %2235 = vmatprep.subr.mxu0 0.0
    %2236 = vmatpush1.msra.mxu0 %v1909
    %2237 = vmatprep.subr.mxu0 0.0
    %2238 = vmatpush1.msra.mxu0 %v1910
    %2239 = vmatprep.subr.mxu0 0.0
    %2240 = vmatpush1.msra.mxu0 %v1911
    %2241 = vmatprep.subr.mxu0 0.0
    %2242 = vmatpush1.msra.mxu0 %v1912
    %2243 = vmatprep.subr.mxu0 0.0
    %2244 = vmatpush1.msra.mxu0 %v1913
    %2245 = vmatprep.subr.mxu0 0.0
    %2246 = vmatpush1.msra.mxu0 %v1914
    %2247 = vmatprep.subr.mxu0 0.0
    %2248 = vmatpush1.msra.mxu0 %v1915
    %2249 = vmatprep.subr.mxu0 0.0
    %2250 = vmatpush1.msra.mxu0 %v1916
    %2251 = vmatprep.subr.mxu0 0.0
    %2252 = vmatpush1.msra.mxu0 %v1917
    %2253 = vmatprep.subr.mxu0 0.0
    %2254 = vmatpush1.msra.mxu0 %v1918
    %2255 = vmatprep.subr.mxu0 0.0
    %2256 = vmatpush1.msra.mxu0 %v1919
    %2257 = vmatprep.subr.mxu0 0.0
    %2258 = vmatpush1.msra.mxu0 %v1920
    %2259 = vmatprep.subr.mxu0 0.0
    %2260 = vmatpush1.msra.mxu0 %v1921
    %2261 = vmatprep.subr.mxu0 0.0
    %2262 = vmatpush1.msra.mxu0 %v1922
    %2263 = vmatprep.subr.mxu0 0.0
    %2264 = vmatpush1.msra.mxu0 %v1923
    %2265 = vmatprep.subr.mxu0 0.0
    %2266 = vmatpush1.msra.mxu0 %v1924
    %2267 = vmatprep.subr.mxu0 0.0
    %2268 = vmatpush1.msra.mxu0 %v1925
    %2269 = vmatprep.subr.mxu0 0.0
    %2270 = vmatpush1.msra.mxu0 %v1926
    %2271 = vmatprep.subr.mxu0 0.0
    %2272 = vmatpush1.msra.mxu0 %v1927
    %2273 = vmatprep.subr.mxu0 0.0
    %2274 = vmatpush1.msra.mxu0 %v1928
    %2275 = vmatprep.subr.mxu0 0.0
    %2276 = vmatpush1.msra.mxu0 %v1929
    %2277 = vmatprep.subr.mxu0 0.0
    %2278 = vmatpush1.msra.mxu0 %v1930
    %2279 = vmatprep.subr.mxu0 0.0
    %2280 = vmatpush1.msra.mxu0 %v1931
    %2281 = vmatprep.subr.mxu0 0.0
    %2282 = vmatpush1.msra.mxu0 %v1932
    %2283 = vmatprep.subr.mxu0 0.0
    %2284 = vmatpush1.msra.mxu0 %v1933
    %2285 = vmatprep.subr.mxu0 0.0
    %2286 = vmatpush1.msra.mxu0 %v1934
    %2287 = vmatprep.subr.mxu0 0.0
    %2288 = vmatpush1.msra.mxu0 %v1935
    %2289 = vmatprep.mubr.f32.mxu0 %v1893
    %2290 = vmatmul.mubr.f32.gmra.mrb[0].mxu0 %v1892
    %v2291 = vpop.f32.mrb[0].mxu0
    %v2292 = vadd.f32 %v2207, %v2291
    %v2293 = vpop.f32.mrb[0].mxu0
    %2294 = vmatprep.mubr.f32.mxu0 %v1862
    %2295 = vmatmul.mubr.f32.gmra.mrb[0].mxu0 %v1860
    %v2296 = vpop.f32.mrb[0].mxu0
    %v2297 = vadd.f32 %v2212, %v2296
    %v2298 = vpop.f32.mrb[0].mxu0
    %2299 = vmatprep.mubr.f32.mxu0 %v1896
    %2300 = vmatmul.mubr.f32.gmra.mrb[0].mxu0 %v1895
    %v2301 = vpop.f32.mrb[0].mxu0
    %v2302 = vadd.f32 %v2217, %v2301
    %v2303 = vpop.f32.mrb[0].mxu0
    %2304 = vmatprep.mubr.f32.mxu0 %v1871
    %2305 = vmatmul.mubr.f32.gmra.mrb[0].mxu0 %v1869
    %v2306 = vpop.f32.mrb[0].mxu0
    %v2307 = vadd.f32 %v2222, %v2306
    %v2308 = vpop.f32.mrb[0].mxu0
    %2309 = vdwg.mxu0
    %2310 = vmatprep.subr.mxu0 0.0
    %2311 = vmatpush1.msra.mxu0 %v1936
    %2312 = vmatprep.subr.mxu0 0.0
    %2313 = vmatpush1.msra.mxu0 %v1937
    %2314 = vmatprep.subr.mxu0 0.0
    %2315 = vmatpush1.msra.mxu0 %v1938
    %2316 = vmatprep.subr.mxu0 0.0
    %2317 = vmatpush1.msra.mxu0 %v1939
    %2318 = vmatprep.subr.mxu0 0.0
    %2319 = vmatpush1.msra.mxu0 %v1940
    %2320 = vmatprep.subr.mxu0 0.0
    %2321 = vmatpush1.msra.mxu0 %v1941
    %2322 = vmatprep.subr.mxu0 0.0
    %2323 = vmatpush1.msra.mxu0 %v1942
    %2324 = vmatprep.subr.mxu0 0.0
    %2325 = vmatpush1.msra.mxu0 %v1943
    %2326 = vmatprep.subr.mxu0 0.0
    %2327 = vmatpush1.msra.mxu0 %v1944
    %2328 = vmatprep.subr.mxu0 0.0
    %2329 = vmatpush1.msra.mxu0 %v1945
    %2330 = vmatprep.subr.mxu0 0.0
    %2331 = vmatpush1.msra.mxu0 %v1946
    %2332 = vmatprep.subr.mxu0 0.0
    %2333 = vmatpush1.msra.mxu0 %v1947
    %2334 = vmatprep.subr.mxu0 0.0
    %2335 = vmatpush1.msra.mxu0 %v1948
    %2336 = vmatprep.subr.mxu0 0.0
    %2337 = vmatpush1.msra.mxu0 %v1949
    %2338 = vmatprep.subr.mxu0 0.0
    %2339 = vmatpush1.msra.mxu0 %v1950
    %2340 = vmatprep.subr.mxu0 0.0
    %2341 = vmatpush1.msra.mxu0 %v1951
    %2342 = vmatprep.subr.mxu0 0.0
    %2343 = vmatpush1.msra.mxu0 0.0
    %2344 = vmatprep.subr.mxu0 0.0
    %2345 = vmatpush1.msra.mxu0 0.0
    %2346 = vmatprep.subr.mxu0 0.0
    %2347 = vmatpush1.msra.mxu0 0.0
    %2348 = vmatprep.subr.mxu0 0.0
    %2349 = vmatpush1.msra.mxu0 0.0
    %2350 = vmatprep.subr.mxu0 0.0
    %2351 = vmatpush1.msra.mxu0 0.0
    %2352 = vmatprep.subr.mxu0 0.0
    %2353 = vmatpush1.msra.mxu0 0.0
    %2354 = vmatprep.subr.mxu0 0.0
    %2355 = vmatpush1.msra.mxu0 0.0
    %2356 = vmatprep.subr.mxu0 0.0
    %2357 = vmatpush1.msra.mxu0 0.0
    %2358 = vmatprep.subr.mxu0 0.0
    %2359 = vmatpush1.msra.mxu0 0.0
    %2360 = vmatprep.subr.mxu0 0.0
    %2361 = vmatpush1.msra.mxu0 0.0
    %2362 = vmatprep.subr.mxu0 0.0
    %2363 = vmatpush1.msra.mxu0 0.0
    %2364 = vmatprep.subr.mxu0 0.0
    %2365 = vmatpush1.msra.mxu0 0.0
    %2366 = vmatprep.subr.mxu0 0.0
    %2367 = vmatpush1.msra.mxu0 0.0
    %2368 = vmatprep.subr.mxu0 0.0
    %2369 = vmatpush1.msra.mxu0 0.0
    %2370 = vmatprep.subr.mxu0 0.0
    %2371 = vmatpush1.msra.mxu0 0.0
    %2372 = vmatprep.subr.mxu0 0.0
    %2373 = vmatpush1.msra.mxu0 0.0
    %2374 = vmatprep.mubr.f32.mxu0 0.0
    %2375 = vmatmul.mubr.f32.gmra.mrb[0].mxu0 %v1894
    %v2376 = vpop.f32.mrb[0].mxu0
    %v2377 = vadd.f32 %v2292, %v2376
    %v2378 = vpop.f32.mrb[0].mxu0
    %2379 = vmatprep.mubr.f32.mxu0 0.0
    %2380 = vmatmul.mubr.f32.gmra.mrb[0].mxu0 %v1864
    %v2381 = vpop.f32.mrb[0].mxu0
    %v2382 = vadd.f32 %v2297, %v2381
    %v2383 = vpop.f32.mrb[0].mxu0
    %2384 = vmatprep.mubr.f32.mxu0 0.0
    %2385 = vmatmul.mubr.f32.gmra.mrb[0].mxu0 %v1897
    %v2386 = vpop.f32.mrb[0].mxu0
    %v2387 = vadd.f32 %v2302, %v2386
    %v2388 = vpop.f32.mrb[0].mxu0
    %2389 = vmatprep.mubr.f32.mxu0 0.0
    %2390 = vmatmul.mubr.f32.gmra.mrb[0].mxu0 %v1873
    %v2391 = vpop.f32.mrb[0].mxu0
    %v2392 = vadd.f32 %v2307, %v2391
    %v2393 = vpop.f32.mrb[0].mxu0
    %2394 = vdwg.mxu0
    %v2395 = vrot.slane %v1892, 2
    %v2396 = vrot.slane %v1860, 2
    %v2397 = vsel %vm434, %v2395, %v2396
    %v2398 = vrot.slane %v1893, 2
    %v2399 = vrot.slane %v1862, 2
    %v2400 = vsel %vm434, %v2398, %v2399
    %v2401 = vrot.slane %v1894, 2
    %v2402 = vrot.slane %v1864, 2
    %v2403 = vsel %vm434, %v2401, %v2402
    %v2404 = vrot.slane %v1898, 2
    %v2405 = vsel %vm434, %v2396, %v2404
    %v2406 = vrot.slane %v1899, 2
    %v2407 = vsel %vm434, %v2399, %v2406
    %v2408 = vrot.slane %v1900, 2
    %v2409 = vsel %vm434, %v2402, %v2408
    %v2410 = vrot.slane %v1895, 2
    %v2411 = vrot.slane %v1869, 2
    %v2412 = vsel %vm434, %v2410, %v2411
    %v2413 = vrot.slane %v1896, 2
    %v2414 = vrot.slane %v1871, 2
    %v2415 = vsel %vm434, %v2413, %v2414
    %v2416 = vrot.slane %v1897, 2
    %v2417 = vrot.slane %v1873, 2
    %v2418 = vsel %vm434, %v2416, %v2417
    %v2419 = vrot.slane %v1901, 2
    %v2420 = vsel %vm434, %v2411, %v2419
    %v2421 = vrot.slane %v1902, 2
    %v2422 = vsel %vm434, %v2414, %v2421
    %v2423 = vrot.slane %v1903, 2
    %v2424 = vsel %vm434, %v2417, %v2423
    %s2437 = scalar_lea.vmem [#allocation5], 768
    %v2438 = vld [vmem:[%s2437] sm:$0xff]
    %v2439 = vld [vmem:[%s2437 + $0x8] sm:$0xff]
    %v2440 = vld [vmem:[%s2437 + $0x10] sm:$0xff]
    %v2441 = vld [vmem:[%s2437 + $0x18] sm:$0xff]
    %v2442 = vld [vmem:[%s2437 + $0x20] sm:$0xff]
    %v2443 = vld [vmem:[%s2437 + $0x28] sm:$0xff]
    %v2444 = vld [vmem:[%s2437 + $0x30] sm:$0xff]
    %v2445 = vld [vmem:[%s2437 + $0x38] sm:$0xff]
    %v2446 = vld [vmem:[%s2437 + $0x40] sm:$0xff]
    %v2447 = vld [vmem:[%s2437 + $0x48] sm:$0xff]
    %v2448 = vld [vmem:[%s2437 + $0x50] sm:$0xff]
    %v2449 = vld [vmem:[%s2437 + $0x58] sm:$0xff]
    %v2450 = vld [vmem:[%s2437 + $0x60] sm:$0xff]
    %v2451 = vld [vmem:[%s2437 + $0x68] sm:$0xff]
    %v2452 = vld [vmem:[%s2437 + $0x70] sm:$0xff]
    %v2453 = vld [vmem:[%s2437 + $0x78] sm:$0xff]
    %v2454 = vld [vmem:[%s2437 + $0x80] sm:$0xff]
    %v2455 = vld [vmem:[%s2437 + $0x88] sm:$0xff]
    %v2456 = vld [vmem:[%s2437 + $0x90] sm:$0xff]
    %v2457 = vld [vmem:[%s2437 + $0x98] sm:$0xff]
    %v2458 = vld [vmem:[%s2437 + $0xa0] sm:$0xff]
    %v2459 = vld [vmem:[%s2437 + $0xa8] sm:$0xff]
    %v2460 = vld [vmem:[%s2437 + $0xb0] sm:$0xff]
    %v2461 = vld [vmem:[%s2437 + $0xb8] sm:$0xff]
    %v2462 = vld [vmem:[%s2437 + $0xc0] sm:$0xff]
    %v2463 = vld [vmem:[%s2437 + $0xc8] sm:$0xff]
    %v2464 = vld [vmem:[%s2437 + $0xd0] sm:$0xff]
    %v2465 = vld [vmem:[%s2437 + $0xd8] sm:$0xff]
    %v2466 = vld [vmem:[%s2437 + $0xe0] sm:$0xff]
    %v2467 = vld [vmem:[%s2437 + $0xe8] sm:$0xff]
    %v2468 = vld [vmem:[%s2437 + $0xf0] sm:$0xff]
    %v2469 = vld [vmem:[%s2437 + $0xf8] sm:$0xff]
    %v2470 = vld [vmem:[%s2437 + $0x100] sm:$0xff]
    %v2471 = vld [vmem:[%s2437 + $0x108] sm:$0xff]
    %v2472 = vld [vmem:[%s2437 + $0x110] sm:$0xff]
    %v2473 = vld [vmem:[%s2437 + $0x118] sm:$0xff]
    %v2474 = vld [vmem:[%s2437 + $0x120] sm:$0xff]
    %v2475 = vld [vmem:[%s2437 + $0x128] sm:$0xff]
    %v2476 = vld [vmem:[%s2437 + $0x130] sm:$0xff]
    %v2477 = vld [vmem:[%s2437 + $0x138] sm:$0xff]
    %v2478 = vld [vmem:[%s2437 + $0x140] sm:$0xff]
    %v2479 = vld [vmem:[%s2437 + $0x148] sm:$0xff]
    %v2480 = vld [vmem:[%s2437 + $0x150] sm:$0xff]
    %v2481 = vld [vmem:[%s2437 + $0x158] sm:$0xff]
    %v2482 = vld [vmem:[%s2437 + $0x160] sm:$0xff]
    %v2483 = vld [vmem:[%s2437 + $0x168] sm:$0xff]
    %v2484 = vld [vmem:[%s2437 + $0x170] sm:$0xff]
    %v2485 = vld [vmem:[%s2437 + $0x178] sm:$0xff]
    %2486 = vmatprep.subr.mxu0 0.0
    %2487 = vmatpush1.msra.mxu0 %v2438
    %2488 = vmatprep.subr.mxu0 0.0
    %2489 = vmatpush1.msra.mxu0 %v2439
    %2490 = vmatprep.subr.mxu0 0.0
    %2491 = vmatpush1.msra.mxu0 %v2440
    %2492 = vmatprep.subr.mxu0 0.0
    %2493 = vmatpush1.msra.mxu0 %v2441
    %2494 = vmatprep.subr.mxu0 0.0
    %2495 = vmatpush1.msra.mxu0 %v2442
    %2496 = vmatprep.subr.mxu0 0.0
    %2497 = vmatpush1.msra.mxu0 %v2443
    %2498 = vmatprep.subr.mxu0 0.0
    %2499 = vmatpush1.msra.mxu0 %v2444
    %2500 = vmatprep.subr.mxu0 0.0
    %2501 = vmatpush1.msra.mxu0 %v2445
    %2502 = vmatprep.subr.mxu0 0.0
    %2503 = vmatpush1.msra.mxu0 %v2446
    %2504 = vmatprep.subr.mxu0 0.0
    %2505 = vmatpush1.msra.mxu0 %v2447
    %2506 = vmatprep.subr.mxu0 0.0
    %2507 = vmatpush1.msra.mxu0 %v2448
    %2508 = vmatprep.subr.mxu0 0.0
    %2509 = vmatpush1.msra.mxu0 %v2449
    %2510 = vmatprep.subr.mxu0 0.0
    %2511 = vmatpush1.msra.mxu0 %v2450
    %2512 = vmatprep.subr.mxu0 0.0
    %2513 = vmatpush1.msra.mxu0 %v2451
    %2514 = vmatprep.subr.mxu0 0.0
    %2515 = vmatpush1.msra.mxu0 %v2452
    %2516 = vmatprep.subr.mxu0 0.0
    %2517 = vmatpush1.msra.mxu0 %v2453
    %2518 = vmatprep.subr.mxu0 0.0
    %2519 = vmatpush1.msra.mxu0 %v2454
    %2520 = vmatprep.subr.mxu0 0.0
    %2521 = vmatpush1.msra.mxu0 %v2455
    %2522 = vmatprep.subr.mxu0 0.0
    %2523 = vmatpush1.msra.mxu0 %v2456
    %2524 = vmatprep.subr.mxu0 0.0
    %2525 = vmatpush1.msra.mxu0 %v2457
    %2526 = vmatprep.subr.mxu0 0.0
    %2527 = vmatpush1.msra.mxu0 %v2458
    %2528 = vmatprep.subr.mxu0 0.0
    %2529 = vmatpush1.msra.mxu0 %v2459
    %2530 = vmatprep.subr.mxu0 0.0
    %2531 = vmatpush1.msra.mxu0 %v2460
    %2532 = vmatprep.subr.mxu0 0.0
    %2533 = vmatpush1.msra.mxu0 %v2461
    %2534 = vmatprep.subr.mxu0 0.0
    %2535 = vmatpush1.msra.mxu0 %v2462
    %2536 = vmatprep.subr.mxu0 0.0
    %2537 = vmatpush1.msra.mxu0 %v2463
    %2538 = vmatprep.subr.mxu0 0.0
    %2539 = vmatpush1.msra.mxu0 %v2464
    %2540 = vmatprep.subr.mxu0 0.0
    %2541 = vmatpush1.msra.mxu0 %v2465
    %2542 = vmatprep.subr.mxu0 0.0
    %2543 = vmatpush1.msra.mxu0 %v2466
    %2544 = vmatprep.subr.mxu0 0.0
    %2545 = vmatpush1.msra.mxu0 %v2467
    %2546 = vmatprep.subr.mxu0 0.0
    %2547 = vmatpush1.msra.mxu0 %v2468
    %2548 = vmatprep.subr.mxu0 0.0
    %2549 = vmatpush1.msra.mxu0 %v2469
    %2550 = vmatprep.mubr.f32.mxu0 %v2400
    %2551 = vmatmul.mubr.f32.gmra.mrb[0].mxu0 %v2397
    %v2552 = vpop.f32.mrb[0].mxu0
    %v2553 = vadd.f32 0.0, %v2552
    %v2554 = vpop.f32.mrb[0].mxu0
    %2555 = vmatprep.mubr.f32.mxu0 %v2407
    %2556 = vmatmul.mubr.f32.gmra.mrb[0].mxu0 %v2405
    %v2557 = vpop.f32.mrb[0].mxu0
    %v2558 = vadd.f32 0.0, %v2557
    %v2559 = vpop.f32.mrb[0].mxu0
    %2560 = vmatprep.mubr.f32.mxu0 %v2415
    %2561 = vmatmul.mubr.f32.gmra.mrb[0].mxu0 %v2412
    %v2562 = vpop.f32.mrb[0].mxu0
    %v2563 = vadd.f32 0.0, %v2562
    %v2564 = vpop.f32.mrb[0].mxu0
    %2565 = vmatprep.mubr.f32.mxu0 %v2422
    %2566 = vmatmul.mubr.f32.gmra.mrb[0].mxu0 %v2420
    %v2567 = vpop.f32.mrb[0].mxu0
    %v2568 = vadd.f32 0.0, %v2567
    %v2569 = vpop.f32.mrb[0].mxu0
    %2570 = vdwg.mxu0
    %2571 = vmatprep.subr.mxu0 0.0
    %2572 = vmatpush1.msra.mxu0 %v2470
    %2573 = vmatprep.subr.mxu0 0.0
    %2574 = vmatpush1.msra.mxu0 %v2471
    %2575 = vmatprep.subr.mxu0 0.0
    %2576 = vmatpush1.msra.mxu0 %v2472
    %2577 = vmatprep.subr.mxu0 0.0
    %2578 = vmatpush1.msra.mxu0 %v2473
    %2579 = vmatprep.subr.mxu0 0.0
    %2580 = vmatpush1.msra.mxu0 %v2474
    %2581 = vmatprep.subr.mxu0 0.0
    %2582 = vmatpush1.msra.mxu0 %v2475
    %2583 = vmatprep.subr.mxu0 0.0
    %2584 = vmatpush1.msra.mxu0 %v2476
    %2585 = vmatprep.subr.mxu0 0.0
    %2586 = vmatpush1.msra.mxu0 %v2477
    %2587 = vmatprep.subr.mxu0 0.0
    %2588 = vmatpush1.msra.mxu0 %v2478
    %2589 = vmatprep.subr.mxu0 0.0
    %2590 = vmatpush1.msra.mxu0 %v2479
    %2591 = vmatprep.subr.mxu0 0.0
    %2592 = vmatpush1.msra.mxu0 %v2480
    %2593 = vmatprep.subr.mxu0 0.0
    %2594 = vmatpush1.msra.mxu0 %v2481
    %2595 = vmatprep.subr.mxu0 0.0
    %2596 = vmatpush1.msra.mxu0 %v2482
    %2597 = vmatprep.subr.mxu0 0.0
    %2598 = vmatpush1.msra.mxu0 %v2483
    %2599 = vmatprep.subr.mxu0 0.0
    %2600 = vmatpush1.msra.mxu0 %v2484
    %2601 = vmatprep.subr.mxu0 0.0
    %2602 = vmatpush1.msra.mxu0 %v2485
    %2603 = vmatprep.subr.mxu0 0.0
    %2604 = vmatpush1.msra.mxu0 0.0
    %2605 = vmatprep.subr.mxu0 0.0
    %2606 = vmatpush1.msra.mxu0 0.0
    %2607 = vmatprep.subr.mxu0 0.0
    %2608 = vmatpush1.msra.mxu0 0.0
    %2609 = vmatprep.subr.mxu0 0.0
    %2610 = vmatpush1.msra.mxu0 0.0
    %2611 = vmatprep.subr.mxu0 0.0
    %2612 = vmatpush1.msra.mxu0 0.0
    %2613 = vmatprep.subr.mxu0 0.0
    %2614 = vmatpush1.msra.mxu0 0.0
    %2615 = vmatprep.subr.mxu0 0.0
    %2616 = vmatpush1.msra.mxu0 0.0
    %2617 = vmatprep.subr.mxu0 0.0
    %2618 = vmatpush1.msra.mxu0 0.0
    %2619 = vmatprep.subr.mxu0 0.0
    %2620 = vmatpush1.msra.mxu0 0.0
    %2621 = vmatprep.subr.mxu0 0.0
    %2622 = vmatpush1.msra.mxu0 0.0
    %2623 = vmatprep.subr.mxu0 0.0
    %2624 = vmatpush1.msra.mxu0 0.0
    %2625 = vmatprep.subr.mxu0 0.0
    %2626 = vmatpush1.msra.mxu0 0.0
    %2627 = vmatprep.subr.mxu0 0.0
    %2628 = vmatpush1.msra.mxu0 0.0
    %2629 = vmatprep.subr.mxu0 0.0
    %2630 = vmatpush1.msra.mxu0 0.0
    %2631 = vmatprep.subr.mxu0 0.0
    %2632 = vmatpush1.msra.mxu0 0.0
    %2633 = vmatprep.subr.mxu0 0.0
    %2634 = vmatpush1.msra.mxu0 0.0
    %2635 = vmatprep.mubr.f32.mxu0 0.0
    %2636 = vmatmul.mubr.f32.gmra.mrb[0].mxu0 %v2403
    %v2637 = vpop.f32.mrb[0].mxu0
    %v2638 = vadd.f32 %v2553, %v2637
    %v2639 = vpop.f32.mrb[0].mxu0
    %2640 = vmatprep.mubr.f32.mxu0 0.0
    %2641 = vmatmul.mubr.f32.gmra.mrb[0].mxu0 %v2409
    %v2642 = vpop.f32.mrb[0].mxu0
    %v2643 = vadd.f32 %v2558, %v2642
    %v2644 = vpop.f32.mrb[0].mxu0
    %2645 = vmatprep.mubr.f32.mxu0 0.0
    %2646 = vmatmul.mubr.f32.gmra.mrb[0].mxu0 %v2418
    %v2647 = vpop.f32.mrb[0].mxu0
    %v2648 = vadd.f32 %v2563, %v2647
    %v2649 = vpop.f32.mrb[0].mxu0
    %2650 = vmatprep.mubr.f32.mxu0 0.0
    %2651 = vmatmul.mubr.f32.gmra.mrb[0].mxu0 %v2424
    %v2652 = vpop.f32.mrb[0].mxu0
    %v2653 = vadd.f32 %v2568, %v2652
    %v2654 = vpop.f32.mrb[0].mxu0
    %2655 = vdwg.mxu0
    %v2656 = vadd.f32 %v2377, %v2638
    %v2657 = vadd.f32 %v2382, %v2643
    %v2658 = vadd.f32 %v2387, %v2648
    %v2659 = vadd.f32 %v2392, %v2653
    %v2660 = vld [vmem:[%s8] sm:$0x1]
    %v2662 = vlaneseq
    %v2663 = vshrl.u32 %v2662, 7
    %v2664 = vsub.s32 0, %v2663
    %v2665 = vrot.slane %v2660, %v2664
    %v2667 = vadd.f32 %v2656, %v2665
    %v2668 = vadd.f32 %v2657, %v2665
    %v2669 = vadd.f32 %v2658, %v2665
    %v2670 = vadd.f32 %v2659, %v2665
    %v2671 = vtanh.pop %v2667
    %v2672 = vtanh.pop %v2668
    %v2673 = vtanh.pop %v2669
    %v2674 = vtanh.pop %v2670
    %v2675 = vld [vmem:[%s9] sm:$0x3]
    %vm2676 = vcmask 261120
    %v2678 = vsel %vm2676, %v2675, 0
    %2680 = vmatprep.subr.mxu0 0.0
    %2681 = vmatpush1.msra.mxu0 %v2671
    %2682 = vmatprep.subr.mxu0 0.0
    %2683 = vmatpush1.msra.mxu0 %v2672
    %2684 = vmatprep.subr.mxu0 0.0
    %2685 = vmatpush1.msra.mxu0 %v2673
    %2686 = vmatprep.subr.mxu0 0.0
    %2687 = vmatpush1.msra.mxu0 %v2674
    %2688 = vmatprep.subr.mxu0 0.0
    %2689 = vmatpush1.msra.mxu0 0.0
    %2690 = vmatprep.subr.mxu0 0.0
    %2691 = vmatpush1.msra.mxu0 0.0
    %2692 = vmatprep.subr.mxu0 0.0
    %2693 = vmatpush1.msra.mxu0 0.0
    %2694 = vmatprep.subr.mxu0 0.0
    %2695 = vmatpush1.msra.mxu0 0.0
    %2696 = vmatprep.subr.mxu0 0.0
    %2697 = vmatpush1.msra.mxu0 0.0
    %2698 = vmatprep.subr.mxu0 0.0
    %2699 = vmatpush1.msra.mxu0 0.0
    %2700 = vmatprep.subr.mxu0 0.0
    %2701 = vmatpush1.msra.mxu0 0.0
    %2702 = vmatprep.subr.mxu0 0.0
    %2703 = vmatpush1.msra.mxu0 0.0
    %2704 = vmatprep.subr.mxu0 0.0
    %2705 = vmatpush1.msra.mxu0 0.0
    %2706 = vmatprep.subr.mxu0 0.0
    %2707 = vmatpush1.msra.mxu0 0.0
    %2708 = vmatprep.subr.mxu0 0.0
    %2709 = vmatpush1.msra.mxu0 0.0
    %2710 = vmatprep.subr.mxu0 0.0
    %2711 = vmatpush1.msra.mxu0 0.0
    %2712 = vmatprep.subr.mxu0 0.0
    %2713 = vmatpush1.msra.mxu0 0.0
    %2714 = vmatprep.subr.mxu0 0.0
    %2715 = vmatpush1.msra.mxu0 0.0
    %2716 = vmatprep.subr.mxu0 0.0
    %2717 = vmatpush1.msra.mxu0 0.0
    %2718 = vmatprep.subr.mxu0 0.0
    %2719 = vmatpush1.msra.mxu0 0.0
    %2720 = vmatprep.subr.mxu0 0.0
    %2721 = vmatpush1.msra.mxu0 0.0
    %2722 = vmatprep.subr.mxu0 0.0
    %2723 = vmatpush1.msra.mxu0 0.0
    %2724 = vmatprep.subr.mxu0 0.0
    %2725 = vmatpush1.msra.mxu0 0.0
    %2726 = vmatprep.subr.mxu0 0.0
    %2727 = vmatpush1.msra.mxu0 0.0
    %2728 = vmatprep.subr.mxu0 0.0
    %2729 = vmatpush1.msra.mxu0 0.0
    %2730 = vmatprep.subr.mxu0 0.0
    %2731 = vmatpush1.msra.mxu0 0.0
    %2732 = vmatprep.subr.mxu0 0.0
    %2733 = vmatpush1.msra.mxu0 0.0
    %2734 = vmatprep.subr.mxu0 0.0
    %2735 = vmatpush1.msra.mxu0 0.0
    %2736 = vmatprep.subr.mxu0 0.0
    %2737 = vmatpush1.msra.mxu0 0.0
    %2738 = vmatprep.subr.mxu0 0.0
    %2739 = vmatpush1.msra.mxu0 0.0
    %2740 = vmatprep.subr.mxu0 0.0
    %2741 = vmatpush1.msra.mxu0 0.0
    %2742 = vmatprep.subr.mxu0 0.0
    %2743 = vmatpush1.msra.mxu0 0.0
    %2744 = vmatprep.mubr.f32.mxu0 0.0
    %2745 = vmatmul.mubr.f32.gmra.mrb[0].mxu0 %v2678
    %v2746 = vpop.f32.mrb[0].mxu0
    %v2747 = vadd.f32 0.0, %v2746
    %v2748 = vpop.f32.mrb[0].mxu0
    %2749 = vdwg.mxu0
    %v2750 = vld [vmem:[%s10] sm:$0xff]
    %v2751 = vld [vmem:[%s10 + $0x8] sm:$0xff]
    %v2752 = vld [vmem:[%s10 + $0x10] sm:$0xff]
    %v2753 = vld [vmem:[%s10 + $0x18] sm:$0xff]
    %v2754 = vld [vmem:[%s10 + $0x20] sm:$0xff]
    %v2755 = vld [vmem:[%s10 + $0x28] sm:$0xff]
    %v2756 = vld [vmem:[%s10 + $0x30] sm:$0xff]
    %v2757 = vld [vmem:[%s10 + $0x38] sm:$0xff]
    %v2758 = vld [vmem:[%s10 + $0x40] sm:$0xff]
    %v2759 = vld [vmem:[%s10 + $0x48] sm:$0xff]
    %v2760 = vld [vmem:[%s10 + $0x50] sm:$0xff]
    %v2761 = vld [vmem:[%s10 + $0x58] sm:$0xff]
    %v2762 = vld [vmem:[%s10 + $0x60] sm:$0xff]
    %v2763 = vld [vmem:[%s10 + $0x68] sm:$0xff]
    %v2764 = vld [vmem:[%s10 + $0x70] sm:$0xff]
    %v2765 = vld [vmem:[%s10 + $0x78] sm:$0xff]
    %v2766 = vld [vmem:[%s11] sm:$0x1]
    %v2768 = vlaneseq
    %v2769 = vshrl.u32 %v2768, 7
    %v2770 = vsub.s32 0, %v2769
    %v2771 = vrot.slane %v2766, %v2770
    %2773 = vmatprep.subr.mxu0 0.0
    %2774 = vmatpush1.msra.mxu0 %v2750
    %2775 = vmatprep.subr.mxu0 0.0
    %2776 = vmatpush1.msra.mxu0 %v2751
    %2777 = vmatprep.subr.mxu0 0.0
    %2778 = vmatpush1.msra.mxu0 %v2752
    %2779 = vmatprep.subr.mxu0 0.0
    %2780 = vmatpush1.msra.mxu0 %v2753
    %2781 = vmatprep.subr.mxu0 0.0
    %2782 = vmatpush1.msra.mxu0 %v2754
    %2783 = vmatprep.subr.mxu0 0.0
    %2784 = vmatpush1.msra.mxu0 %v2755
    %2785 = vmatprep.subr.mxu0 0.0
    %2786 = vmatpush1.msra.mxu0 %v2756
    %2787 = vmatprep.subr.mxu0 0.0
    %2788 = vmatpush1.msra.mxu0 %v2757
    %2789 = vmatprep.subr.mxu0 0.0
    %2790 = vmatpush1.msra.mxu0 %v2758
    %2791 = vmatprep.subr.mxu0 0.0
    %2792 = vmatpush1.msra.mxu0 %v2759
    %2793 = vmatprep.subr.mxu0 0.0
    %2794 = vmatpush1.msra.mxu0 %v2760
    %2795 = vmatprep.subr.mxu0 0.0
    %2796 = vmatpush1.msra.mxu0 %v2761
    %2797 = vmatprep.subr.mxu0 0.0
    %2798 = vmatpush1.msra.mxu0 %v2762
    %2799 = vmatprep.subr.mxu0 0.0
    %2800 = vmatpush1.msra.mxu0 %v2763
    %2801 = vmatprep.subr.mxu0 0.0
    %2802 = vmatpush1.msra.mxu0 %v2764
    %2803 = vmatprep.subr.mxu0 0.0
    %2804 = vmatpush1.msra.mxu0 %v2765
    %2805 = vmatprep.subr.mxu0 0.0
    %2806 = vmatpush1.msra.mxu0 0.0
    %2807 = vmatprep.subr.mxu0 0.0
    %2808 = vmatpush1.msra.mxu0 0.0
    %2809 = vmatprep.subr.mxu0 0.0
    %2810 = vmatpush1.msra.mxu0 0.0
    %2811 = vmatprep.subr.mxu0 0.0
    %2812 = vmatpush1.msra.mxu0 0.0
    %2813 = vmatprep.subr.mxu0 0.0
    %2814 = vmatpush1.msra.mxu0 0.0
    %2815 = vmatprep.subr.mxu0 0.0
    %2816 = vmatpush1.msra.mxu0 0.0
    %2817 = vmatprep.subr.mxu0 0.0
    %2818 = vmatpush1.msra.mxu0 0.0
    %2819 = vmatprep.subr.mxu0 0.0
    %2820 = vmatpush1.msra.mxu0 0.0
    %2821 = vmatprep.subr.mxu0 0.0
    %2822 = vmatpush1.msra.mxu0 0.0
    %2823 = vmatprep.subr.mxu0 0.0
    %2824 = vmatpush1.msra.mxu0 0.0
    %2825 = vmatprep.subr.mxu0 0.0
    %2826 = vmatpush1.msra.mxu0 0.0
    %2827 = vmatprep.subr.mxu0 0.0
    %2828 = vmatpush1.msra.mxu0 0.0
    %2829 = vmatprep.subr.mxu0 0.0
    %2830 = vmatpush1.msra.mxu0 0.0
    %2831 = vmatprep.subr.mxu0 0.0
    %2832 = vmatpush1.msra.mxu0 0.0
    %2833 = vmatprep.subr.mxu0 0.0
    %2834 = vmatpush1.msra.mxu0 0.0
    %2835 = vmatprep.subr.mxu0 0.0
    %2836 = vmatpush1.msra.mxu0 0.0
    %2837 = vmatprep.mubr.f32.mxu0 0.0
    %2838 = vmatmul.mubr.f32.gmra.mrb[0].mxu0 %v2747
    %v2839 = vpop.f32.mrb[0].mxu0
    %v2840 = vadd.f32 %v2771, %v2839
    %v2841 = vpop.f32.mrb[0].mxu0
    %2842 = vdwg.mxu0
    %vm2843 = vcmask 123904
    %2844 = vst.msk [vmem:[#allocation7] sm:$0x3] %vm2843, %v2840
    // Predicated region
    $region58: #{cnet_forward.1} parent=1 // pred_check
      _
    $region59: #{cnet_forward.1} parent=1 // pred_check_branch
      %2846 = sbr.rel (0) target = $region61
    $region60: #{cnet_forward.1} parent=1 // pred_region
      %s2848 = ssub.s32 32, 32
      %2849 = vsyncadd [#allocation4], %s2848
      %s2851 = sshll.u32 [#allocation7], 4
      %s2852 = int_to_ptr.vmem [resolvable:$true] %s2851
      %2854 = dma.vmem_to_hbm [thread:$0]  %s2852, 32, %s12, [#allocation4]
    $region61: #{cnet_forward.1} parent=1 // pred_fallthru
      _
    // Predicated region
    $region62: #{cnet_forward.1} parent=1 // pred_check
      _
    $region63: #{cnet_forward.1} parent=1 // pred_check_branch
      %2856 = sbr.rel (0) target = $region65
    $region64: #{cnet_forward.1} parent=1 // pred_region
      %2857 = dma.done [#allocation4], 32
    $region65: #{cnet_forward.1} parent=1 // pred_fallthru
      _
    %2858 = vsyncpa [#allocation3], 1
    %2859 = vsyncpa [#allocation6], 1
    %2860 = vsyncpa [#allocation4], 1

</llo_original>
